<compile_context>
chip_gen: v6e
topology: v6e:2x2x1
jax: 0.10.0
libtpu: 0.0.40
codegen_flags: <defaults>
</compile_context>

<pallas_src>
import jax
import jax.numpy as jnp
from jax.experimental import pallas as pl
from jax.experimental.pallas import tpu as pltpu

# ------------------------- model hyper-parameters (small, synthetic) ------------------
HIDDEN = 32              # config.hidden_size
BLOCK = 8                # args.bilinear_block_size
NUM_LABELS = 14          # args.num_labels (label 0 = adaptive threshold class)
SEQ_LEN = 16             # encoder sequence length
NUM_HEADS = 4            # attention heads of the (synthetic) backbone
NL_PAD = 128             # classifier output padded to a full lane tile
W2_PAD = 128             # fused attn-weight [Wh2|Wt2|Wc2] padded 3H=96 -> 128 lanes
HALF_REP = HIDDEN * BLOCK            # 256 (one bilinear half)
REP_DIM = 2 * HALF_REP               # 512 (full bilinear representation)
TILE_M = 256             # pairs per grid step
NEG_INF = -1e9
PRED_DTYPE = jnp.bfloat16


# ------------------------------------ Pallas kernel -----------------------------------
def drugprot_re_kernel(heads_ref, tails_ref, attn_ref, cbias_ref,
                       w1_ref, w2_ref, b_ref, ejk_ref, wcls_ref, bcls_ref,
                       logits_ref, preds_ref):
    f32 = jnp.float32
    bf16 = jnp.bfloat16
    tm, H = heads_ref.shape

    heads = heads_ref[...]                 # (TM, H) bf16
    tails = tails_ref[...]                 # (TM, H) bf16
    attn = attn_ref[...]                   # (TM, H) bf16  (precomputed attn_reps)

    # fused attention-extractor contribution: attn @ [Wh2 | Wt2 | Wc2]  (one MXU push)
    aw = jnp.dot(attn, w2_ref[...], preferred_element_type=f32)          # (TM, 128) f32

    # split-weight extractors (no [x, attn] lane concats); cls part is a precomputed bias
    h_ex = jnp.dot(heads, w1_ref[0], preferred_element_type=f32) + aw[:, 0:H] + b_ref[0]
    t_ex = jnp.dot(tails, w1_ref[1], preferred_element_type=f32) + aw[:, H:2 * H] + b_ref[1]
    c_ex = aw[:, 2 * H:3 * H] + cbias_ref[...]                           # (TM, H) f32

    # single merged bilinear-expansion matmul: [h; t; c] @ [Ej | Ek]
    stacked = jnp.concatenate([h_ex, t_ex, c_ex], axis=0).astype(bf16)   # (3*TM, H)
    big = jnp.dot(stacked, ejk_ref[...], preferred_element_type=f32)     # (3*TM, 512) f32

    h_part = big[0:tm]
    t_part = big[tm:2 * tm]
    c_part = big[2 * tm:3 * tm]
    rep_ht = h_part[:, 0:HALF_REP] * t_part[:, HALF_REP:REP_DIM]         # (TM, 256) f32
    rep_cc = c_part[:, 0:HALF_REP] * c_part[:, HALF_REP:REP_DIM]         # (TM, 256) f32

    # single K=512 classifier push; padded lanes (>= NUM_LABELS) get bias -1e9
    rep = jnp.concatenate([rep_ht, rep_cc], axis=1).astype(bf16)         # (TM, 512)
    logits = jnp.dot(rep, wcls_ref[...], preferred_element_type=f32) + bcls_ref[...]
    logits_ref[...] = logits                                             # (TM, 128) f32

    # get_predictions with use_at_loss=True, k=-1 (adaptive-threshold decoding)
    threshold = logits[:, 0:1]
    preds = jnp.where(logits > threshold, 1.0, 0.0)                      # pad lanes stay 0
    no_pos = (jnp.sum(preds, axis=1, keepdims=True) == 0.0).astype(f32)
    col = jax.lax.broadcasted_iota(jnp.int32, preds.shape, 1)
    preds_ref[...] = jnp.where(col == 0, no_pos, preds).astype(PRED_DTYPE)


# --------------------------------------- wrapper --------------------------------------
def drugprot_re_forward(kparams, heads, tails, attn, cbias, *, tile_m=TILE_M):
    """Flattened-pair kernel: grid over M-tiles of pairs, constants broadcast."""
    M, H = heads.shape
    assert M % tile_m == 0, "pad the flat pair dimension to a multiple of tile_m"

    row = lambda i: (i, 0)
    const2 = lambda i: (0, 0)
    const3 = lambda i: (0, 0, 0)

    in_specs = [
        pl.BlockSpec((tile_m, H), row),               # heads
        pl.BlockSpec((tile_m, H), row),               # tails
        pl.BlockSpec((tile_m, H), row),               # attn_reps (precomputed)
        pl.BlockSpec((tile_m, H), row),               # cls @ Wc[:H] + bc per pair (f32)
        pl.BlockSpec((2, H, H), const3),              # [Wh1, Wt1]
        pl.BlockSpec((H, W2_PAD), const2),            # [Wh2 | Wt2 | Wc2] padded -> 128
        pl.BlockSpec((2, 1, H), const3),              # [bh, bt]
        pl.BlockSpec((H, REP_DIM), const2),           # [Ej | Ek]
        pl.BlockSpec((REP_DIM, NL_PAD), const2),      # classifier weight (lane-padded)
        pl.BlockSpec((1, NL_PAD), const2),            # classifier bias (pad lanes -1e9)
    ]
    out_specs = (pl.BlockSpec((tile_m, NL_PAD), row),
                 pl.BlockSpec((tile_m, NL_PAD), row))
    out_shape = (jax.ShapeDtypeStruct((M, NL_PAD), jnp.float32),
                 jax.ShapeDtypeStruct((M, NL_PAD), PRED_DTYPE))

    fn = pl.pallas_call(
        drugprot_re_kernel,
        grid=(M // tile_m,),
        in_specs=in_specs,
        out_specs=out_specs,
        out_shape=out_shape,
        compiler_params=pltpu.CompilerParams(dimension_semantics=("parallel",)),
    )
    return fn(heads, tails, attn, cbias,
              kparams["w1"], kparams["w2"], kparams["b"],
              kparams["ejk"], kparams["wcls"], kparams["bcls"])


def build_kernel_params(params):
    """Split / fuse / pad the nn.Linear parameters into MXU-friendly layouts."""
    H, B, NL = HIDDEN, BLOCK, NUM_LABELS
    bf16 = jnp.bfloat16

    # first-half extractor weights (applied to the raw head/tail reps)
    w1 = jnp.stack([params["wh"][:H], params["wt"][:H]]).astype(bf16)          # (2, H, H)

    # fused second-half weights (applied to attn_reps): [Wh2 | Wt2 | Wc2] padded to 128
    w2cat = jnp.zeros((H, W2_PAD), jnp.float32)
    w2cat = w2cat.at[:, 0:H].set(params["wh"][H:])
    w2cat = w2cat.at[:, H:2 * H].set(params["wt"][H:])
    w2cat = w2cat.at[:, 2 * H:3 * H].set(params["wc"][H:])

    b = jnp.stack([params["bh"], params["bt"]]).astype(jnp.float32)            # (2, 1, H)

    # 0/1 expansion matrices for the blocked bilinear outer product, lane-concatenated.
    m = jnp.arange(HALF_REP)
    i_idx = m // (B * B)
    j_idx = (m // B) % B
    k_idx = m % B
    rows = jnp.arange(H)[:, None]
    ej = (rows == (i_idx * B + j_idx)[None, :]).astype(jnp.float32)            # (H, 256)
    ek = (rows == (i_idx * B + k_idx)[None, :]).astype(jnp.float32)            # (H, 256)
    ejk = jnp.concatenate([ej, ek], axis=1).astype(bf16)                       # (H, 512)

    # classifier: single (512, 128) weight, zero-padded columns, bias pad lanes = -1e9
    wcls_pad = jnp.zeros((REP_DIM, NL_PAD), jnp.float32)
    wcls_pad = wcls_pad.at[:, :NL].set(params["wcls"])
    bcls_pad = jnp.full((1, NL_PAD), NEG_INF, jnp.float32)
    bcls_pad = bcls_pad.at[:, :NL].set(params["bcls"])

    return dict(w1=w1, w2=w2cat.astype(bf16), b=b, ejk=ejk,
                wcls=wcls_pad.astype(bf16), bcls=bcls_pad)       # bcls stays f32!


# --------------------------------------- main -----------------------------------------
if __name__ == "__main__":
    key = jax.random.PRNGKey(0)
    B, L, H, NH, NL = 2, SEQ_LEN, HIDDEN, NUM_HEADS, NUM_LABELS

    # synthetic backbone outputs (stand-in for self.model / encode())
    k_enc, k_att, k1, k2, k3, k4, k5, k6, k7, k8 = jax.random.split(key, 10)
    encoded_output = jax.random.normal(k_enc, (B, L, H), dtype=jnp.float32)
    att_scores = jax.random.normal(k_att, (B, NH, L, L), dtype=jnp.float32)
    attention = jax.nn.softmax(att_scores, axis=-1)

    s = 0.02
    params = {
        "wh": s * jax.random.normal(k1, (2 * H, H), dtype=jnp.float32),
        "bh": s * jax.random.normal(k2, (1, H), dtype=jnp.float32),
        "wt": s * jax.random.normal(k3, (2 * H, H), dtype=jnp.float32),
        "bt": s * jax.random.normal(k4, (1, H), dtype=jnp.float32),
        "wc": s * jax.random.normal(k5, (2 * H, H), dtype=jnp.float32),
        "bc": s * jax.random.normal(k6, (1, H), dtype=jnp.float32),
        "wcls": s * jax.random.normal(k7, (H * BLOCK * 2, NL), dtype=jnp.float32),
        "bcls": s * jax.random.normal(k8, (1, NL), dtype=jnp.float32),
    }

    # entity / pair metadata (Python lists, exactly as in the PyTorch forward signature)
    n_ent = 12
    entity_positions = [[[p] for p in range(n_ent)] for _ in range(B)]
    head_tail_pairs = [[(i, j) for i in range(n_ent) for j in range(n_ent) if i != j]
                       for _ in range(B)]                      # 132 pairs/doc, 264 total

    # ------ get_representations: index tables + vectorized gathers (no per-pair loops) --
    b_idx, h_pos, t_pos = [], [], []
    for bidx, pairs in enumerate(head_tail_pairs):
        ents = entity_positions[bidx]
        for hid, tid in pairs:
            b_idx.append(bidx)
            h_pos.append(ents[hid][0] + 1)
            t_pos.append(ents[tid][0] + 1)
    bvec = jnp.array(b_idx, jnp.int32)
    hvec = jnp.array(h_pos, jnp.int32)
    tvec = jnp.array(t_pos, jnp.int32)
    P = int(bvec.shape[0])

    heads_f = encoded_output[bvec, hvec]                         # (P, H)
    tails_f = encoded_output[bvec, tvec]                         # (P, H)
    head_att = attention[bvec, :, hvec, :]                       # (P, NH, L)
    tail_att = attention[bvec, :, tvec, :]                       # (P, NH, L)
    ht = jnp.mean(head_att * tail_att, axis=1)                   # (P, L)
    attn_reps = jnp.einsum('pl,plh->ph', ht, encoded_output[bvec])   # (P, H)  (f32)

    # per-document cls-extractor contribution, gathered per pair
    cls_part = encoded_output[:, 0, :] @ params["wc"][:H] + params["bc"]   # (B, H)
    cbias_f = cls_part[bvec]                                               # (P, H)

    # pad the flat pair dimension to a multiple of TILE_M (padded rows filtered below)
    M_pad = ((P + TILE_M - 1) // TILE_M) * TILE_M
    pad = M_pad - P
    padM = lambda x: jnp.pad(x, ((0, pad), (0, 0)))
    bf16 = jnp.bfloat16
    heads_d = padM(heads_f).astype(bf16)
    tails_d = padM(tails_f).astype(bf16)
    attn_d = padM(attn_reps).astype(bf16)
    cbias_d = padM(cbias_f).astype(jnp.float32)

    # ------------------------------- run the Pallas kernel -----------------------------
    kparams = build_kernel_params(params)
    logits_pad, preds_pad = drugprot_re_forward(kparams, heads_d, tails_d, attn_d, cbias_d)
    jax.block_until_ready((logits_pad, preds_pad))

    logits = logits_pad[:P, :NL]
    predictions = preds_pad[:P, :NL].astype(jnp.float32)

    # ---------------- pure-JAX f32 reference of the same math (original layout) --------
    clss_f = encoded_output[bvec, 0, :]                          # (P, H)
    heads_in = jnp.concatenate([heads_f, attn_reps], axis=-1)
    tails_in = jnp.concatenate([tails_f, attn_reps], axis=-1)
    clss_in = jnp.concatenate([clss_f, attn_reps], axis=-1)
    h_ex = heads_in @ params["wh"] + params["bh"]
    t_ex = tails_in @ params["wt"] + params["bt"]
    c_ex = clss_in @ params["wc"] + params["bc"]
    he = jnp.concatenate([h_ex, c_ex], axis=-1)
    te = jnp.concatenate([t_ex, c_ex], axis=-1)
    t1 = he.reshape(-1, 2 * H // BLOCK, BLOCK)
    t2 = te.reshape(-1, 2 * H // BLOCK, BLOCK)
    rep = (t1[:, :, :, None] * t2[:, :, None, :]).reshape(-1, H * BLOCK * 2)
    ref_logits = rep @ params["wcls"] + params["bcls"]

    assert jnp.allclose(logits, ref_logits, rtol=2e-2, atol=2e-2), "logits mismatch"

    # adaptive-threshold decode reference (applied to the kernel's own logits)
    thr = logits[:, 0:1]
    ref_preds = (logits > thr).astype(jnp.float32)
    ref_preds = ref_preds.at[:, 0].set((ref_preds.sum(axis=1) == 0.0).astype(jnp.float32))
    assert jnp.array_equal(predictions, ref_preds), "predictions mismatch"

    print("KERNEL_OK")
</pallas_src>

<mosaic_0001>
module attributes {stable_mosaic.version = 11 : i64} {
  func.func @drugprot_re_kernel(%arg0: i32, %arg1: memref<256x32xbf16, #tpu.memory_space<vmem>>, %arg2: memref<256x32xbf16, #tpu.memory_space<vmem>>, %arg3: memref<256x32xbf16, #tpu.memory_space<vmem>>, %arg4: memref<256x32xf32, #tpu.memory_space<vmem>>, %arg5: memref<2x32x32xbf16, #tpu.memory_space<vmem>>, %arg6: memref<32x128xbf16, #tpu.memory_space<vmem>>, %arg7: memref<2x1x32xf32, #tpu.memory_space<vmem>>, %arg8: memref<32x512xbf16, #tpu.memory_space<vmem>>, %arg9: memref<512x128xbf16, #tpu.memory_space<vmem>>, %arg10: memref<1x128xf32, #tpu.memory_space<vmem>>, %arg11: memref<256x128xf32, #tpu.memory_space<vmem>>, %arg12: memref<256x128xbf16, #tpu.memory_space<vmem>>) attributes {dimension_semantics = [#tpu.dimension_semantics<parallel>], iteration_bounds = array<i64: 2>, scalar_prefetch = 0 : i64, scratch_operands = 0 : i64, tpu.core_type = #tpu.core_type<tc>, window_params = [{transform_indices = @transform_0, window_bounds = array<i64: 256, 32>}, {transform_indices = @transform_1, window_bounds = array<i64: 256, 32>}, {transform_indices = @transform_2, window_bounds = array<i64: 256, 32>}, {transform_indices = @transform_3, window_bounds = array<i64: 256, 32>}, {pipeline_mode = #tpu.pipeline_mode<synchronous>, transform_indices = @transform_4, window_bounds = array<i64: 2, 32, 32>}, {pipeline_mode = #tpu.pipeline_mode<synchronous>, transform_indices = @transform_5, window_bounds = array<i64: 32, 128>}, {pipeline_mode = #tpu.pipeline_mode<synchronous>, transform_indices = @transform_6, window_bounds = array<i64: 2, 1, 32>}, {pipeline_mode = #tpu.pipeline_mode<synchronous>, transform_indices = @transform_7, window_bounds = array<i64: 32, 512>}, {pipeline_mode = #tpu.pipeline_mode<synchronous>, transform_indices = @transform_8, window_bounds = array<i64: 512, 128>}, {pipeline_mode = #tpu.pipeline_mode<synchronous>, transform_indices = @transform_9, window_bounds = array<i64: 1, 128>}, {transform_indices = @transform_10, window_bounds = array<i64: 256, 128>}, {transform_indices = @transform_11, window_bounds = array<i64: 256, 128>}]} {
    %c0 = arith.constant 0 : index
    %c0_0 = arith.constant 0 : index
    %0 = vector.load %arg1[%c0, %c0_0] : memref<256x32xbf16, #tpu.memory_space<vmem>>, vector<256x32xbf16>
    %c0_1 = arith.constant 0 : index
    %c0_2 = arith.constant 0 : index
    %1 = vector.load %arg2[%c0_1, %c0_2] : memref<256x32xbf16, #tpu.memory_space<vmem>>, vector<256x32xbf16>
    %c0_3 = arith.constant 0 : index
    %c0_4 = arith.constant 0 : index
    %2 = vector.load %arg3[%c0_3, %c0_4] : memref<256x32xbf16, #tpu.memory_space<vmem>>, vector<256x32xbf16>
    %c0_5 = arith.constant 0 : index
    %c0_6 = arith.constant 0 : index
    %3 = vector.load %arg6[%c0_5, %c0_6] : memref<32x128xbf16, #tpu.memory_space<vmem>>, vector<32x128xbf16>
    %cst = arith.constant dense<0.000000e+00> : vector<256x128xf32>
    %4 = tpu.matmul %2, %3, %cst {dimension_numbers = #tpu.dot_dimension_numbers<[1], [0], [0], [1], [0, 0, 1, 1], [], []>} : vector<256x32xbf16>, vector<32x128xbf16>, vector<256x128xf32> -> vector<256x128xf32>
    %c0_7 = arith.constant 0 : index
    %c0_8 = arith.constant 0 : index
    %c0_9 = arith.constant 0 : index
    %5 = vector.load %arg5[%c0_7, %c0_8, %c0_9] : memref<2x32x32xbf16, #tpu.memory_space<vmem>>, vector<1x32x32xbf16>
    %6 = vector.shape_cast %5 : vector<1x32x32xbf16> to vector<32x32xbf16>
    %cst_10 = arith.constant dense<0.000000e+00> : vector<256x32xf32>
    %7 = tpu.matmul %0, %6, %cst_10 {dimension_numbers = #tpu.dot_dimension_numbers<[1], [0], [0], [1], [0, 0, 1, 1], [], []>} : vector<256x32xbf16>, vector<32x32xbf16>, vector<256x32xf32> -> vector<256x32xf32>
    %8 = vector.extract_strided_slice %4 {offsets = [0, 0], sizes = [256, 32], strides = [1, 1]} : vector<256x128xf32> to vector<256x32xf32>
    %9 = arith.addf %7, %8 : vector<256x32xf32>
    %c0_11 = arith.constant 0 : index
    %c0_12 = arith.constant 0 : index
    %c0_13 = arith.constant 0 : index
    %10 = vector.load %arg7[%c0_11, %c0_12, %c0_13] : memref<2x1x32xf32, #tpu.memory_space<vmem>>, vector<1x1x32xf32>
    %11 = vector.shape_cast %10 : vector<1x1x32xf32> to vector<1x32xf32>
    %12 = vector.broadcast %11 : vector<1x32xf32> to vector<256x32xf32>
    %13 = arith.addf %9, %12 : vector<256x32xf32>
    %c1 = arith.constant 1 : index
    %c0_14 = arith.constant 0 : index
    %c0_15 = arith.constant 0 : index
    %14 = vector.load %arg5[%c1, %c0_14, %c0_15] : memref<2x32x32xbf16, #tpu.memory_space<vmem>>, vector<1x32x32xbf16>
    %15 = vector.shape_cast %14 : vector<1x32x32xbf16> to vector<32x32xbf16>
    %cst_16 = arith.constant dense<0.000000e+00> : vector<256x32xf32>
    %16 = tpu.matmul %1, %15, %cst_16 {dimension_numbers = #tpu.dot_dimension_numbers<[1], [0], [0], [1], [0, 0, 1, 1], [], []>} : vector<256x32xbf16>, vector<32x32xbf16>, vector<256x32xf32> -> vector<256x32xf32>
    %17 = vector.extract_strided_slice %4 {offsets = [0, 32], sizes = [256, 32], strides = [1, 1]} : vector<256x128xf32> to vector<256x32xf32>
    %18 = arith.addf %16, %17 : vector<256x32xf32>
    %c1_17 = arith.constant 1 : index
    %c0_18 = arith.constant 0 : index
    %c0_19 = arith.constant 0 : index
    %19 = vector.load %arg7[%c1_17, %c0_18, %c0_19] : memref<2x1x32xf32, #tpu.memory_space<vmem>>, vector<1x1x32xf32>
    %20 = vector.shape_cast %19 : vector<1x1x32xf32> to vector<1x32xf32>
    %21 = vector.broadcast %20 : vector<1x32xf32> to vector<256x32xf32>
    %22 = arith.addf %18, %21 : vector<256x32xf32>
    %23 = vector.extract_strided_slice %4 {offsets = [0, 64], sizes = [256, 32], strides = [1, 1]} : vector<256x128xf32> to vector<256x32xf32>
    %c0_20 = arith.constant 0 : index
    %c0_21 = arith.constant 0 : index
    %24 = vector.load %arg4[%c0_20, %c0_21] : memref<256x32xf32, #tpu.memory_space<vmem>>, vector<256x32xf32>
    %25 = arith.addf %23, %24 : vector<256x32xf32>
    %26 = tpu.concatenate %13, %22, %25 in 0 : vector<256x32xf32>, vector<256x32xf32>, vector<256x32xf32> -> vector<768x32xf32>
    %27 = arith.truncf %26 : vector<768x32xf32> to vector<768x32xbf16>
    %c0_22 = arith.constant 0 : index
    %c0_23 = arith.constant 0 : index
    %28 = vector.load %arg8[%c0_22, %c0_23] : memref<32x512xbf16, #tpu.memory_space<vmem>>, vector<32x512xbf16>
    %cst_24 = arith.constant dense<0.000000e+00> : vector<768x512xf32>
    %29 = tpu.matmul %27, %28, %cst_24 {dimension_numbers = #tpu.dot_dimension_numbers<[1], [0], [0], [1], [0, 0, 1, 1], [], []>} : vector<768x32xbf16>, vector<32x512xbf16>, vector<768x512xf32> -> vector<768x512xf32>
    %30 = vector.extract_strided_slice %29 {offsets = [0, 0], sizes = [256, 512], strides = [1, 1]} : vector<768x512xf32> to vector<256x512xf32>
    %31 = vector.extract_strided_slice %29 {offsets = [256, 0], sizes = [256, 512], strides = [1, 1]} : vector<768x512xf32> to vector<256x512xf32>
    %32 = vector.extract_strided_slice %29 {offsets = [512, 0], sizes = [256, 512], strides = [1, 1]} : vector<768x512xf32> to vector<256x512xf32>
    %33 = vector.extract_strided_slice %30 {offsets = [0, 0], sizes = [256, 256], strides = [1, 1]} : vector<256x512xf32> to vector<256x256xf32>
    %34 = vector.extract_strided_slice %31 {offsets = [0, 256], sizes = [256, 256], strides = [1, 1]} : vector<256x512xf32> to vector<256x256xf32>
    %35 = arith.mulf %33, %34 : vector<256x256xf32>
    %36 = vector.extract_strided_slice %32 {offsets = [0, 0], sizes = [256, 256], strides = [1, 1]} : vector<256x512xf32> to vector<256x256xf32>
    %37 = vector.extract_strided_slice %32 {offsets = [0, 256], sizes = [256, 256], strides = [1, 1]} : vector<256x512xf32> to vector<256x256xf32>
    %38 = arith.mulf %36, %37 : vector<256x256xf32>
    %39 = tpu.concatenate %35, %38 in 1 : vector<256x256xf32>, vector<256x256xf32> -> vector<256x512xf32>
    %40 = arith.truncf %39 : vector<256x512xf32> to vector<256x512xbf16>
    %c0_25 = arith.constant 0 : index
    %c0_26 = arith.constant 0 : index
    %41 = vector.load %arg9[%c0_25, %c0_26] : memref<512x128xbf16, #tpu.memory_space<vmem>>, vector<512x128xbf16>
    %cst_27 = arith.constant dense<0.000000e+00> : vector<256x128xf32>
    %42 = tpu.matmul %40, %41, %cst_27 {dimension_numbers = #tpu.dot_dimension_numbers<[1], [0], [0], [1], [0, 0, 1, 1], [], []>} : vector<256x512xbf16>, vector<512x128xbf16>, vector<256x128xf32> -> vector<256x128xf32>
    %c0_28 = arith.constant 0 : index
    %c0_29 = arith.constant 0 : index
    %43 = vector.load %arg10[%c0_28, %c0_29] : memref<1x128xf32, #tpu.memory_space<vmem>>, vector<1x128xf32>
    %44 = vector.broadcast %43 : vector<1x128xf32> to vector<256x128xf32>
    %45 = arith.addf %42, %44 : vector<256x128xf32>
    %c0_30 = arith.constant 0 : index
    %c0_31 = arith.constant 0 : index
    %46 = vector.load %arg11[%c0_30, %c0_31] : memref<256x128xf32, #tpu.memory_space<vmem>>, vector<256x128xf32>
    tpu.vector_store %arg11[%c0_30, %c0_31], %45 {strides = array<i32>} : memref<256x128xf32, #tpu.memory_space<vmem>>, vector<256x128xf32>,
    %47 = vector.extract_strided_slice %45 {offsets = [0, 0], sizes = [256, 1], strides = [1, 1]} : vector<256x128xf32> to vector<256x1xf32>
    %48 = vector.broadcast %47 : vector<256x1xf32> to vector<256x128xf32>
    %49 = arith.cmpf ogt, %45, %48 : vector<256x128xf32>
    %cst_32 = arith.constant 1.000000e+00 : f32
    %cst_33 = arith.constant 0.000000e+00 : f32
    %50 = vector.broadcast %cst_32 : f32 to vector<256x128xf32>
    %51 = vector.broadcast %cst_33 : f32 to vector<256x128xf32>
    %52 = arith.select %49, %50, %51 : vector<256x128xi1>, vector<256x128xf32>
    %cst_34 = arith.constant dense<0.000000e+00> : vector<256xf32>
    %53 = vector.multi_reduction <add>, %52, %cst_34 [1] : vector<256x128xf32> to vector<256xf32>
    %54 = vector.shape_cast %53 : vector<256xf32> to vector<256x1xf32>
    %cst_35 = arith.constant 0.000000e+00 : f32
    %55 = vector.broadcast %cst_35 : f32 to vector<256x1xf32>
    %56 = arith.cmpf oeq, %54, %55 : vector<256x1xf32>
    %57 = arith.extui %56 : vector<256x1xi1> to vector<256x1xi32>
    %58 = arith.sitofp %57 : vector<256x1xi32> to vector<256x1xf32>
    %59 = tpu.iota {dimensions = array<i32: 1>} : vector<256x128xi32>
    %c0_i32 = arith.constant 0 : i32
    %60 = vector.broadcast %c0_i32 : i32 to vector<256x128xi32>
    %61 = arith.cmpi eq, %59, %60 : vector<256x128xi32>
    %62 = vector.shape_cast %58 : vector<256x1xf32> to vector<256x1xf32>
    %63 = vector.broadcast %62 : vector<256x1xf32> to vector<256x128xf32>
    %64 = arith.select %61, %63, %52 : vector<256x128xi1>, vector<256x128xf32>
    %65 = arith.truncf %64 : vector<256x128xf32> to vector<256x128xbf16>
    %c0_36 = arith.constant 0 : index
    %c0_37 = arith.constant 0 : index
    %66 = vector.load %arg12[%c0_36, %c0_37] : memref<256x128xbf16, #tpu.memory_space<vmem>>, vector<256x128xbf16>
    tpu.vector_store %arg12[%c0_36, %c0_37], %65 {strides = array<i32>} : memref<256x128xbf16, #tpu.memory_space<vmem>>, vector<256x128xbf16>,
    return
  }
  func.func @transform_0(%arg0: i32) -> (i32, i32) {
    %c0_i32 = arith.constant 0 : i32
    %c0_i32_0 = arith.constant 0 : i32
    return %arg0, %c0_i32 : i32, i32
  }
  func.func @transform_1(%arg0: i32) -> (i32, i32) {
    %c0_i32 = arith.constant 0 : i32
    %c0_i32_0 = arith.constant 0 : i32
    return %arg0, %c0_i32 : i32, i32
  }
  func.func @transform_2(%arg0: i32) -> (i32, i32) {
    %c0_i32 = arith.constant 0 : i32
    %c0_i32_0 = arith.constant 0 : i32
    return %arg0, %c0_i32 : i32, i32
  }
  func.func @transform_3(%arg0: i32) -> (i32, i32) {
    %c0_i32 = arith.constant 0 : i32
    %c0_i32_0 = arith.constant 0 : i32
    return %arg0, %c0_i32 : i32, i32
  }
  func.func @transform_4(%arg0: i32) -> (i32, i32, i32) {
    %c0_i32 = arith.constant 0 : i32
    %c0_i32_0 = arith.constant 0 : i32
    %c0_i32_1 = arith.constant 0 : i32
    %c0_i32_2 = arith.constant 0 : i32
    return %c0_i32, %c0_i32_0, %c0_i32_1 : i32, i32, i32
  }
  func.func @transform_5(%arg0: i32) -> (i32, i32) {
    %c0_i32 = arith.constant 0 : i32
    %c0_i32_0 = arith.constant 0 : i32
    %c0_i32_1 = arith.constant 0 : i32
    return %c0_i32, %c0_i32_0 : i32, i32
  }
  func.func @transform_6(%arg0: i32) -> (i32, i32, i32) {
    %c0_i32 = arith.constant 0 : i32
    %c0_i32_0 = arith.constant 0 : i32
    %c0_i32_1 = arith.constant 0 : i32
    %c0_i32_2 = arith.constant 0 : i32
    return %c0_i32, %c0_i32_0, %c0_i32_1 : i32, i32, i32
  }
  func.func @transform_7(%arg0: i32) -> (i32, i32) {
    %c0_i32 = arith.constant 0 : i32
    %c0_i32_0 = arith.constant 0 : i32
    %c0_i32_1 = arith.constant 0 : i32
    return %c0_i32, %c0_i32_0 : i32, i32
  }
  func.func @transform_8(%arg0: i32) -> (i32, i32) {
    %c0_i32 = arith.constant 0 : i32
    %c0_i32_0 = arith.constant 0 : i32
    %c0_i32_1 = arith.constant 0 : i32
    return %c0_i32, %c0_i32_0 : i32, i32
  }
  func.func @transform_9(%arg0: i32) -> (i32, i32) {
    %c0_i32 = arith.constant 0 : i32
    %c0_i32_0 = arith.constant 0 : i32
    %c0_i32_1 = arith.constant 0 : i32
    return %c0_i32, %c0_i32_0 : i32, i32
  }
  func.func @transform_10(%arg0: i32) -> (i32, i32) {
    %c0_i32 = arith.constant 0 : i32
    %c0_i32_0 = arith.constant 0 : i32
    return %arg0, %c0_i32 : i32, i32
  }
  func.func @transform_11(%arg0: i32) -> (i32, i32) {
    %c0_i32 = arith.constant 0 : i32
    %c0_i32_0 = arith.constant 0 : i32
    return %arg0, %c0_i32 : i32, i32
  }
}

</mosaic_0001>

<llo_original>
// kernel: tpu_custom_call.1
$region0: #{tpu_custom_call.1}
  #allocation0 [shape = 'u32[]', space=smem, size = 0x4, offset = 0x4, fixed_abs, tag = 'smem constant byte address 0x4 - core index']
  #allocation1 [shape = 'u32[144,128]{1,0:T(1,128)}', space=vmem, size = 0x12000, scoped, tag = 'internal scratch']
  %s0 = inlined_call_operand.vmem [shape: bf16[512,32], index: 0, kind: input, shape index: {}]
  %s1 = inlined_call_operand.vmem [shape: bf16[512,32], index: 1, kind: input, shape index: {}]
  %s2 = inlined_call_operand.vmem [shape: bf16[512,32], index: 2, kind: input, shape index: {}]
  %s3 = inlined_call_operand.vmem [shape: f32[512,32], index: 3, kind: input, shape index: {}]
  %s4 = inlined_call_operand.vmem [shape: bf16[2,32,32], index: 4, kind: input, shape index: {}]
  %s5 = inlined_call_operand.vmem [shape: bf16[32,128], index: 5, kind: input, shape index: {}]
  %s6 = inlined_call_operand.vmem [shape: f32[2,1,32], index: 6, kind: input, shape index: {}]
  %s7 = inlined_call_operand.vmem [shape: bf16[32,512], index: 7, kind: input, shape index: {}]
  %s8 = inlined_call_operand.vmem [shape: bf16[512,128], index: 8, kind: input, shape index: {}]
  %s9 = inlined_call_operand.vmem [shape: f32[1,128], index: 9, kind: input, shape index: {}]
  %s10 = inlined_call_operand.hbm [shape: f32[512,128], index: 10, kind: output, shape index: {0}]
  %s11 = inlined_call_operand.hbm [shape: bf16[512,128], index: 11, kind: output, shape index: {1}]
  %12 = xla_tuple %s10, %s11
  %s13 = sld [smem:[#allocation0]]
  $region81: #{tpu_custom_call.1} parent=0
    _
  %s15 = ssub.s32 1, %s13
  %s16 = scalar_select 0, %s15, %s13
  $region1: #{tpu_custom_call.1} parent=0
    #allocation2 [shape = 'u8[262144]{0}', space=vmem, size = 0x40000, scoped, tag = 'output window, operand 0']
    #allocation3 [shape = 's32[2]{0}', space=sflag, size = 0x8, scoped, tag = 'scoped memory for tpu_custom_call.1']
    #allocation4 [shape = 'u8[131072]{0}', space=vmem, size = 0x20000, scoped, tag = 'output window, operand 1']
    #allocation5 [shape = 's32[2]{0}', space=sflag, size = 0x8, scoped, tag = 'scoped memory for tpu_custom_call.1']
    %17 = vsyncpa [#allocation3], 0
    %s18 = scalar_lea.sflag [#allocation3], 1
    %19 = vsyncpa %s18, 0
    %20 = vsyncpa [#allocation5], 0
    %s21 = scalar_lea.sflag [#allocation5], 1
    %22 = vsyncpa %s21, 0
    loop: start=0, step=1, limit=4
    $region2: #{tpu_custom_call.1} parent=1 // loop_pre_header
      _
    $region3: #{tpu_custom_call.1} parent=1 // loop_header
      %s24 = sphi 0, %s28
      %p25 = scmp.ge.s32.totalorder %s24, 4
      %s34 = sphi 0, %s36
      %s37 = sphi 0, %s34
      %s38 = sphi 0, %s37
      %s54 = sphi 0, %s38
      %s60 = sphi 0, %s62
      %s63 = sphi 0, %s60
      %s64 = sphi 0, %s63
      %s80 = sphi 0, %s64
      %s86 = sphi 0, %s88
      %s89 = sphi 0, %s86
      %s90 = sphi 0, %s89
      %s106 = sphi 0, %s90
      %s112 = sphi 0, %s114
      %s115 = sphi 0, %s112
      %s116 = sphi 0, %s115
      %s132 = sphi 0, %s116
      %s136 = sphi 0, %s136
      %s138 = sphi 0, %s136
      %s139 = sphi 0, %s138
      %s153 = sphi 0, %s139
      %s157 = sphi 0, %s157
      %s159 = sphi 0, %s157
      %s160 = sphi 0, %s159
      %s174 = sphi 0, %s160
      %s178 = sphi 0, %s178
      %s180 = sphi 0, %s178
      %s181 = sphi 0, %s180
      %s195 = sphi 0, %s181
      %s199 = sphi 0, %s199
      %s201 = sphi 0, %s199
      %s202 = sphi 0, %s201
      %s216 = sphi 0, %s202
      %s220 = sphi 0, %s220
      %s222 = sphi 0, %s220
      %s223 = sphi 0, %s222
      %s237 = sphi 0, %s223
      %s241 = sphi 0, %s241
      %s243 = sphi 0, %s241
      %s244 = sphi 0, %s243
      %s258 = sphi 0, %s244
      %s264 = sphi 0, %s266
      %s267 = sphi 0, %s264
      %s268 = sphi 0, %s267
      %s284 = sphi 0, %s268
      %s290 = sphi 0, %s292
      %s293 = sphi 0, %s290
      %s294 = sphi 0, %s293
      %s310 = sphi 0, %s294
    $region4: #{tpu_custom_call.1} parent=1 // loop_header_branch
      %27 = sbr.rel (%p25) target = $region8
    $region5: #{tpu_custom_call.1} parent=1 // loop_body
      %s29 = ssub.s32 %s24, 1
      %s30 = ssub.s32 %s24, 2
      %s31 = sadd.s32 %s24, 1
      %s32 = ssub.s32 %s24, %s31
      %p33 = scmp.eq.s32.totalorder %s32, 0
      %s35 = sadd.s32 %s34, 1
      %s36 = scalar_select %p33, %s34, %s35
      %p39 = pneg %p33
      %p40 = scmp.eq.s32.totalorder %s24, 1
      %p41 = por %p39, %p40
      %p42 = scmp.ne.s32.totalorder %s34, %s37
      %p43 = scmp.eq.s32.totalorder %s24, 0
      %p44 = por %p42, %p43
      %p45 = scmp.ne.s32.totalorder %s34, %s37
      %p46 = scmp.eq.s32.totalorder %s29, 1
      %p47 = por %p45, %p46
      %p48 = scmp.ne.s32.totalorder %s37, %s38
      %p49 = scmp.eq.s32.totalorder %s29, 0
      %p50 = por %p48, %p49
      %p51 = scmp.ne.s32.totalorder %s37, %s38
      %p52 = scmp.eq.s32.totalorder %s30, 1
      %p53 = por %p51, %p52
      %p55 = scmp.ne.s32.totalorder %s38, %s54
      %p56 = scmp.eq.s32.totalorder %s30, 0
      %p57 = por %p55, %p56
      %s58 = ssub.s32 %s24, %s31
      %p59 = scmp.eq.s32.totalorder %s58, 0
      %s61 = sadd.s32 %s60, 1
      %s62 = scalar_select %p59, %s60, %s61
      %p65 = pneg %p59
      %p66 = scmp.eq.s32.totalorder %s24, 1
      %p67 = por %p65, %p66
      %p68 = scmp.ne.s32.totalorder %s60, %s63
      %p69 = scmp.eq.s32.totalorder %s24, 0
      %p70 = por %p68, %p69
      %p71 = scmp.ne.s32.totalorder %s60, %s63
      %p72 = scmp.eq.s32.totalorder %s29, 1
      %p73 = por %p71, %p72
      %p74 = scmp.ne.s32.totalorder %s63, %s64
      %p75 = scmp.eq.s32.totalorder %s29, 0
      %p76 = por %p74, %p75
      %p77 = scmp.ne.s32.totalorder %s63, %s64
      %p78 = scmp.eq.s32.totalorder %s30, 1
      %p79 = por %p77, %p78
      %p81 = scmp.ne.s32.totalorder %s64, %s80
      %p82 = scmp.eq.s32.totalorder %s30, 0
      %p83 = por %p81, %p82
      %s84 = ssub.s32 %s24, %s31
      %p85 = scmp.eq.s32.totalorder %s84, 0
      %s87 = sadd.s32 %s86, 1
      %s88 = scalar_select %p85, %s86, %s87
      %p91 = pneg %p85
      %p92 = scmp.eq.s32.totalorder %s24, 1
      %p93 = por %p91, %p92
      %p94 = scmp.ne.s32.totalorder %s86, %s89
      %p95 = scmp.eq.s32.totalorder %s24, 0
      %p96 = por %p94, %p95
      %p97 = scmp.ne.s32.totalorder %s86, %s89
      %p98 = scmp.eq.s32.totalorder %s29, 1
      %p99 = por %p97, %p98
      %p100 = scmp.ne.s32.totalorder %s89, %s90
      %p101 = scmp.eq.s32.totalorder %s29, 0
      %p102 = por %p100, %p101
      %p103 = scmp.ne.s32.totalorder %s89, %s90
      %p104 = scmp.eq.s32.totalorder %s30, 1
      %p105 = por %p103, %p104
      %p107 = scmp.ne.s32.totalorder %s90, %s106
      %p108 = scmp.eq.s32.totalorder %s30, 0
      %p109 = por %p107, %p108
      %s110 = ssub.s32 %s24, %s31
      %p111 = scmp.eq.s32.totalorder %s110, 0
      %s113 = sadd.s32 %s112, 1
      %s114 = scalar_select %p111, %s112, %s113
      %p117 = pneg %p111
      %p118 = scmp.eq.s32.totalorder %s24, 1
      %p119 = por %p117, %p118
      %p120 = scmp.ne.s32.totalorder %s112, %s115
      %p121 = scmp.eq.s32.totalorder %s24, 0
      %p122 = por %p120, %p121
      %p123 = scmp.ne.s32.totalorder %s112, %s115
      %p124 = scmp.eq.s32.totalorder %s29, 1
      %p125 = por %p123, %p124
      %p126 = scmp.ne.s32.totalorder %s115, %s116
      %p127 = scmp.eq.s32.totalorder %s29, 0
      %p128 = por %p126, %p127
      %p129 = scmp.ne.s32.totalorder %s115, %s116
      %p130 = scmp.eq.s32.totalorder %s30, 1
      %p131 = por %p129, %p130
      %p133 = scmp.ne.s32.totalorder %s116, %s132
      %p134 = scmp.eq.s32.totalorder %s30, 0
      %p135 = por %p133, %p134
      %s137 = sadd.s32 %s136, 1
      %p140 = scmp.eq.s32.totalorder %s24, 1
      %p141 = scmp.ne.s32.totalorder %s136, %s138
      %p142 = scmp.eq.s32.totalorder %s24, 0
      %p143 = por %p141, %p142
      %p144 = scmp.ne.s32.totalorder %s136, %s138
      %p145 = scmp.eq.s32.totalorder %s29, 1
      %p146 = por %p144, %p145
      %p147 = scmp.ne.s32.totalorder %s138, %s139
      %p148 = scmp.eq.s32.totalorder %s29, 0
      %p149 = por %p147, %p148
      %p150 = scmp.ne.s32.totalorder %s138, %s139
      %p151 = scmp.eq.s32.totalorder %s30, 1
      %p152 = por %p150, %p151
      %p154 = scmp.ne.s32.totalorder %s139, %s153
      %p155 = scmp.eq.s32.totalorder %s30, 0
      %p156 = por %p154, %p155
      %s158 = sadd.s32 %s157, 1
      %p161 = scmp.eq.s32.totalorder %s24, 1
      %p162 = scmp.ne.s32.totalorder %s157, %s159
      %p163 = scmp.eq.s32.totalorder %s24, 0
      %p164 = por %p162, %p163
      %p165 = scmp.ne.s32.totalorder %s157, %s159
      %p166 = scmp.eq.s32.totalorder %s29, 1
      %p167 = por %p165, %p166
      %p168 = scmp.ne.s32.totalorder %s159, %s160
      %p169 = scmp.eq.s32.totalorder %s29, 0
      %p170 = por %p168, %p169
      %p171 = scmp.ne.s32.totalorder %s159, %s160
      %p172 = scmp.eq.s32.totalorder %s30, 1
      %p173 = por %p171, %p172
      %p175 = scmp.ne.s32.totalorder %s160, %s174
      %p176 = scmp.eq.s32.totalorder %s30, 0
      %p177 = por %p175, %p176
      %s179 = sadd.s32 %s178, 1
      %p182 = scmp.eq.s32.totalorder %s24, 1
      %p183 = scmp.ne.s32.totalorder %s178, %s180
      %p184 = scmp.eq.s32.totalorder %s24, 0
      %p185 = por %p183, %p184
      %p186 = scmp.ne.s32.totalorder %s178, %s180
      %p187 = scmp.eq.s32.totalorder %s29, 1
      %p188 = por %p186, %p187
      %p189 = scmp.ne.s32.totalorder %s180, %s181
      %p190 = scmp.eq.s32.totalorder %s29, 0
      %p191 = por %p189, %p190
      %p192 = scmp.ne.s32.totalorder %s180, %s181
      %p193 = scmp.eq.s32.totalorder %s30, 1
      %p194 = por %p192, %p193
      %p196 = scmp.ne.s32.totalorder %s181, %s195
      %p197 = scmp.eq.s32.totalorder %s30, 0
      %p198 = por %p196, %p197
      %s200 = sadd.s32 %s199, 1
      %p203 = scmp.eq.s32.totalorder %s24, 1
      %p204 = scmp.ne.s32.totalorder %s199, %s201
      %p205 = scmp.eq.s32.totalorder %s24, 0
      %p206 = por %p204, %p205
      %p207 = scmp.ne.s32.totalorder %s199, %s201
      %p208 = scmp.eq.s32.totalorder %s29, 1
      %p209 = por %p207, %p208
      %p210 = scmp.ne.s32.totalorder %s201, %s202
      %p211 = scmp.eq.s32.totalorder %s29, 0
      %p212 = por %p210, %p211
      %p213 = scmp.ne.s32.totalorder %s201, %s202
      %p214 = scmp.eq.s32.totalorder %s30, 1
      %p215 = por %p213, %p214
      %p217 = scmp.ne.s32.totalorder %s202, %s216
      %p218 = scmp.eq.s32.totalorder %s30, 0
      %p219 = por %p217, %p218
      %s221 = sadd.s32 %s220, 1
      %p224 = scmp.eq.s32.totalorder %s24, 1
      %p225 = scmp.ne.s32.totalorder %s220, %s222
      %p226 = scmp.eq.s32.totalorder %s24, 0
      %p227 = por %p225, %p226
      %p228 = scmp.ne.s32.totalorder %s220, %s222
      %p229 = scmp.eq.s32.totalorder %s29, 1
      %p230 = por %p228, %p229
      %p231 = scmp.ne.s32.totalorder %s222, %s223
      %p232 = scmp.eq.s32.totalorder %s29, 0
      %p233 = por %p231, %p232
      %p234 = scmp.ne.s32.totalorder %s222, %s223
      %p235 = scmp.eq.s32.totalorder %s30, 1
      %p236 = por %p234, %p235
      %p238 = scmp.ne.s32.totalorder %s223, %s237
      %p239 = scmp.eq.s32.totalorder %s30, 0
      %p240 = por %p238, %p239
      %s242 = sadd.s32 %s241, 1
      %p245 = scmp.eq.s32.totalorder %s24, 1
      %p246 = scmp.ne.s32.totalorder %s241, %s243
      %p247 = scmp.eq.s32.totalorder %s24, 0
      %p248 = por %p246, %p247
      %p249 = scmp.ne.s32.totalorder %s241, %s243
      %p250 = scmp.eq.s32.totalorder %s29, 1
      %p251 = por %p249, %p250
      %p252 = scmp.ne.s32.totalorder %s243, %s244
      %p253 = scmp.eq.s32.totalorder %s29, 0
      %p254 = por %p252, %p253
      %p255 = scmp.ne.s32.totalorder %s243, %s244
      %p256 = scmp.eq.s32.totalorder %s30, 1
      %p257 = por %p255, %p256
      %p259 = scmp.ne.s32.totalorder %s244, %s258
      %p260 = scmp.eq.s32.totalorder %s30, 0
      %p261 = por %p259, %p260
      %s262 = ssub.s32 %s24, %s31
      %p263 = scmp.eq.s32.totalorder %s262, 0
      %s265 = sadd.s32 %s264, 1
      %s266 = scalar_select %p263, %s264, %s265
      %p269 = pneg %p263
      %p270 = scmp.eq.s32.totalorder %s24, 1
      %p271 = por %p269, %p270
      %p272 = scmp.ne.s32.totalorder %s264, %s267
      %p273 = scmp.eq.s32.totalorder %s24, 0
      %p274 = por %p272, %p273
      %p275 = scmp.ne.s32.totalorder %s264, %s267
      %p276 = scmp.eq.s32.totalorder %s29, 1
      %p277 = por %p275, %p276
      %p278 = scmp.ne.s32.totalorder %s267, %s268
      %p279 = scmp.eq.s32.totalorder %s29, 0
      %p280 = por %p278, %p279
      %p281 = scmp.ne.s32.totalorder %s267, %s268
      %p282 = scmp.eq.s32.totalorder %s30, 1
      %p283 = por %p281, %p282
      %p285 = scmp.ne.s32.totalorder %s268, %s284
      %p286 = scmp.eq.s32.totalorder %s30, 0
      %p287 = por %p285, %p286
      %s288 = ssub.s32 %s24, %s31
      %p289 = scmp.eq.s32.totalorder %s288, 0
      %s291 = sadd.s32 %s290, 1
      %s292 = scalar_select %p289, %s290, %s291
      %p295 = pneg %p289
      %p296 = scmp.eq.s32.totalorder %s24, 1
      %p297 = por %p295, %p296
      %p298 = scmp.ne.s32.totalorder %s290, %s293
      %p299 = scmp.eq.s32.totalorder %s24, 0
      %p300 = por %p298, %p299
      %p301 = scmp.ne.s32.totalorder %s290, %s293
      %p302 = scmp.eq.s32.totalorder %s29, 1
      %p303 = por %p301, %p302
      %p304 = scmp.ne.s32.totalorder %s293, %s294
      %p305 = scmp.eq.s32.totalorder %s29, 0
      %p306 = por %p304, %p305
      %p307 = scmp.ne.s32.totalorder %s293, %s294
      %p308 = scmp.eq.s32.totalorder %s30, 1
      %p309 = por %p307, %p308
      %p311 = scmp.ne.s32.totalorder %s294, %s310
      %p312 = scmp.eq.s32.totalorder %s30, 0
      %p313 = por %p311, %p312
      %p314 = scmp.le.s32.totalorder 1, %s24
      %p315 = scmp.lt.s32.totalorder %s24, 3
      %p316 = pnand %p314, %p315
      %p317 = pneg %p316
      // Predicated region
      $region9: #{tpu_custom_call.1} parent=5 // pred_check
        _
      $region10: #{tpu_custom_call.1} parent=5 // pred_check_branch
        %319 = sbr.rel (%p316) target = $region12
      $region11: #{tpu_custom_call.1} parent=5 // pred_region
        %s320 = ssub.s32 %s24, 1
        // Predicated region
        $region13: #{tpu_custom_call.1} parent=11 // pred_check
          %p321 = pneg %p149
        $region14: #{tpu_custom_call.1} parent=11 // pred_check_branch
          %323 = sbr.rel (%p321) target = $region16
        $region15: #{tpu_custom_call.1} parent=11 // pred_region
          _
        $region16: #{tpu_custom_call.1} parent=11 // pred_fallthru
          _
        // Predicated region
        $region17: #{tpu_custom_call.1} parent=11 // pred_check
          %p324 = pneg %p170
        $region18: #{tpu_custom_call.1} parent=11 // pred_check_branch
          %326 = sbr.rel (%p324) target = $region20
        $region19: #{tpu_custom_call.1} parent=11 // pred_region
          _
        $region20: #{tpu_custom_call.1} parent=11 // pred_fallthru
          _
        // Predicated region
        $region21: #{tpu_custom_call.1} parent=11 // pred_check
          %p327 = pneg %p191
        $region22: #{tpu_custom_call.1} parent=11 // pred_check_branch
          %329 = sbr.rel (%p327) target = $region24
        $region23: #{tpu_custom_call.1} parent=11 // pred_region
          _
        $region24: #{tpu_custom_call.1} parent=11 // pred_fallthru
          _
        // Predicated region
        $region25: #{tpu_custom_call.1} parent=11 // pred_check
          %p330 = pneg %p212
        $region26: #{tpu_custom_call.1} parent=11 // pred_check_branch
          %332 = sbr.rel (%p330) target = $region28
        $region27: #{tpu_custom_call.1} parent=11 // pred_region
          _
        $region28: #{tpu_custom_call.1} parent=11 // pred_fallthru
          _
        // Predicated region
        $region29: #{tpu_custom_call.1} parent=11 // pred_check
          %p333 = pneg %p233
        $region30: #{tpu_custom_call.1} parent=11 // pred_check_branch
          %335 = sbr.rel (%p333) target = $region32
        $region31: #{tpu_custom_call.1} parent=11 // pred_region
          _
        $region32: #{tpu_custom_call.1} parent=11 // pred_fallthru
          _
        // Predicated region
        $region33: #{tpu_custom_call.1} parent=11 // pred_check
          %p336 = pneg %p254
        $region34: #{tpu_custom_call.1} parent=11 // pred_check_branch
          %338 = sbr.rel (%p336) target = $region36
        $region35: #{tpu_custom_call.1} parent=11 // pred_region
          _
        $region36: #{tpu_custom_call.1} parent=11 // pred_fallthru
          _
      $region12: #{tpu_custom_call.1} parent=5 // pred_fallthru
        _
      %p339 = scmp.lt.s32.totalorder %s24, 2
      // Predicated region
      $region37: #{tpu_custom_call.1} parent=5 // pred_check
        %p340 = pneg %p339
      $region38: #{tpu_custom_call.1} parent=5 // pred_check_branch
        %342 = sbr.rel (%p340) target = $region40
      $region39: #{tpu_custom_call.1} parent=5 // pred_region
        // Predicated region
        $region41: #{tpu_custom_call.1} parent=39 // pred_check
          %p343 = pneg %p44
        $region42: #{tpu_custom_call.1} parent=39 // pred_check_branch
          %345 = sbr.rel (%p343) target = $region44
        $region43: #{tpu_custom_call.1} parent=39 // pred_region
          %s346 = smul.u32 32, %s24
          %p347 = scmp.lt.s32.totalorder %s346, 63
          %s348 = scalar_select %p347, %s346, 63
          %s349 = smul.addr %s348, 4
          %s350 = scalar_lea.vmem %s0, %s349
          %s351 = smul.u32 32, %s24
        $region44: #{tpu_custom_call.1} parent=39 // pred_fallthru
          _
        // Predicated region
        $region45: #{tpu_custom_call.1} parent=39 // pred_check
          %p352 = pneg %p70
        $region46: #{tpu_custom_call.1} parent=39 // pred_check_branch
          %354 = sbr.rel (%p352) target = $region48
        $region47: #{tpu_custom_call.1} parent=39 // pred_region
          %s355 = smul.u32 32, %s24
          %p356 = scmp.lt.s32.totalorder %s355, 63
          %s357 = scalar_select %p356, %s355, 63
          %s358 = smul.addr %s357, 4
          %s359 = scalar_lea.vmem %s1, %s358
          %s360 = smul.u32 32, %s24
        $region48: #{tpu_custom_call.1} parent=39 // pred_fallthru
          _
        // Predicated region
        $region49: #{tpu_custom_call.1} parent=39 // pred_check
          %p361 = pneg %p96
        $region50: #{tpu_custom_call.1} parent=39 // pred_check_branch
          %363 = sbr.rel (%p361) target = $region52
        $region51: #{tpu_custom_call.1} parent=39 // pred_region
          %s364 = smul.u32 32, %s24
          %p365 = scmp.lt.s32.totalorder %s364, 63
          %s366 = scalar_select %p365, %s364, 63
          %s367 = smul.addr %s366, 4
          %s368 = scalar_lea.vmem %s2, %s367
          %s369 = smul.u32 32, %s24
        $region52: #{tpu_custom_call.1} parent=39 // pred_fallthru
          _
        // Predicated region
        $region53: #{tpu_custom_call.1} parent=39 // pred_check
          %p370 = pneg %p122
        $region54: #{tpu_custom_call.1} parent=39 // pred_check_branch
          %372 = sbr.rel (%p370) target = $region56
        $region55: #{tpu_custom_call.1} parent=39 // pred_region
          %s373 = smul.u32 32, %s24
          %p374 = scmp.lt.s32.totalorder %s373, 63
          %s375 = scalar_select %p374, %s373, 63
          %s376 = smul.addr %s375, 8
          %s377 = scalar_lea.vmem %s3, %s376
          %s378 = smul.u32 32, %s24
        $region56: #{tpu_custom_call.1} parent=39 // pred_fallthru
          _
      $region40: #{tpu_custom_call.1} parent=5 // pred_fallthru
        _
      %p379 = scmp.le.s32.totalorder 1, %s24
      %p380 = scmp.lt.s32.totalorder %s24, 3
      %p381 = pnand %p379, %p380
      %p382 = pneg %p381
      // Predicated region
      $region57: #{tpu_custom_call.1} parent=5 // pred_check
        _
      $region58: #{tpu_custom_call.1} parent=5 // pred_check_branch
        %384 = sbr.rel (%p381) target = $region60
      $region59: #{tpu_custom_call.1} parent=5 // pred_region
        %s385 = ssub.s32 %s24, 1
        %s386 = smul.u32 32, %s29
        %p387 = scmp.lt.s32.totalorder %s386, 63
        %s388 = scalar_select %p387, %s386, 63
        %s389 = smul.addr %s388, 4
        %s390 = scalar_lea.vmem %s0, %s389
        %p391 = pneg %p50
        %p392 = pneg %p47
        %s393 = smul.u32 32, %s29
        %p394 = scmp.lt.s32.totalorder %s393, 63
        %s395 = scalar_select %p394, %s393, 63
        %s396 = smul.addr %s395, 4
        %s397 = scalar_lea.vmem %s1, %s396
        %p398 = pneg %p76
        %p399 = pneg %p73
        %s400 = smul.u32 32, %s29
        %p401 = scmp.lt.s32.totalorder %s400, 63
        %s402 = scalar_select %p401, %s400, 63
        %s403 = smul.addr %s402, 4
        %s404 = scalar_lea.vmem %s2, %s403
        %p405 = pneg %p102
        %p406 = pneg %p99
        %s407 = smul.u32 32, %s29
        %p408 = scmp.lt.s32.totalorder %s407, 63
        %s409 = scalar_select %p408, %s407, 63
        %s410 = smul.addr %s409, 8
        %s411 = scalar_lea.vmem %s3, %s410
        %p412 = pneg %p128
        %p413 = pneg %p125
        %p414 = pneg %p149
        %p415 = pneg %p146
        %p416 = pneg %p170
        %p417 = pneg %p167
        %p418 = pneg %p191
        %p419 = pneg %p188
        %p420 = pneg %p212
        %p421 = pneg %p209
        %p422 = pneg %p233
        %p423 = pneg %p230
        %p424 = pneg %p254
        %p425 = pneg %p251
        %p426 = pneg %p280
        %p427 = pneg %p277
        %s428 = sand.u32 %s267, 1
        %s429 = scalar_lea.sflag [#allocation3], %s428
        %s430 = sand.u32 %s267, 1
        %s431 = smul.addr %s430, 256
        %s432 = scalar_lea.vmem [#allocation2], %s431
        %p433 = pneg %p306
        %p434 = pneg %p303
        %s435 = sand.u32 %s293, 1
        %s436 = scalar_lea.sflag [#allocation5], %s435
        %s437 = sand.u32 %s293, 1
        %s438 = smul.addr %s437, 128
        %s439 = scalar_lea.vmem [#allocation4], %s438
        %s440 = smul.u32 32, %s29
        %p441 = scmp.lt.s32.totalorder %s440, 63
        %s442 = scalar_select %p441, %s440, 63
        %s443 = smul.addr %s442, 4
        %s444 = scalar_lea.vmem %s0, %s443
        %s445 = smul.u32 32, %s29
        %s446 = smul.u32 32, %s29
        %p447 = scmp.lt.s32.totalorder %s446, 63
        %s448 = scalar_select %p447, %s446, 63
        %s449 = smul.addr %s448, 4
        %s450 = scalar_lea.vmem %s1, %s449
        %s451 = smul.u32 32, %s29
        %s452 = smul.u32 32, %s29
        %p453 = scmp.lt.s32.totalorder %s452, 63
        %s454 = scalar_select %p453, %s452, 63
        %s455 = smul.addr %s454, 4
        %s456 = scalar_lea.vmem %s2, %s455
        %s457 = smul.u32 32, %s29
        %s458 = smul.u32 32, %s29
        %p459 = scmp.lt.s32.totalorder %s458, 63
        %s460 = scalar_select %p459, %s458, 63
        %s461 = smul.addr %s460, 8
        %s462 = scalar_lea.vmem %s3, %s461
        %s463 = smul.u32 32, %s29
        %s464 = smul.u32 32, %s29
        %s465 = smul.u32 32, %s29
        %v467 = vld [vmem:[%s444] sm:$0xf]
        %v468 = vld [vmem:[%s444 + $0x4] sm:$0xf]
        %v469 = vld [vmem:[%s444 + $0x8] sm:$0xf]
        %v470 = vld [vmem:[%s444 + $0xc] sm:$0xf]
        %v471 = vld [vmem:[%s444 + $0x10] sm:$0xf]
        %v472 = vld [vmem:[%s444 + $0x14] sm:$0xf]
        %v473 = vld [vmem:[%s444 + $0x18] sm:$0xf]
        %v474 = vld [vmem:[%s444 + $0x1c] sm:$0xf]
        %v475 = vld [vmem:[%s444 + $0x20] sm:$0xf]
        %v476 = vld [vmem:[%s444 + $0x24] sm:$0xf]
        %v477 = vld [vmem:[%s444 + $0x28] sm:$0xf]
        %v478 = vld [vmem:[%s444 + $0x2c] sm:$0xf]
        %v479 = vld [vmem:[%s444 + $0x30] sm:$0xf]
        %v480 = vld [vmem:[%s444 + $0x34] sm:$0xf]
        %v481 = vld [vmem:[%s444 + $0x38] sm:$0xf]
        %v482 = vld [vmem:[%s444 + $0x3c] sm:$0xf]
        %v483 = vld [vmem:[%s444 + $0x40] sm:$0xf]
        %v484 = vld [vmem:[%s444 + $0x44] sm:$0xf]
        %v485 = vld [vmem:[%s444 + $0x48] sm:$0xf]
        %v486 = vld [vmem:[%s444 + $0x4c] sm:$0xf]
        %v487 = vld [vmem:[%s444 + $0x50] sm:$0xf]
        %v488 = vld [vmem:[%s444 + $0x54] sm:$0xf]
        %v489 = vld [vmem:[%s444 + $0x58] sm:$0xf]
        %v490 = vld [vmem:[%s444 + $0x5c] sm:$0xf]
        %v491 = vld [vmem:[%s444 + $0x60] sm:$0xf]
        %v492 = vld [vmem:[%s444 + $0x64] sm:$0xf]
        %v493 = vld [vmem:[%s444 + $0x68] sm:$0xf]
        %v494 = vld [vmem:[%s444 + $0x6c] sm:$0xf]
        %v495 = vld [vmem:[%s444 + $0x70] sm:$0xf]
        %v496 = vld [vmem:[%s444 + $0x74] sm:$0xf]
        %v497 = vld [vmem:[%s444 + $0x78] sm:$0xf]
        %v498 = vld [vmem:[%s444 + $0x7c] sm:$0xf]
        %v499 = vld [vmem:[%s450] sm:$0xf]
        %v500 = vld [vmem:[%s450 + $0x4] sm:$0xf]
        %v501 = vld [vmem:[%s450 + $0x8] sm:$0xf]
        %v502 = vld [vmem:[%s450 + $0xc] sm:$0xf]
        %v503 = vld [vmem:[%s450 + $0x10] sm:$0xf]
        %v504 = vld [vmem:[%s450 + $0x14] sm:$0xf]
        %v505 = vld [vmem:[%s450 + $0x18] sm:$0xf]
        %v506 = vld [vmem:[%s450 + $0x1c] sm:$0xf]
        %v507 = vld [vmem:[%s450 + $0x20] sm:$0xf]
        %v508 = vld [vmem:[%s450 + $0x24] sm:$0xf]
        %v509 = vld [vmem:[%s450 + $0x28] sm:$0xf]
        %v510 = vld [vmem:[%s450 + $0x2c] sm:$0xf]
        %v511 = vld [vmem:[%s450 + $0x30] sm:$0xf]
        %v512 = vld [vmem:[%s450 + $0x34] sm:$0xf]
        %v513 = vld [vmem:[%s450 + $0x38] sm:$0xf]
        %v514 = vld [vmem:[%s450 + $0x3c] sm:$0xf]
        %v515 = vld [vmem:[%s450 + $0x40] sm:$0xf]
        %v516 = vld [vmem:[%s450 + $0x44] sm:$0xf]
        %v517 = vld [vmem:[%s450 + $0x48] sm:$0xf]
        %v518 = vld [vmem:[%s450 + $0x4c] sm:$0xf]
        %v519 = vld [vmem:[%s450 + $0x50] sm:$0xf]
        %v520 = vld [vmem:[%s450 + $0x54] sm:$0xf]
        %v521 = vld [vmem:[%s450 + $0x58] sm:$0xf]
        %v522 = vld [vmem:[%s450 + $0x5c] sm:$0xf]
        %v523 = vld [vmem:[%s450 + $0x60] sm:$0xf]
        %v524 = vld [vmem:[%s450 + $0x64] sm:$0xf]
        %v525 = vld [vmem:[%s450 + $0x68] sm:$0xf]
        %v526 = vld [vmem:[%s450 + $0x6c] sm:$0xf]
        %v527 = vld [vmem:[%s450 + $0x70] sm:$0xf]
        %v528 = vld [vmem:[%s450 + $0x74] sm:$0xf]
        %v529 = vld [vmem:[%s450 + $0x78] sm:$0xf]
        %v530 = vld [vmem:[%s450 + $0x7c] sm:$0xf]
        %v531 = vld [vmem:[%s456] sm:$0xf]
        %v532 = vld [vmem:[%s456 + $0x4] sm:$0xf]
        %v533 = vld [vmem:[%s456 + $0x8] sm:$0xf]
        %v534 = vld [vmem:[%s456 + $0xc] sm:$0xf]
        %v535 = vld [vmem:[%s456 + $0x10] sm:$0xf]
        %v536 = vld [vmem:[%s456 + $0x14] sm:$0xf]
        %v537 = vld [vmem:[%s456 + $0x18] sm:$0xf]
        %v538 = vld [vmem:[%s456 + $0x1c] sm:$0xf]
        %v539 = vld [vmem:[%s456 + $0x20] sm:$0xf]
        %v540 = vld [vmem:[%s456 + $0x24] sm:$0xf]
        %v541 = vld [vmem:[%s456 + $0x28] sm:$0xf]
        %v542 = vld [vmem:[%s456 + $0x2c] sm:$0xf]
        %v543 = vld [vmem:[%s456 + $0x30] sm:$0xf]
        %v544 = vld [vmem:[%s456 + $0x34] sm:$0xf]
        %v545 = vld [vmem:[%s456 + $0x38] sm:$0xf]
        %v546 = vld [vmem:[%s456 + $0x3c] sm:$0xf]
        %v547 = vld [vmem:[%s456 + $0x40] sm:$0xf]
        %v548 = vld [vmem:[%s456 + $0x44] sm:$0xf]
        %v549 = vld [vmem:[%s456 + $0x48] sm:$0xf]
        %v550 = vld [vmem:[%s456 + $0x4c] sm:$0xf]
        %v551 = vld [vmem:[%s456 + $0x50] sm:$0xf]
        %v552 = vld [vmem:[%s456 + $0x54] sm:$0xf]
        %v553 = vld [vmem:[%s456 + $0x58] sm:$0xf]
        %v554 = vld [vmem:[%s456 + $0x5c] sm:$0xf]
        %v555 = vld [vmem:[%s456 + $0x60] sm:$0xf]
        %v556 = vld [vmem:[%s456 + $0x64] sm:$0xf]
        %v557 = vld [vmem:[%s456 + $0x68] sm:$0xf]
        %v558 = vld [vmem:[%s456 + $0x6c] sm:$0xf]
        %v559 = vld [vmem:[%s456 + $0x70] sm:$0xf]
        %v560 = vld [vmem:[%s456 + $0x74] sm:$0xf]
        %v561 = vld [vmem:[%s456 + $0x78] sm:$0xf]
        %v562 = vld [vmem:[%s456 + $0x7c] sm:$0xf]
        %v563 = vld [vmem:[%s5] sm:$0xf]
        %v564 = vld [vmem:[%s5 + $0x4] sm:$0xf]
        %v565 = vld [vmem:[%s5 + $0x8] sm:$0xf]
        %v566 = vld [vmem:[%s5 + $0xc] sm:$0xf]
        %v599 = vunpack.c.l.b16 %v531
        %v600 = vunpack.c.l.b16 %v532
        %v601 = vunpack.c.l.b16 %v533
        %v602 = vunpack.c.l.b16 %v534
        %v603 = vunpack.c.l.b16 %v535
        %v604 = vunpack.c.l.b16 %v536
        %v605 = vunpack.c.l.b16 %v537
        %v606 = vunpack.c.l.b16 %v538
        %v607 = vunpack.c.l.b16 %v539
        %v608 = vunpack.c.l.b16 %v540
        %v609 = vunpack.c.l.b16 %v541
        %v610 = vunpack.c.l.b16 %v542
        %v611 = vunpack.c.l.b16 %v543
        %v612 = vunpack.c.l.b16 %v544
        %v613 = vunpack.c.l.b16 %v545
        %v614 = vunpack.c.l.b16 %v546
        %v615 = vunpack.c.l.b16 %v547
        %v616 = vunpack.c.l.b16 %v548
        %v617 = vunpack.c.l.b16 %v549
        %v618 = vunpack.c.l.b16 %v550
        %v619 = vunpack.c.l.b16 %v551
        %v620 = vunpack.c.l.b16 %v552
        %v621 = vunpack.c.l.b16 %v553
        %v622 = vunpack.c.l.b16 %v554
        %v623 = vunpack.c.l.b16 %v555
        %v624 = vunpack.c.l.b16 %v556
        %v625 = vunpack.c.l.b16 %v557
        %v626 = vunpack.c.l.b16 %v558
        %v627 = vunpack.c.l.b16 %v559
        %v628 = vunpack.c.l.b16 %v560
        %v629 = vunpack.c.l.b16 %v561
        %v630 = vunpack.c.l.b16 %v562
        %v631 = vpack.c.b16 %v600, %v599
        %v632 = vpack.c.b16 %v602, %v601
        %v633 = vpack.c.b16 %v604, %v603
        %v634 = vpack.c.b16 %v606, %v605
        %v635 = vpack.c.b16 %v608, %v607
        %v636 = vpack.c.b16 %v610, %v609
        %v637 = vpack.c.b16 %v612, %v611
        %v638 = vpack.c.b16 %v614, %v613
        %v639 = vpack.c.b16 %v616, %v615
        %v640 = vpack.c.b16 %v618, %v617
        %v641 = vpack.c.b16 %v620, %v619
        %v642 = vpack.c.b16 %v622, %v621
        %v643 = vpack.c.b16 %v624, %v623
        %v644 = vpack.c.b16 %v626, %v625
        %v645 = vpack.c.b16 %v628, %v627
        %v646 = vpack.c.b16 %v630, %v629
        %v651 = vunpack.c.l.b16 %v563
        %v652 = vunpack.c.l.b16 %v564
        %v653 = vunpack.c.l.b16 %v565
        %v654 = vunpack.c.l.b16 %v566
        %v655 = vpack.c.b16 %v652, %v651
        %v656 = vpack.c.b16 %v654, %v653
        %vm659 = vcmask 261120
        %v661 = vsel %vm659, %v631, 0
        %v664 = vsel %vm659, %v632, 0
        %v667 = vsel %vm659, %v633, 0
        %v670 = vsel %vm659, %v634, 0
        %v673 = vsel %vm659, %v635, 0
        %v676 = vsel %vm659, %v636, 0
        %v679 = vsel %vm659, %v637, 0
        %v682 = vsel %vm659, %v638, 0
        %v685 = vsel %vm659, %v639, 0
        %v688 = vsel %vm659, %v640, 0
        %v691 = vsel %vm659, %v641, 0
        %v694 = vsel %vm659, %v642, 0
        %v697 = vsel %vm659, %v643, 0
        %v700 = vsel %vm659, %v644, 0
        %v703 = vsel %vm659, %v645, 0
        %v706 = vsel %vm659, %v646, 0
        %708 = vmatprep.subr.bf16.mxu0 0
        %709 = vmatpush1.bf16.msra.mxu0 0
        %710 = vmatprep.subr.bf16.mxu0 0
        %711 = vmatpush1.bf16.msra.mxu0 0
        %712 = vmatprep.subr.bf16.mxu0 0
        %713 = vmatpush1.bf16.msra.mxu0 0
        %714 = vmatprep.subr.bf16.mxu0 0
        %715 = vmatpush1.bf16.msra.mxu0 0
        %716 = vmatprep.subr.bf16.mxu0 0
        %717 = vmatpush1.bf16.msra.mxu0 0
        %718 = vmatprep.subr.bf16.mxu0 0
        %719 = vmatpush1.bf16.msra.mxu0 0
        %720 = vmatprep.subr.bf16.mxu0 0
        %721 = vmatpush1.bf16.msra.mxu0 %v656
        %722 = vmatprep.subr.bf16.mxu0 0
        %723 = vmatpush1.bf16.msra.mxu0 %v655
        %724 = vmatprep.subr.bf16.mxu0 0
        %725 = vmatpush2.bf16.msra.mxu0 0
        %726 = vmatprep.subr.bf16.mxu0 0
        %727 = vmatpush2.bf16.msra.mxu0 0
        %728 = vmatprep.subr.bf16.mxu0 0
        %729 = vmatpush2.bf16.msra.mxu0 0
        %730 = vmatprep.subr.bf16.mxu0 0
        %731 = vmatpush2.bf16.msra.mxu0 0
        %732 = vmatprep.subr.bf16.mxu0 0
        %733 = vmatpush2.bf16.msra.mxu0 0
        %734 = vmatprep.subr.bf16.mxu0 0
        %735 = vmatpush2.bf16.msra.mxu0 0
        %736 = vmatprep.subr.bf16.mxu0 0
        %737 = vmatpush2.bf16.msra.mxu0 0
        %738 = vmatprep.subr.bf16.mxu0 0
        %739 = vmatpush2.bf16.msra.mxu0 0
        %740 = vmatprep.mubr.bf16.mxu0 0
        %741 = vmatmul.mubr.bf16.gmra.mxu0 %v661
        %v742 = vpop.f32.mrf.mxu0
        %v743 = vadd.f32 0.0, %v742
        %v744 = vpop.f32.mrf.mxu0
        %v745 = vpop.f32.mrf.mxu0
        %v746 = vadd.f32 0.0, %v745
        %v747 = vpop.f32.mrf.mxu0
        %748 = vmatprep.mubr.bf16.mxu0 0
        %749 = vmatmul.mubr.bf16.gmra.mxu0 %v664
        %v750 = vpop.f32.mrf.mxu0
        %v751 = vadd.f32 0.0, %v750
        %v752 = vpop.f32.mrf.mxu0
        %v753 = vpop.f32.mrf.mxu0
        %v754 = vadd.f32 0.0, %v753
        %v755 = vpop.f32.mrf.mxu0
        %756 = vmatprep.mubr.bf16.mxu0 0
        %757 = vmatmul.mubr.bf16.gmra.mxu0 %v667
        %v758 = vpop.f32.mrf.mxu0
        %v759 = vadd.f32 0.0, %v758
        %v760 = vpop.f32.mrf.mxu0
        %v761 = vpop.f32.mrf.mxu0
        %v762 = vadd.f32 0.0, %v761
        %v763 = vpop.f32.mrf.mxu0
        %764 = vmatprep.mubr.bf16.mxu0 0
        %765 = vmatmul.mubr.bf16.gmra.mxu0 %v670
        %v766 = vpop.f32.mrf.mxu0
        %v767 = vadd.f32 0.0, %v766
        %v768 = vpop.f32.mrf.mxu0
        %v769 = vpop.f32.mrf.mxu0
        %v770 = vadd.f32 0.0, %v769
        %v771 = vpop.f32.mrf.mxu0
        %772 = vmatprep.mubr.bf16.mxu0 0
        %773 = vmatmul.mubr.bf16.gmra.mxu0 %v673
        %v774 = vpop.f32.mrf.mxu0
        %v775 = vadd.f32 0.0, %v774
        %v776 = vpop.f32.mrf.mxu0
        %v777 = vpop.f32.mrf.mxu0
        %v778 = vadd.f32 0.0, %v777
        %v779 = vpop.f32.mrf.mxu0
        %780 = vmatprep.mubr.bf16.mxu0 0
        %781 = vmatmul.mubr.bf16.gmra.mxu0 %v676
        %v782 = vpop.f32.mrf.mxu0
        %v783 = vadd.f32 0.0, %v782
        %v784 = vpop.f32.mrf.mxu0
        %v785 = vpop.f32.mrf.mxu0
        %v786 = vadd.f32 0.0, %v785
        %v787 = vpop.f32.mrf.mxu0
        %788 = vmatprep.mubr.bf16.mxu0 0
        %789 = vmatmul.mubr.bf16.gmra.mxu0 %v679
        %v790 = vpop.f32.mrf.mxu0
        %v791 = vadd.f32 0.0, %v790
        %v792 = vpop.f32.mrf.mxu0
        %v793 = vpop.f32.mrf.mxu0
        %v794 = vadd.f32 0.0, %v793
        %v795 = vpop.f32.mrf.mxu0
        %796 = vmatprep.mubr.bf16.mxu0 0
        %797 = vmatmul.mubr.bf16.gmra.mxu0 %v682
        %v798 = vpop.f32.mrf.mxu0
        %v799 = vadd.f32 0.0, %v798
        %v800 = vpop.f32.mrf.mxu0
        %v801 = vpop.f32.mrf.mxu0
        %v802 = vadd.f32 0.0, %v801
        %v803 = vpop.f32.mrf.mxu0
        %804 = vmatprep.mubr.bf16.mxu0 0
        %805 = vmatmul.mubr.bf16.gmra.mxu0 %v685
        %v806 = vpop.f32.mrf.mxu0
        %v807 = vadd.f32 0.0, %v806
        %v808 = vpop.f32.mrf.mxu0
        %v809 = vpop.f32.mrf.mxu0
        %v810 = vadd.f32 0.0, %v809
        %v811 = vpop.f32.mrf.mxu0
        %812 = vmatprep.mubr.bf16.mxu0 0
        %813 = vmatmul.mubr.bf16.gmra.mxu0 %v688
        %v814 = vpop.f32.mrf.mxu0
        %v815 = vadd.f32 0.0, %v814
        %v816 = vpop.f32.mrf.mxu0
        %v817 = vpop.f32.mrf.mxu0
        %v818 = vadd.f32 0.0, %v817
        %v819 = vpop.f32.mrf.mxu0
        %820 = vmatprep.mubr.bf16.mxu0 0
        %821 = vmatmul.mubr.bf16.gmra.mxu0 %v691
        %v822 = vpop.f32.mrf.mxu0
        %v823 = vadd.f32 0.0, %v822
        %v824 = vpop.f32.mrf.mxu0
        %v825 = vpop.f32.mrf.mxu0
        %v826 = vadd.f32 0.0, %v825
        %v827 = vpop.f32.mrf.mxu0
        %828 = vmatprep.mubr.bf16.mxu0 0
        %829 = vmatmul.mubr.bf16.gmra.mxu0 %v694
        %v830 = vpop.f32.mrf.mxu0
        %v831 = vadd.f32 0.0, %v830
        %v832 = vpop.f32.mrf.mxu0
        %v833 = vpop.f32.mrf.mxu0
        %v834 = vadd.f32 0.0, %v833
        %v835 = vpop.f32.mrf.mxu0
        %836 = vmatprep.mubr.bf16.mxu0 0
        %837 = vmatmul.mubr.bf16.gmra.mxu0 %v697
        %v838 = vpop.f32.mrf.mxu0
        %v839 = vadd.f32 0.0, %v838
        %v840 = vpop.f32.mrf.mxu0
        %v841 = vpop.f32.mrf.mxu0
        %v842 = vadd.f32 0.0, %v841
        %v843 = vpop.f32.mrf.mxu0
        %844 = vmatprep.mubr.bf16.mxu0 0
        %845 = vmatmul.mubr.bf16.gmra.mxu0 %v700
        %v846 = vpop.f32.mrf.mxu0
        %v847 = vadd.f32 0.0, %v846
        %v848 = vpop.f32.mrf.mxu0
        %v849 = vpop.f32.mrf.mxu0
        %v850 = vadd.f32 0.0, %v849
        %v851 = vpop.f32.mrf.mxu0
        %852 = vmatprep.mubr.bf16.mxu0 0
        %853 = vmatmul.mubr.bf16.gmra.mxu0 %v703
        %v854 = vpop.f32.mrf.mxu0
        %v855 = vadd.f32 0.0, %v854
        %v856 = vpop.f32.mrf.mxu0
        %v857 = vpop.f32.mrf.mxu0
        %v858 = vadd.f32 0.0, %v857
        %v859 = vpop.f32.mrf.mxu0
        %860 = vmatprep.mubr.bf16.mxu0 0
        %861 = vmatmul.mubr.bf16.gmra.mxu0 %v706
        %v862 = vpop.f32.mrf.mxu0
        %v863 = vadd.f32 0.0, %v862
        %v864 = vpop.f32.mrf.mxu0
        %v865 = vpop.f32.mrf.mxu0
        %v866 = vadd.f32 0.0, %v865
        %v867 = vpop.f32.mrf.mxu0
        %868 = vdwg.mxu0
        %v869 = vld [vmem:[%s4] sm:$0xf]
        %v870 = vld [vmem:[%s4 + $0x4] sm:$0xf]
        %v871 = vld [vmem:[%s4 + $0x8] sm:$0xf]
        %v872 = vld [vmem:[%s4 + $0xc] sm:$0xf]
        %v905 = vunpack.c.l.b16 %v467
        %v906 = vunpack.c.l.b16 %v468
        %v907 = vunpack.c.l.b16 %v469
        %v908 = vunpack.c.l.b16 %v470
        %v909 = vunpack.c.l.b16 %v471
        %v910 = vunpack.c.l.b16 %v472
        %v911 = vunpack.c.l.b16 %v473
        %v912 = vunpack.c.l.b16 %v474
        %v913 = vunpack.c.l.b16 %v475
        %v914 = vunpack.c.l.b16 %v476
        %v915 = vunpack.c.l.b16 %v477
        %v916 = vunpack.c.l.b16 %v478
        %v917 = vunpack.c.l.b16 %v479
        %v918 = vunpack.c.l.b16 %v480
        %v919 = vunpack.c.l.b16 %v481
        %v920 = vunpack.c.l.b16 %v482
        %v921 = vunpack.c.l.b16 %v483
        %v922 = vunpack.c.l.b16 %v484
        %v923 = vunpack.c.l.b16 %v485
        %v924 = vunpack.c.l.b16 %v486
        %v925 = vunpack.c.l.b16 %v487
        %v926 = vunpack.c.l.b16 %v488
        %v927 = vunpack.c.l.b16 %v489
        %v928 = vunpack.c.l.b16 %v490
        %v929 = vunpack.c.l.b16 %v491
        %v930 = vunpack.c.l.b16 %v492
        %v931 = vunpack.c.l.b16 %v493
        %v932 = vunpack.c.l.b16 %v494
        %v933 = vunpack.c.l.b16 %v495
        %v934 = vunpack.c.l.b16 %v496
        %v935 = vunpack.c.l.b16 %v497
        %v936 = vunpack.c.l.b16 %v498
        %v937 = vpack.c.b16 %v906, %v905
        %v938 = vpack.c.b16 %v908, %v907
        %v939 = vpack.c.b16 %v910, %v909
        %v940 = vpack.c.b16 %v912, %v911
        %v941 = vpack.c.b16 %v914, %v913
        %v942 = vpack.c.b16 %v916, %v915
        %v943 = vpack.c.b16 %v918, %v917
        %v944 = vpack.c.b16 %v920, %v919
        %v945 = vpack.c.b16 %v922, %v921
        %v946 = vpack.c.b16 %v924, %v923
        %v947 = vpack.c.b16 %v926, %v925
        %v948 = vpack.c.b16 %v928, %v927
        %v949 = vpack.c.b16 %v930, %v929
        %v950 = vpack.c.b16 %v932, %v931
        %v951 = vpack.c.b16 %v934, %v933
        %v952 = vpack.c.b16 %v936, %v935
        %v957 = vunpack.c.l.b16 %v869
        %v958 = vunpack.c.l.b16 %v870
        %v959 = vunpack.c.l.b16 %v871
        %v960 = vunpack.c.l.b16 %v872
        %v961 = vpack.c.b16 %v958, %v957
        %v962 = vpack.c.b16 %v960, %v959
        %v966 = vsel %vm659, %v937, 0
        %v969 = vsel %vm659, %v938, 0
        %v972 = vsel %vm659, %v939, 0
        %v975 = vsel %vm659, %v940, 0
        %v978 = vsel %vm659, %v941, 0
        %v981 = vsel %vm659, %v942, 0
        %v984 = vsel %vm659, %v943, 0
        %v987 = vsel %vm659, %v944, 0
        %v990 = vsel %vm659, %v945, 0
        %v993 = vsel %vm659, %v946, 0
        %v996 = vsel %vm659, %v947, 0
        %v999 = vsel %vm659, %v948, 0
        %v1002 = vsel %vm659, %v949, 0
        %v1005 = vsel %vm659, %v950, 0
        %v1008 = vsel %vm659, %v951, 0
        %v1011 = vsel %vm659, %v952, 0
        %1013 = vmatprep.subr.bf16.mxu0 0
        %1014 = vmatpush1.bf16.msra.mxu0 0
        %1015 = vmatprep.subr.bf16.mxu0 0
        %1016 = vmatpush1.bf16.msra.mxu0 0
        %1017 = vmatprep.subr.bf16.mxu0 0
        %1018 = vmatpush1.bf16.msra.mxu0 0
        %1019 = vmatprep.subr.bf16.mxu0 0
        %1020 = vmatpush1.bf16.msra.mxu0 0
        %1021 = vmatprep.subr.bf16.mxu0 0
        %1022 = vmatpush1.bf16.msra.mxu0 0
        %1023 = vmatprep.subr.bf16.mxu0 0
        %1024 = vmatpush1.bf16.msra.mxu0 0
        %1025 = vmatprep.subr.bf16.mxu0 0
        %1026 = vmatpush1.bf16.msra.mxu0 %v962
        %1027 = vmatprep.subr.bf16.mxu0 0
        %1028 = vmatpush1.bf16.msra.mxu0 %v961
        %1029 = vmatprep.subr.bf16.mxu0 0
        %1030 = vmatpush2.bf16.msra.mxu0 0
        %1031 = vmatprep.subr.bf16.mxu0 0
        %1032 = vmatpush2.bf16.msra.mxu0 0
        %1033 = vmatprep.subr.bf16.mxu0 0
        %1034 = vmatpush2.bf16.msra.mxu0 0
        %1035 = vmatprep.subr.bf16.mxu0 0
        %1036 = vmatpush2.bf16.msra.mxu0 0
        %1037 = vmatprep.subr.bf16.mxu0 0
        %1038 = vmatpush2.bf16.msra.mxu0 0
        %1039 = vmatprep.subr.bf16.mxu0 0
        %1040 = vmatpush2.bf16.msra.mxu0 0
        %1041 = vmatprep.subr.bf16.mxu0 0
        %1042 = vmatpush2.bf16.msra.mxu0 0
        %1043 = vmatprep.subr.bf16.mxu0 0
        %1044 = vmatpush2.bf16.msra.mxu0 0
        %1045 = vmatprep.mubr.bf16.mxu0 0
        %1046 = vmatmul.mubr.bf16.gmra.mxu0 %v966
        %v1047 = vpop.f32.mrf.mxu0
        %v1048 = vadd.f32 %v743, %v1047
        %v1049 = vpop.f32.mrf.mxu0
        %v1050 = vpop.f32.mrf.mxu0
        %v1051 = vadd.f32 %v746, %v1050
        %v1052 = vpop.f32.mrf.mxu0
        %1053 = vmatprep.mubr.bf16.mxu0 0
        %1054 = vmatmul.mubr.bf16.gmra.mxu0 %v969
        %v1055 = vpop.f32.mrf.mxu0
        %v1056 = vadd.f32 %v751, %v1055
        %v1057 = vpop.f32.mrf.mxu0
        %v1058 = vpop.f32.mrf.mxu0
        %v1059 = vadd.f32 %v754, %v1058
        %v1060 = vpop.f32.mrf.mxu0
        %1061 = vmatprep.mubr.bf16.mxu0 0
        %1062 = vmatmul.mubr.bf16.gmra.mxu0 %v972
        %v1063 = vpop.f32.mrf.mxu0
        %v1064 = vadd.f32 %v759, %v1063
        %v1065 = vpop.f32.mrf.mxu0
        %v1066 = vpop.f32.mrf.mxu0
        %v1067 = vadd.f32 %v762, %v1066
        %v1068 = vpop.f32.mrf.mxu0
        %1069 = vmatprep.mubr.bf16.mxu0 0
        %1070 = vmatmul.mubr.bf16.gmra.mxu0 %v975
        %v1071 = vpop.f32.mrf.mxu0
        %v1072 = vadd.f32 %v767, %v1071
        %v1073 = vpop.f32.mrf.mxu0
        %v1074 = vpop.f32.mrf.mxu0
        %v1075 = vadd.f32 %v770, %v1074
        %v1076 = vpop.f32.mrf.mxu0
        %1077 = vmatprep.mubr.bf16.mxu0 0
        %1078 = vmatmul.mubr.bf16.gmra.mxu0 %v978
        %v1079 = vpop.f32.mrf.mxu0
        %v1080 = vadd.f32 %v775, %v1079
        %v1081 = vpop.f32.mrf.mxu0
        %v1082 = vpop.f32.mrf.mxu0
        %v1083 = vadd.f32 %v778, %v1082
        %v1084 = vpop.f32.mrf.mxu0
        %1085 = vmatprep.mubr.bf16.mxu0 0
        %1086 = vmatmul.mubr.bf16.gmra.mxu0 %v981
        %v1087 = vpop.f32.mrf.mxu0
        %v1088 = vadd.f32 %v783, %v1087
        %v1089 = vpop.f32.mrf.mxu0
        %v1090 = vpop.f32.mrf.mxu0
        %v1091 = vadd.f32 %v786, %v1090
        %v1092 = vpop.f32.mrf.mxu0
        %1093 = vmatprep.mubr.bf16.mxu0 0
        %1094 = vmatmul.mubr.bf16.gmra.mxu0 %v984
        %v1095 = vpop.f32.mrf.mxu0
        %v1096 = vadd.f32 %v791, %v1095
        %v1097 = vpop.f32.mrf.mxu0
        %v1098 = vpop.f32.mrf.mxu0
        %v1099 = vadd.f32 %v794, %v1098
        %v1100 = vpop.f32.mrf.mxu0
        %1101 = vmatprep.mubr.bf16.mxu0 0
        %1102 = vmatmul.mubr.bf16.gmra.mxu0 %v987
        %v1103 = vpop.f32.mrf.mxu0
        %v1104 = vadd.f32 %v799, %v1103
        %v1105 = vpop.f32.mrf.mxu0
        %v1106 = vpop.f32.mrf.mxu0
        %v1107 = vadd.f32 %v802, %v1106
        %v1108 = vpop.f32.mrf.mxu0
        %1109 = vmatprep.mubr.bf16.mxu0 0
        %1110 = vmatmul.mubr.bf16.gmra.mxu0 %v990
        %v1111 = vpop.f32.mrf.mxu0
        %v1112 = vadd.f32 %v807, %v1111
        %v1113 = vpop.f32.mrf.mxu0
        %v1114 = vpop.f32.mrf.mxu0
        %v1115 = vadd.f32 %v810, %v1114
        %v1116 = vpop.f32.mrf.mxu0
        %1117 = vmatprep.mubr.bf16.mxu0 0
        %1118 = vmatmul.mubr.bf16.gmra.mxu0 %v993
        %v1119 = vpop.f32.mrf.mxu0
        %v1120 = vadd.f32 %v815, %v1119
        %v1121 = vpop.f32.mrf.mxu0
        %v1122 = vpop.f32.mrf.mxu0
        %v1123 = vadd.f32 %v818, %v1122
        %v1124 = vpop.f32.mrf.mxu0
        %1125 = vmatprep.mubr.bf16.mxu0 0
        %1126 = vmatmul.mubr.bf16.gmra.mxu0 %v996
        %v1127 = vpop.f32.mrf.mxu0
        %v1128 = vadd.f32 %v823, %v1127
        %v1129 = vpop.f32.mrf.mxu0
        %v1130 = vpop.f32.mrf.mxu0
        %v1131 = vadd.f32 %v826, %v1130
        %v1132 = vpop.f32.mrf.mxu0
        %1133 = vmatprep.mubr.bf16.mxu0 0
        %1134 = vmatmul.mubr.bf16.gmra.mxu0 %v999
        %v1135 = vpop.f32.mrf.mxu0
        %v1136 = vadd.f32 %v831, %v1135
        %v1137 = vpop.f32.mrf.mxu0
        %v1138 = vpop.f32.mrf.mxu0
        %v1139 = vadd.f32 %v834, %v1138
        %v1140 = vpop.f32.mrf.mxu0
        %1141 = vmatprep.mubr.bf16.mxu0 0
        %1142 = vmatmul.mubr.bf16.gmra.mxu0 %v1002
        %v1143 = vpop.f32.mrf.mxu0
        %v1144 = vadd.f32 %v839, %v1143
        %v1145 = vpop.f32.mrf.mxu0
        %v1146 = vpop.f32.mrf.mxu0
        %v1147 = vadd.f32 %v842, %v1146
        %v1148 = vpop.f32.mrf.mxu0
        %1149 = vmatprep.mubr.bf16.mxu0 0
        %1150 = vmatmul.mubr.bf16.gmra.mxu0 %v1005
        %v1151 = vpop.f32.mrf.mxu0
        %v1152 = vadd.f32 %v847, %v1151
        %v1153 = vpop.f32.mrf.mxu0
        %v1154 = vpop.f32.mrf.mxu0
        %v1155 = vadd.f32 %v850, %v1154
        %v1156 = vpop.f32.mrf.mxu0
        %1157 = vmatprep.mubr.bf16.mxu0 0
        %1158 = vmatmul.mubr.bf16.gmra.mxu0 %v1008
        %v1159 = vpop.f32.mrf.mxu0
        %v1160 = vadd.f32 %v855, %v1159
        %v1161 = vpop.f32.mrf.mxu0
        %v1162 = vpop.f32.mrf.mxu0
        %v1163 = vadd.f32 %v858, %v1162
        %v1164 = vpop.f32.mrf.mxu0
        %1165 = vmatprep.mubr.bf16.mxu0 0
        %1166 = vmatmul.mubr.bf16.gmra.mxu0 %v1011
        %v1167 = vpop.f32.mrf.mxu0
        %v1168 = vadd.f32 %v863, %v1167
        %v1169 = vpop.f32.mrf.mxu0
        %v1170 = vpop.f32.mrf.mxu0
        %v1171 = vadd.f32 %v866, %v1170
        %v1172 = vpop.f32.mrf.mxu0
        %1173 = vdwg.mxu0
        %v1174 = vld [vmem:[%s6] sm:$0x1]
        %v1176 = vlaneseq
        %v1177 = vshrl.u32 %v1176, 7
        %v1178 = vsub.s32 0, %v1177
        %v1179 = vrot.slane %v1174, %v1178
        %v1181 = vadd.f32 %v1048, %v1179
        %v1182 = vadd.f32 %v1051, %v1179
        %v1183 = vadd.f32 %v1056, %v1179
        %v1184 = vadd.f32 %v1059, %v1179
        %v1185 = vadd.f32 %v1064, %v1179
        %v1186 = vadd.f32 %v1067, %v1179
        %v1187 = vadd.f32 %v1072, %v1179
        %v1188 = vadd.f32 %v1075, %v1179
        %v1189 = vadd.f32 %v1080, %v1179
        %v1190 = vadd.f32 %v1083, %v1179
        %v1191 = vadd.f32 %v1088, %v1179
        %v1192 = vadd.f32 %v1091, %v1179
        %v1193 = vadd.f32 %v1096, %v1179
        %v1194 = vadd.f32 %v1099, %v1179
        %v1195 = vadd.f32 %v1104, %v1179
        %v1196 = vadd.f32 %v1107, %v1179
        %v1197 = vadd.f32 %v1112, %v1179
        %v1198 = vadd.f32 %v1115, %v1179
        %v1199 = vadd.f32 %v1120, %v1179
        %v1200 = vadd.f32 %v1123, %v1179
        %v1201 = vadd.f32 %v1128, %v1179
        %v1202 = vadd.f32 %v1131, %v1179
        %v1203 = vadd.f32 %v1136, %v1179
        %v1204 = vadd.f32 %v1139, %v1179
        %v1205 = vadd.f32 %v1144, %v1179
        %v1206 = vadd.f32 %v1147, %v1179
        %v1207 = vadd.f32 %v1152, %v1179
        %v1208 = vadd.f32 %v1155, %v1179
        %v1209 = vadd.f32 %v1160, %v1179
        %v1210 = vadd.f32 %v1163, %v1179
        %v1211 = vadd.f32 %v1168, %v1179
        %v1212 = vadd.f32 %v1171, %v1179
        %s1213 = scalar_lea.vmem %s4, 16
        %v1214 = vld [vmem:[%s1213] sm:$0xf]
        %v1215 = vld [vmem:[%s1213 + $0x4] sm:$0xf]
        %v1216 = vld [vmem:[%s1213 + $0x8] sm:$0xf]
        %v1217 = vld [vmem:[%s1213 + $0xc] sm:$0xf]
        %v1250 = vunpack.c.l.b16 %v499
        %v1251 = vunpack.c.l.b16 %v500
        %v1252 = vunpack.c.l.b16 %v501
        %v1253 = vunpack.c.l.b16 %v502
        %v1254 = vunpack.c.l.b16 %v503
        %v1255 = vunpack.c.l.b16 %v504
        %v1256 = vunpack.c.l.b16 %v505
        %v1257 = vunpack.c.l.b16 %v506
        %v1258 = vunpack.c.l.b16 %v507
        %v1259 = vunpack.c.l.b16 %v508
        %v1260 = vunpack.c.l.b16 %v509
        %v1261 = vunpack.c.l.b16 %v510
        %v1262 = vunpack.c.l.b16 %v511
        %v1263 = vunpack.c.l.b16 %v512
        %v1264 = vunpack.c.l.b16 %v513
        %v1265 = vunpack.c.l.b16 %v514
        %v1266 = vunpack.c.l.b16 %v515
        %v1267 = vunpack.c.l.b16 %v516
        %v1268 = vunpack.c.l.b16 %v517
        %v1269 = vunpack.c.l.b16 %v518
        %v1270 = vunpack.c.l.b16 %v519
        %v1271 = vunpack.c.l.b16 %v520
        %v1272 = vunpack.c.l.b16 %v521
        %v1273 = vunpack.c.l.b16 %v522
        %v1274 = vunpack.c.l.b16 %v523
        %v1275 = vunpack.c.l.b16 %v524
        %v1276 = vunpack.c.l.b16 %v525
        %v1277 = vunpack.c.l.b16 %v526
        %v1278 = vunpack.c.l.b16 %v527
        %v1279 = vunpack.c.l.b16 %v528
        %v1280 = vunpack.c.l.b16 %v529
        %v1281 = vunpack.c.l.b16 %v530
        %v1282 = vpack.c.b16 %v1251, %v1250
        %v1283 = vpack.c.b16 %v1253, %v1252
        %v1284 = vpack.c.b16 %v1255, %v1254
        %v1285 = vpack.c.b16 %v1257, %v1256
        %v1286 = vpack.c.b16 %v1259, %v1258
        %v1287 = vpack.c.b16 %v1261, %v1260
        %v1288 = vpack.c.b16 %v1263, %v1262
        %v1289 = vpack.c.b16 %v1265, %v1264
        %v1290 = vpack.c.b16 %v1267, %v1266
        %v1291 = vpack.c.b16 %v1269, %v1268
        %v1292 = vpack.c.b16 %v1271, %v1270
        %v1293 = vpack.c.b16 %v1273, %v1272
        %v1294 = vpack.c.b16 %v1275, %v1274
        %v1295 = vpack.c.b16 %v1277, %v1276
        %v1296 = vpack.c.b16 %v1279, %v1278
        %v1297 = vpack.c.b16 %v1281, %v1280
        %v1302 = vunpack.c.l.b16 %v1214
        %v1303 = vunpack.c.l.b16 %v1215
        %v1304 = vunpack.c.l.b16 %v1216
        %v1305 = vunpack.c.l.b16 %v1217
        %v1306 = vpack.c.b16 %v1303, %v1302
        %v1307 = vpack.c.b16 %v1305, %v1304
        %1342 = vrot.lane.b32.xlu0 %v743, 96
        %v1343 = vpop.permute.xlu0 %1342
        %1344 = vrot.lane.b32.xlu0 %v746, 96
        %v1345 = vpop.permute.xlu0 %1344
        %1346 = vrot.lane.b32.xlu0 %v751, 96
        %v1347 = vpop.permute.xlu0 %1346
        %1348 = vrot.lane.b32.xlu0 %v754, 96
        %v1349 = vpop.permute.xlu0 %1348
        %1350 = vrot.lane.b32.xlu0 %v759, 96
        %v1351 = vpop.permute.xlu0 %1350
        %1352 = vrot.lane.b32.xlu0 %v762, 96
        %v1353 = vpop.permute.xlu0 %1352
        %1354 = vrot.lane.b32.xlu0 %v767, 96
        %v1355 = vpop.permute.xlu0 %1354
        %1356 = vrot.lane.b32.xlu0 %v770, 96
        %v1357 = vpop.permute.xlu0 %1356
        %1358 = vrot.lane.b32.xlu0 %v775, 96
        %v1359 = vpop.permute.xlu0 %1358
        %1360 = vrot.lane.b32.xlu0 %v778, 96
        %v1361 = vpop.permute.xlu0 %1360
        %1362 = vrot.lane.b32.xlu0 %v783, 96
        %v1363 = vpop.permute.xlu0 %1362
        %1364 = vrot.lane.b32.xlu0 %v786, 96
        %v1365 = vpop.permute.xlu0 %1364
        %1366 = vrot.lane.b32.xlu0 %v791, 96
        %v1367 = vpop.permute.xlu0 %1366
        %1368 = vrot.lane.b32.xlu0 %v794, 96
        %v1369 = vpop.permute.xlu0 %1368
        %1370 = vrot.lane.b32.xlu0 %v799, 96
        %v1371 = vpop.permute.xlu0 %1370
        %1372 = vrot.lane.b32.xlu0 %v802, 96
        %v1373 = vpop.permute.xlu0 %1372
        %1374 = vrot.lane.b32.xlu0 %v807, 96
        %v1375 = vpop.permute.xlu0 %1374
        %1376 = vrot.lane.b32.xlu0 %v810, 96
        %v1377 = vpop.permute.xlu0 %1376
        %1378 = vrot.lane.b32.xlu0 %v815, 96
        %v1379 = vpop.permute.xlu0 %1378
        %1380 = vrot.lane.b32.xlu0 %v818, 96
        %v1381 = vpop.permute.xlu0 %1380
        %1382 = vrot.lane.b32.xlu0 %v823, 96
        %v1383 = vpop.permute.xlu0 %1382
        %1384 = vrot.lane.b32.xlu0 %v826, 96
        %v1385 = vpop.permute.xlu0 %1384
        %1386 = vrot.lane.b32.xlu0 %v831, 96
        %v1387 = vpop.permute.xlu0 %1386
        %1388 = vrot.lane.b32.xlu0 %v834, 96
        %v1389 = vpop.permute.xlu0 %1388
        %1390 = vrot.lane.b32.xlu0 %v839, 96
        %v1391 = vpop.permute.xlu0 %1390
        %1392 = vrot.lane.b32.xlu0 %v842, 96
        %v1393 = vpop.permute.xlu0 %1392
        %1394 = vrot.lane.b32.xlu0 %v847, 96
        %v1395 = vpop.permute.xlu0 %1394
        %1396 = vrot.lane.b32.xlu0 %v850, 96
        %v1397 = vpop.permute.xlu0 %1396
        %1398 = vrot.lane.b32.xlu0 %v855, 96
        %v1399 = vpop.permute.xlu0 %1398
        %1400 = vrot.lane.b32.xlu0 %v858, 96
        %v1401 = vpop.permute.xlu0 %1400
        %1402 = vrot.lane.b32.xlu0 %v863, 96
        %v1403 = vpop.permute.xlu0 %1402
        %1404 = vrot.lane.b32.xlu0 %v866, 96
        %v1405 = vpop.permute.xlu0 %1404
        %v1439 = vsel %vm659, %v1282, 0
        %v1442 = vsel %vm659, %v1283, 0
        %v1445 = vsel %vm659, %v1284, 0
        %v1448 = vsel %vm659, %v1285, 0
        %v1451 = vsel %vm659, %v1286, 0
        %v1454 = vsel %vm659, %v1287, 0
        %v1457 = vsel %vm659, %v1288, 0
        %v1460 = vsel %vm659, %v1289, 0
        %v1463 = vsel %vm659, %v1290, 0
        %v1466 = vsel %vm659, %v1291, 0
        %v1469 = vsel %vm659, %v1292, 0
        %v1472 = vsel %vm659, %v1293, 0
        %v1475 = vsel %vm659, %v1294, 0
        %v1478 = vsel %vm659, %v1295, 0
        %v1481 = vsel %vm659, %v1296, 0
        %v1484 = vsel %vm659, %v1297, 0
        %1486 = vmatprep.subr.bf16.mxu0 0
        %1487 = vmatpush1.bf16.msra.mxu0 0
        %1488 = vmatprep.subr.bf16.mxu0 0
        %1489 = vmatpush1.bf16.msra.mxu0 0
        %1490 = vmatprep.subr.bf16.mxu0 0
        %1491 = vmatpush1.bf16.msra.mxu0 0
        %1492 = vmatprep.subr.bf16.mxu0 0
        %1493 = vmatpush1.bf16.msra.mxu0 0
        %1494 = vmatprep.subr.bf16.mxu0 0
        %1495 = vmatpush1.bf16.msra.mxu0 0
        %1496 = vmatprep.subr.bf16.mxu0 0
        %1497 = vmatpush1.bf16.msra.mxu0 0
        %1498 = vmatprep.subr.bf16.mxu0 0
        %1499 = vmatpush1.bf16.msra.mxu0 %v1307
        %1500 = vmatprep.subr.bf16.mxu0 0
        %1501 = vmatpush1.bf16.msra.mxu0 %v1306
        %1502 = vmatprep.subr.bf16.mxu0 0
        %1503 = vmatpush2.bf16.msra.mxu0 0
        %1504 = vmatprep.subr.bf16.mxu0 0
        %1505 = vmatpush2.bf16.msra.mxu0 0
        %1506 = vmatprep.subr.bf16.mxu0 0
        %1507 = vmatpush2.bf16.msra.mxu0 0
        %1508 = vmatprep.subr.bf16.mxu0 0
        %1509 = vmatpush2.bf16.msra.mxu0 0
        %1510 = vmatprep.subr.bf16.mxu0 0
        %1511 = vmatpush2.bf16.msra.mxu0 0
        %1512 = vmatprep.subr.bf16.mxu0 0
        %1513 = vmatpush2.bf16.msra.mxu0 0
        %1514 = vmatprep.subr.bf16.mxu0 0
        %1515 = vmatpush2.bf16.msra.mxu0 0
        %1516 = vmatprep.subr.bf16.mxu0 0
        %1517 = vmatpush2.bf16.msra.mxu0 0
        %1518 = vmatprep.mubr.bf16.mxu0 0
        %1519 = vmatmul.mubr.bf16.gmra.mxu0 %v1439
        %v1520 = vpop.f32.mrf.mxu0
        %v1521 = vadd.f32 %v1343, %v1520
        %v1522 = vpop.f32.mrf.mxu0
        %v1523 = vpop.f32.mrf.mxu0
        %v1524 = vadd.f32 %v1345, %v1523
        %v1525 = vpop.f32.mrf.mxu0
        %1526 = vmatprep.mubr.bf16.mxu0 0
        %1527 = vmatmul.mubr.bf16.gmra.mxu0 %v1442
        %v1528 = vpop.f32.mrf.mxu0
        %v1529 = vadd.f32 %v1347, %v1528
        %v1530 = vpop.f32.mrf.mxu0
        %v1531 = vpop.f32.mrf.mxu0
        %v1532 = vadd.f32 %v1349, %v1531
        %v1533 = vpop.f32.mrf.mxu0
        %1534 = vmatprep.mubr.bf16.mxu0 0
        %1535 = vmatmul.mubr.bf16.gmra.mxu0 %v1445
        %v1536 = vpop.f32.mrf.mxu0
        %v1537 = vadd.f32 %v1351, %v1536
        %v1538 = vpop.f32.mrf.mxu0
        %v1539 = vpop.f32.mrf.mxu0
        %v1540 = vadd.f32 %v1353, %v1539
        %v1541 = vpop.f32.mrf.mxu0
        %1542 = vmatprep.mubr.bf16.mxu0 0
        %1543 = vmatmul.mubr.bf16.gmra.mxu0 %v1448
        %v1544 = vpop.f32.mrf.mxu0
        %v1545 = vadd.f32 %v1355, %v1544
        %v1546 = vpop.f32.mrf.mxu0
        %v1547 = vpop.f32.mrf.mxu0
        %v1548 = vadd.f32 %v1357, %v1547
        %v1549 = vpop.f32.mrf.mxu0
        %1550 = vmatprep.mubr.bf16.mxu0 0
        %1551 = vmatmul.mubr.bf16.gmra.mxu0 %v1451
        %v1552 = vpop.f32.mrf.mxu0
        %v1553 = vadd.f32 %v1359, %v1552
        %v1554 = vpop.f32.mrf.mxu0
        %v1555 = vpop.f32.mrf.mxu0
        %v1556 = vadd.f32 %v1361, %v1555
        %v1557 = vpop.f32.mrf.mxu0
        %1558 = vmatprep.mubr.bf16.mxu0 0
        %1559 = vmatmul.mubr.bf16.gmra.mxu0 %v1454
        %v1560 = vpop.f32.mrf.mxu0
        %v1561 = vadd.f32 %v1363, %v1560
        %v1562 = vpop.f32.mrf.mxu0
        %v1563 = vpop.f32.mrf.mxu0
        %v1564 = vadd.f32 %v1365, %v1563
        %v1565 = vpop.f32.mrf.mxu0
        %1566 = vmatprep.mubr.bf16.mxu0 0
        %1567 = vmatmul.mubr.bf16.gmra.mxu0 %v1457
        %v1568 = vpop.f32.mrf.mxu0
        %v1569 = vadd.f32 %v1367, %v1568
        %v1570 = vpop.f32.mrf.mxu0
        %v1571 = vpop.f32.mrf.mxu0
        %v1572 = vadd.f32 %v1369, %v1571
        %v1573 = vpop.f32.mrf.mxu0
        %1574 = vmatprep.mubr.bf16.mxu0 0
        %1575 = vmatmul.mubr.bf16.gmra.mxu0 %v1460
        %v1576 = vpop.f32.mrf.mxu0
        %v1577 = vadd.f32 %v1371, %v1576
        %v1578 = vpop.f32.mrf.mxu0
        %v1579 = vpop.f32.mrf.mxu0
        %v1580 = vadd.f32 %v1373, %v1579
        %v1581 = vpop.f32.mrf.mxu0
        %1582 = vmatprep.mubr.bf16.mxu0 0
        %1583 = vmatmul.mubr.bf16.gmra.mxu0 %v1463
        %v1584 = vpop.f32.mrf.mxu0
        %v1585 = vadd.f32 %v1375, %v1584
        %v1586 = vpop.f32.mrf.mxu0
        %v1587 = vpop.f32.mrf.mxu0
        %v1588 = vadd.f32 %v1377, %v1587
        %v1589 = vpop.f32.mrf.mxu0
        %1590 = vmatprep.mubr.bf16.mxu0 0
        %1591 = vmatmul.mubr.bf16.gmra.mxu0 %v1466
        %v1592 = vpop.f32.mrf.mxu0
        %v1593 = vadd.f32 %v1379, %v1592
        %v1594 = vpop.f32.mrf.mxu0
        %v1595 = vpop.f32.mrf.mxu0
        %v1596 = vadd.f32 %v1381, %v1595
        %v1597 = vpop.f32.mrf.mxu0
        %1598 = vmatprep.mubr.bf16.mxu0 0
        %1599 = vmatmul.mubr.bf16.gmra.mxu0 %v1469
        %v1600 = vpop.f32.mrf.mxu0
        %v1601 = vadd.f32 %v1383, %v1600
        %v1602 = vpop.f32.mrf.mxu0
        %v1603 = vpop.f32.mrf.mxu0
        %v1604 = vadd.f32 %v1385, %v1603
        %v1605 = vpop.f32.mrf.mxu0
        %1606 = vmatprep.mubr.bf16.mxu0 0
        %1607 = vmatmul.mubr.bf16.gmra.mxu0 %v1472
        %v1608 = vpop.f32.mrf.mxu0
        %v1609 = vadd.f32 %v1387, %v1608
        %v1610 = vpop.f32.mrf.mxu0
        %v1611 = vpop.f32.mrf.mxu0
        %v1612 = vadd.f32 %v1389, %v1611
        %v1613 = vpop.f32.mrf.mxu0
        %1614 = vmatprep.mubr.bf16.mxu0 0
        %1615 = vmatmul.mubr.bf16.gmra.mxu0 %v1475
        %v1616 = vpop.f32.mrf.mxu0
        %v1617 = vadd.f32 %v1391, %v1616
        %v1618 = vpop.f32.mrf.mxu0
        %v1619 = vpop.f32.mrf.mxu0
        %v1620 = vadd.f32 %v1393, %v1619
        %v1621 = vpop.f32.mrf.mxu0
        %1622 = vmatprep.mubr.bf16.mxu0 0
        %1623 = vmatmul.mubr.bf16.gmra.mxu0 %v1478
        %v1624 = vpop.f32.mrf.mxu0
        %v1625 = vadd.f32 %v1395, %v1624
        %v1626 = vpop.f32.mrf.mxu0
        %v1627 = vpop.f32.mrf.mxu0
        %v1628 = vadd.f32 %v1397, %v1627
        %v1629 = vpop.f32.mrf.mxu0
        %1630 = vmatprep.mubr.bf16.mxu0 0
        %1631 = vmatmul.mubr.bf16.gmra.mxu0 %v1481
        %v1632 = vpop.f32.mrf.mxu0
        %v1633 = vadd.f32 %v1399, %v1632
        %v1634 = vpop.f32.mrf.mxu0
        %v1635 = vpop.f32.mrf.mxu0
        %v1636 = vadd.f32 %v1401, %v1635
        %v1637 = vpop.f32.mrf.mxu0
        %1638 = vmatprep.mubr.bf16.mxu0 0
        %1639 = vmatmul.mubr.bf16.gmra.mxu0 %v1484
        %v1640 = vpop.f32.mrf.mxu0
        %v1641 = vadd.f32 %v1403, %v1640
        %v1642 = vpop.f32.mrf.mxu0
        %v1643 = vpop.f32.mrf.mxu0
        %v1644 = vadd.f32 %v1405, %v1643
        %v1645 = vpop.f32.mrf.mxu0
        %1646 = vdwg.mxu0
        %s1647 = scalar_lea.vmem %s6, 1
        %v1648 = vld [vmem:[%s1647] sm:$0x1]
        %v1650 = vlaneseq
        %v1651 = vshrl.u32 %v1650, 7
        %v1652 = vsub.s32 0, %v1651
        %v1653 = vrot.slane %v1648, %v1652
        %v1655 = vadd.f32 %v1521, %v1653
        %v1656 = vadd.f32 %v1524, %v1653
        %v1657 = vadd.f32 %v1529, %v1653
        %v1658 = vadd.f32 %v1532, %v1653
        %v1659 = vadd.f32 %v1537, %v1653
        %v1660 = vadd.f32 %v1540, %v1653
        %v1661 = vadd.f32 %v1545, %v1653
        %v1662 = vadd.f32 %v1548, %v1653
        %v1663 = vadd.f32 %v1553, %v1653
        %v1664 = vadd.f32 %v1556, %v1653
        %v1665 = vadd.f32 %v1561, %v1653
        %v1666 = vadd.f32 %v1564, %v1653
        %v1667 = vadd.f32 %v1569, %v1653
        %v1668 = vadd.f32 %v1572, %v1653
        %v1669 = vadd.f32 %v1577, %v1653
        %v1670 = vadd.f32 %v1580, %v1653
        %v1671 = vadd.f32 %v1585, %v1653
        %v1672 = vadd.f32 %v1588, %v1653
        %v1673 = vadd.f32 %v1593, %v1653
        %v1674 = vadd.f32 %v1596, %v1653
        %v1675 = vadd.f32 %v1601, %v1653
        %v1676 = vadd.f32 %v1604, %v1653
        %v1677 = vadd.f32 %v1609, %v1653
        %v1678 = vadd.f32 %v1612, %v1653
        %v1679 = vadd.f32 %v1617, %v1653
        %v1680 = vadd.f32 %v1620, %v1653
        %v1681 = vadd.f32 %v1625, %v1653
        %v1682 = vadd.f32 %v1628, %v1653
        %v1683 = vadd.f32 %v1633, %v1653
        %v1684 = vadd.f32 %v1636, %v1653
        %v1685 = vadd.f32 %v1641, %v1653
        %v1686 = vadd.f32 %v1644, %v1653
        %v1687 = vld [vmem:[%s462] sm:$0xff]
        %v1688 = vld [vmem:[%s462 + $0x8] sm:$0xff]
        %v1689 = vld [vmem:[%s462 + $0x10] sm:$0xff]
        %v1690 = vld [vmem:[%s462 + $0x18] sm:$0xff]
        %v1691 = vld [vmem:[%s462 + $0x20] sm:$0xff]
        %v1692 = vld [vmem:[%s462 + $0x28] sm:$0xff]
        %v1693 = vld [vmem:[%s462 + $0x30] sm:$0xff]
        %v1694 = vld [vmem:[%s462 + $0x38] sm:$0xff]
        %v1695 = vld [vmem:[%s462 + $0x40] sm:$0xff]
        %v1696 = vld [vmem:[%s462 + $0x48] sm:$0xff]
        %v1697 = vld [vmem:[%s462 + $0x50] sm:$0xff]
        %v1698 = vld [vmem:[%s462 + $0x58] sm:$0xff]
        %v1699 = vld [vmem:[%s462 + $0x60] sm:$0xff]
        %v1700 = vld [vmem:[%s462 + $0x68] sm:$0xff]
        %v1701 = vld [vmem:[%s462 + $0x70] sm:$0xff]
        %v1702 = vld [vmem:[%s462 + $0x78] sm:$0xff]
        %v1703 = vld [vmem:[%s462 + $0x80] sm:$0xff]
        %v1704 = vld [vmem:[%s462 + $0x88] sm:$0xff]
        %v1705 = vld [vmem:[%s462 + $0x90] sm:$0xff]
        %v1706 = vld [vmem:[%s462 + $0x98] sm:$0xff]
        %v1707 = vld [vmem:[%s462 + $0xa0] sm:$0xff]
        %v1708 = vld [vmem:[%s462 + $0xa8] sm:$0xff]
        %v1709 = vld [vmem:[%s462 + $0xb0] sm:$0xff]
        %v1710 = vld [vmem:[%s462 + $0xb8] sm:$0xff]
        %v1711 = vld [vmem:[%s462 + $0xc0] sm:$0xff]
        %v1712 = vld [vmem:[%s462 + $0xc8] sm:$0xff]
        %v1713 = vld [vmem:[%s462 + $0xd0] sm:$0xff]
        %v1714 = vld [vmem:[%s462 + $0xd8] sm:$0xff]
        %v1715 = vld [vmem:[%s462 + $0xe0] sm:$0xff]
        %v1716 = vld [vmem:[%s462 + $0xe8] sm:$0xff]
        %v1717 = vld [vmem:[%s462 + $0xf0] sm:$0xff]
        %v1718 = vld [vmem:[%s462 + $0xf8] sm:$0xff]
        %1751 = vrot.lane.b32.xlu0 %v1687, 64
        %v1752 = vpop.permute.xlu0 %1751
        %1753 = vrot.lane.b32.xlu0 %v1688, 64
        %v1754 = vpop.permute.xlu0 %1753
        %1755 = vrot.lane.b32.xlu0 %v1689, 64
        %v1756 = vpop.permute.xlu0 %1755
        %1757 = vrot.lane.b32.xlu0 %v1690, 64
        %v1758 = vpop.permute.xlu0 %1757
        %1759 = vrot.lane.b32.xlu0 %v1691, 64
        %v1760 = vpop.permute.xlu0 %1759
        %1761 = vrot.lane.b32.xlu0 %v1692, 64
        %v1762 = vpop.permute.xlu0 %1761
        %1763 = vrot.lane.b32.xlu0 %v1693, 64
        %v1764 = vpop.permute.xlu0 %1763
        %1765 = vrot.lane.b32.xlu0 %v1694, 64
        %v1766 = vpop.permute.xlu0 %1765
        %1767 = vrot.lane.b32.xlu0 %v1695, 64
        %v1768 = vpop.permute.xlu0 %1767
        %1769 = vrot.lane.b32.xlu0 %v1696, 64
        %v1770 = vpop.permute.xlu0 %1769
        %1771 = vrot.lane.b32.xlu0 %v1697, 64
        %v1772 = vpop.permute.xlu0 %1771
        %1773 = vrot.lane.b32.xlu0 %v1698, 64
        %v1774 = vpop.permute.xlu0 %1773
        %1775 = vrot.lane.b32.xlu0 %v1699, 64
        %v1776 = vpop.permute.xlu0 %1775
        %1777 = vrot.lane.b32.xlu0 %v1700, 64
        %v1778 = vpop.permute.xlu0 %1777
        %1779 = vrot.lane.b32.xlu0 %v1701, 64
        %v1780 = vpop.permute.xlu0 %1779
        %1781 = vrot.lane.b32.xlu0 %v1702, 64
        %v1782 = vpop.permute.xlu0 %1781
        %1783 = vrot.lane.b32.xlu0 %v1703, 64
        %v1784 = vpop.permute.xlu0 %1783
        %1785 = vrot.lane.b32.xlu0 %v1704, 64
        %v1786 = vpop.permute.xlu0 %1785
        %1787 = vrot.lane.b32.xlu0 %v1705, 64
        %v1788 = vpop.permute.xlu0 %1787
        %1789 = vrot.lane.b32.xlu0 %v1706, 64
        %v1790 = vpop.permute.xlu0 %1789
        %1791 = vrot.lane.b32.xlu0 %v1707, 64
        %v1792 = vpop.permute.xlu0 %1791
        %1793 = vrot.lane.b32.xlu0 %v1708, 64
        %v1794 = vpop.permute.xlu0 %1793
        %1795 = vrot.lane.b32.xlu0 %v1709, 64
        %v1796 = vpop.permute.xlu0 %1795
        %1797 = vrot.lane.b32.xlu0 %v1710, 64
        %v1798 = vpop.permute.xlu0 %1797
        %1799 = vrot.lane.b32.xlu0 %v1711, 64
        %v1800 = vpop.permute.xlu0 %1799
        %1801 = vrot.lane.b32.xlu0 %v1712, 64
        %v1802 = vpop.permute.xlu0 %1801
        %1803 = vrot.lane.b32.xlu0 %v1713, 64
        %v1804 = vpop.permute.xlu0 %1803
        %1805 = vrot.lane.b32.xlu0 %v1714, 64
        %v1806 = vpop.permute.xlu0 %1805
        %1807 = vrot.lane.b32.xlu0 %v1715, 64
        %v1808 = vpop.permute.xlu0 %1807
        %1809 = vrot.lane.b32.xlu0 %v1716, 64
        %v1810 = vpop.permute.xlu0 %1809
        %1811 = vrot.lane.b32.xlu0 %v1717, 64
        %v1812 = vpop.permute.xlu0 %1811
        %1813 = vrot.lane.b32.xlu0 %v1718, 64
        %v1814 = vpop.permute.xlu0 %1813
        %v1847 = vadd.f32 %v743, %v1752
        %v1848 = vadd.f32 %v746, %v1754
        %v1849 = vadd.f32 %v751, %v1756
        %v1850 = vadd.f32 %v754, %v1758
        %v1851 = vadd.f32 %v759, %v1760
        %v1852 = vadd.f32 %v762, %v1762
        %v1853 = vadd.f32 %v767, %v1764
        %v1854 = vadd.f32 %v770, %v1766
        %v1855 = vadd.f32 %v775, %v1768
        %v1856 = vadd.f32 %v778, %v1770
        %v1857 = vadd.f32 %v783, %v1772
        %v1858 = vadd.f32 %v786, %v1774
        %v1859 = vadd.f32 %v791, %v1776
        %v1860 = vadd.f32 %v794, %v1778
        %v1861 = vadd.f32 %v799, %v1780
        %v1862 = vadd.f32 %v802, %v1782
        %v1863 = vadd.f32 %v807, %v1784
        %v1864 = vadd.f32 %v810, %v1786
        %v1865 = vadd.f32 %v815, %v1788
        %v1866 = vadd.f32 %v818, %v1790
        %v1867 = vadd.f32 %v823, %v1792
        %v1868 = vadd.f32 %v826, %v1794
        %v1869 = vadd.f32 %v831, %v1796
        %v1870 = vadd.f32 %v834, %v1798
        %v1871 = vadd.f32 %v839, %v1800
        %v1872 = vadd.f32 %v842, %v1802
        %v1873 = vadd.f32 %v847, %v1804
        %v1874 = vadd.f32 %v850, %v1806
        %v1875 = vadd.f32 %v855, %v1808
        %v1876 = vadd.f32 %v858, %v1810
        %v1877 = vadd.f32 %v863, %v1812
        %v1878 = vadd.f32 %v866, %v1814
        %1911 = vrot.lane.b32.xlu0 %v1847, 64
        %v1912 = vpop.permute.xlu0 %1911
        %1913 = vrot.lane.b32.xlu0 %v1848, 64
        %v1914 = vpop.permute.xlu0 %1913
        %1915 = vrot.lane.b32.xlu0 %v1849, 64
        %v1916 = vpop.permute.xlu0 %1915
        %1917 = vrot.lane.b32.xlu0 %v1850, 64
        %v1918 = vpop.permute.xlu0 %1917
        %1919 = vrot.lane.b32.xlu0 %v1851, 64
        %v1920 = vpop.permute.xlu0 %1919
        %1921 = vrot.lane.b32.xlu0 %v1852, 64
        %v1922 = vpop.permute.xlu0 %1921
        %1923 = vrot.lane.b32.xlu0 %v1853, 64
        %v1924 = vpop.permute.xlu0 %1923
        %1925 = vrot.lane.b32.xlu0 %v1854, 64
        %v1926 = vpop.permute.xlu0 %1925
        %1927 = vrot.lane.b32.xlu0 %v1855, 64
        %v1928 = vpop.permute.xlu0 %1927
        %1929 = vrot.lane.b32.xlu0 %v1856, 64
        %v1930 = vpop.permute.xlu0 %1929
        %1931 = vrot.lane.b32.xlu0 %v1857, 64
        %v1932 = vpop.permute.xlu0 %1931
        %1933 = vrot.lane.b32.xlu0 %v1858, 64
        %v1934 = vpop.permute.xlu0 %1933
        %1935 = vrot.lane.b32.xlu0 %v1859, 64
        %v1936 = vpop.permute.xlu0 %1935
        %1937 = vrot.lane.b32.xlu0 %v1860, 64
        %v1938 = vpop.permute.xlu0 %1937
        %1939 = vrot.lane.b32.xlu0 %v1861, 64
        %v1940 = vpop.permute.xlu0 %1939
        %1941 = vrot.lane.b32.xlu0 %v1862, 64
        %v1942 = vpop.permute.xlu0 %1941
        %1943 = vrot.lane.b32.xlu0 %v1863, 64
        %v1944 = vpop.permute.xlu0 %1943
        %1945 = vrot.lane.b32.xlu0 %v1864, 64
        %v1946 = vpop.permute.xlu0 %1945
        %1947 = vrot.lane.b32.xlu0 %v1865, 64
        %v1948 = vpop.permute.xlu0 %1947
        %1949 = vrot.lane.b32.xlu0 %v1866, 64
        %v1950 = vpop.permute.xlu0 %1949
        %1951 = vrot.lane.b32.xlu0 %v1867, 64
        %v1952 = vpop.permute.xlu0 %1951
        %1953 = vrot.lane.b32.xlu0 %v1868, 64
        %v1954 = vpop.permute.xlu0 %1953
        %1955 = vrot.lane.b32.xlu0 %v1869, 64
        %v1956 = vpop.permute.xlu0 %1955
        %1957 = vrot.lane.b32.xlu0 %v1870, 64
        %v1958 = vpop.permute.xlu0 %1957
        %1959 = vrot.lane.b32.xlu0 %v1871, 64
        %v1960 = vpop.permute.xlu0 %1959
        %1961 = vrot.lane.b32.xlu0 %v1872, 64
        %v1962 = vpop.permute.xlu0 %1961
        %1963 = vrot.lane.b32.xlu0 %v1873, 64
        %v1964 = vpop.permute.xlu0 %1963
        %1965 = vrot.lane.b32.xlu0 %v1874, 64
        %v1966 = vpop.permute.xlu0 %1965
        %1967 = vrot.lane.b32.xlu0 %v1875, 64
        %v1968 = vpop.permute.xlu0 %1967
        %1969 = vrot.lane.b32.xlu0 %v1876, 64
        %v1970 = vpop.permute.xlu0 %1969
        %1971 = vrot.lane.b32.xlu0 %v1877, 64
        %v1972 = vpop.permute.xlu0 %1971
        %1973 = vrot.lane.b32.xlu0 %v1878, 64
        %v1974 = vpop.permute.xlu0 %1973
        %v2007 = vpack.c.bf16 %v1182, %v1181
        %v2008 = vpack.c.bf16 %v1184, %v1183
        %v2009 = vpack.c.bf16 %v1186, %v1185
        %v2010 = vpack.c.bf16 %v1188, %v1187
        %v2011 = vpack.c.bf16 %v1190, %v1189
        %v2012 = vpack.c.bf16 %v1192, %v1191
        %v2013 = vpack.c.bf16 %v1194, %v1193
        %v2014 = vpack.c.bf16 %v1196, %v1195
        %v2015 = vpack.c.bf16 %v1198, %v1197
        %v2016 = vpack.c.bf16 %v1200, %v1199
        %v2017 = vpack.c.bf16 %v1202, %v1201
        %v2018 = vpack.c.bf16 %v1204, %v1203
        %v2019 = vpack.c.bf16 %v1206, %v1205
        %v2020 = vpack.c.bf16 %v1208, %v1207
        %v2021 = vpack.c.bf16 %v1210, %v1209
        %v2022 = vpack.c.bf16 %v1212, %v1211
        %v2023 = vpack.c.bf16 %v1656, %v1655
        %v2024 = vpack.c.bf16 %v1658, %v1657
        %v2025 = vpack.c.bf16 %v1660, %v1659
        %v2026 = vpack.c.bf16 %v1662, %v1661
        %v2027 = vpack.c.bf16 %v1664, %v1663
        %v2028 = vpack.c.bf16 %v1666, %v1665
        %v2029 = vpack.c.bf16 %v1668, %v1667
        %v2030 = vpack.c.bf16 %v1670, %v1669
        %v2031 = vpack.c.bf16 %v1672, %v1671
        %v2032 = vpack.c.bf16 %v1674, %v1673
        %v2033 = vpack.c.bf16 %v1676, %v1675
        %v2034 = vpack.c.bf16 %v1678, %v1677
        %v2035 = vpack.c.bf16 %v1680, %v1679
        %v2036 = vpack.c.bf16 %v1682, %v1681
        %v2037 = vpack.c.bf16 %v1684, %v1683
        %v2038 = vpack.c.bf16 %v1686, %v1685
        %v2039 = vpack.c.bf16 %v1914, %v1912
        %v2040 = vpack.c.bf16 %v1918, %v1916
        %v2041 = vpack.c.bf16 %v1922, %v1920
        %v2042 = vpack.c.bf16 %v1926, %v1924
        %v2043 = vpack.c.bf16 %v1930, %v1928
        %v2044 = vpack.c.bf16 %v1934, %v1932
        %v2045 = vpack.c.bf16 %v1938, %v1936
        %v2046 = vpack.c.bf16 %v1942, %v1940
        %v2047 = vpack.c.bf16 %v1946, %v1944
        %v2048 = vpack.c.bf16 %v1950, %v1948
        %v2049 = vpack.c.bf16 %v1954, %v1952
        %v2050 = vpack.c.bf16 %v1958, %v1956
        %v2051 = vpack.c.bf16 %v1962, %v1960
        %v2052 = vpack.c.bf16 %v1966, %v1964
        %v2053 = vpack.c.bf16 %v1970, %v1968
        %v2054 = vpack.c.bf16 %v1974, %v1972
        %v2055 = vld [vmem:[%s7] sm:$0xff]
        %v2056 = vld [vmem:[%s7 + $0x8] sm:$0xff]
        %v2057 = vld [vmem:[%s7 + $0x10] sm:$0xff]
        %v2058 = vld [vmem:[%s7 + $0x18] sm:$0xff]
        %v2059 = vld [vmem:[%s7 + $0x20] sm:$0xff]
        %v2060 = vld [vmem:[%s7 + $0x28] sm:$0xff]
        %v2061 = vld [vmem:[%s7 + $0x30] sm:$0xff]
        %v2062 = vld [vmem:[%s7 + $0x38] sm:$0xff]
        %v2071 = vunpack.c.l.b16 %v2055
        %v2072 = vunpack.c.h.b16 %v2055
        %v2073 = vunpack.c.l.b16 %v2056
        %v2074 = vunpack.c.h.b16 %v2056
        %v2075 = vunpack.c.l.b16 %v2057
        %v2076 = vunpack.c.h.b16 %v2057
        %v2077 = vunpack.c.l.b16 %v2058
        %v2078 = vunpack.c.h.b16 %v2058
        %v2079 = vunpack.c.l.b16 %v2059
        %v2080 = vunpack.c.h.b16 %v2059
        %v2081 = vunpack.c.l.b16 %v2060
        %v2082 = vunpack.c.h.b16 %v2060
        %v2083 = vunpack.c.l.b16 %v2061
        %v2084 = vunpack.c.h.b16 %v2061
        %v2085 = vunpack.c.l.b16 %v2062
        %v2086 = vunpack.c.h.b16 %v2062
        %v2087 = vpack.c.b16 %v2075, %v2071
        %v2088 = vpack.c.b16 %v2076, %v2072
        %v2089 = vpack.c.b16 %v2077, %v2073
        %v2090 = vpack.c.b16 %v2078, %v2074
        %v2091 = vpack.c.b16 %v2083, %v2079
        %v2092 = vpack.c.b16 %v2084, %v2080
        %v2093 = vpack.c.b16 %v2085, %v2081
        %v2094 = vpack.c.b16 %v2086, %v2082
        %v2104 = vsel %vm659, %v2007, 0
        %v2107 = vsel %vm659, %v2008, 0
        %v2110 = vsel %vm659, %v2009, 0
        %v2113 = vsel %vm659, %v2010, 0
        %v2116 = vsel %vm659, %v2011, 0
        %v2119 = vsel %vm659, %v2012, 0
        %v2122 = vsel %vm659, %v2013, 0
        %v2125 = vsel %vm659, %v2014, 0
        %v2128 = vsel %vm659, %v2015, 0
        %v2131 = vsel %vm659, %v2016, 0
        %v2134 = vsel %vm659, %v2017, 0
        %v2137 = vsel %vm659, %v2018, 0
        %v2140 = vsel %vm659, %v2019, 0
        %v2143 = vsel %vm659, %v2020, 0
        %v2146 = vsel %vm659, %v2021, 0
        %v2149 = vsel %vm659, %v2022, 0
        %v2152 = vsel %vm659, %v2023, 0
        %v2155 = vsel %vm659, %v2024, 0
        %v2158 = vsel %vm659, %v2025, 0
        %v2161 = vsel %vm659, %v2026, 0
        %v2164 = vsel %vm659, %v2027, 0
        %v2167 = vsel %vm659, %v2028, 0
        %v2170 = vsel %vm659, %v2029, 0
        %v2173 = vsel %vm659, %v2030, 0
        %v2176 = vsel %vm659, %v2031, 0
        %v2179 = vsel %vm659, %v2032, 0
        %v2182 = vsel %vm659, %v2033, 0
        %v2185 = vsel %vm659, %v2034, 0
        %v2188 = vsel %vm659, %v2035, 0
        %v2191 = vsel %vm659, %v2036, 0
        %v2194 = vsel %vm659, %v2037, 0
        %v2197 = vsel %vm659, %v2038, 0
        %v2200 = vsel %vm659, %v2039, 0
        %v2203 = vsel %vm659, %v2040, 0
        %v2206 = vsel %vm659, %v2041, 0
        %v2209 = vsel %vm659, %v2042, 0
        %v2212 = vsel %vm659, %v2043, 0
        %v2215 = vsel %vm659, %v2044, 0
        %v2218 = vsel %vm659, %v2045, 0
        %v2221 = vsel %vm659, %v2046, 0
        %v2224 = vsel %vm659, %v2047, 0
        %v2227 = vsel %vm659, %v2048, 0
        %v2230 = vsel %vm659, %v2049, 0
        %v2233 = vsel %vm659, %v2050, 0
        %v2236 = vsel %vm659, %v2051, 0
        %v2239 = vsel %vm659, %v2052, 0
        %v2242 = vsel %vm659, %v2053, 0
        %v2245 = vsel %vm659, %v2054, 0
        %2247 = vmatprep.subr.bf16.mxu0 0
        %2248 = vmatpush1.bf16.msra.mxu0 0
        %2249 = vmatprep.subr.bf16.mxu0 0
        %2250 = vmatpush1.bf16.msra.mxu0 0
        %2251 = vmatprep.subr.bf16.mxu0 0
        %2252 = vmatpush1.bf16.msra.mxu0 0
        %2253 = vmatprep.subr.bf16.mxu0 0
        %2254 = vmatpush1.bf16.msra.mxu0 0
        %2255 = vmatprep.subr.bf16.mxu0 0
        %2256 = vmatpush1.bf16.msra.mxu0 0
        %2257 = vmatprep.subr.bf16.mxu0 0
        %2258 = vmatpush1.bf16.msra.mxu0 0
        %2259 = vmatprep.subr.bf16.mxu0 %v2092
        %2260 = vmatpush1.bf16.msra.mxu0 %v2091
        %2261 = vmatprep.subr.bf16.mxu0 %v2088
        %2262 = vmatpush1.bf16.msra.mxu0 %v2087
        %2263 = vmatprep.subr.bf16.mxu0 0
        %2264 = vmatpush2.bf16.msra.mxu0 0
        %2265 = vmatprep.subr.bf16.mxu0 0
        %2266 = vmatpush2.bf16.msra.mxu0 0
        %2267 = vmatprep.subr.bf16.mxu0 0
        %2268 = vmatpush2.bf16.msra.mxu0 0
        %2269 = vmatprep.subr.bf16.mxu0 0
        %2270 = vmatpush2.bf16.msra.mxu0 0
        %2271 = vmatprep.subr.bf16.mxu0 0
        %2272 = vmatpush2.bf16.msra.mxu0 0
        %2273 = vmatprep.subr.bf16.mxu0 0
        %2274 = vmatpush2.bf16.msra.mxu0 0
        %2275 = vmatprep.subr.bf16.mxu0 0
        %2276 = vmatpush2.bf16.msra.mxu0 0
        %2277 = vmatprep.subr.bf16.mxu0 0
        %2278 = vmatpush2.bf16.msra.mxu0 0
        %2279 = vmatprep.mubr.bf16.mxu0 0
        %2280 = vmatmul.mubr.bf16.gmra.mxu0 %v2104
        %v2281 = vpop.f32.mrf.mxu0
        %v2282 = vadd.f32 0.0, %v2281
        %v2283 = vpop.f32.mrf.mxu0
        %v2284 = vadd.f32 0.0, %v2283
        %v2285 = vpop.f32.mrf.mxu0
        %v2286 = vadd.f32 0.0, %v2285
        %v2287 = vpop.f32.mrf.mxu0
        %v2288 = vadd.f32 0.0, %v2287
        %2289 = vmatprep.mubr.bf16.mxu0 0
        %2290 = vmatmul.mubr.bf16.gmra.mxu0 %v2107
        %v2291 = vpop.f32.mrf.mxu0
        %v2292 = vadd.f32 0.0, %v2291
        %v2293 = vpop.f32.mrf.mxu0
        %v2294 = vadd.f32 0.0, %v2293
        %v2295 = vpop.f32.mrf.mxu0
        %v2296 = vadd.f32 0.0, %v2295
        %v2297 = vpop.f32.mrf.mxu0
        %v2298 = vadd.f32 0.0, %v2297
        %2299 = vmatprep.mubr.bf16.mxu0 0
        %2300 = vmatmul.mubr.bf16.gmra.mxu0 %v2110
        %v2301 = vpop.f32.mrf.mxu0
        %v2302 = vadd.f32 0.0, %v2301
        %v2303 = vpop.f32.mrf.mxu0
        %v2304 = vadd.f32 0.0, %v2303
        %v2305 = vpop.f32.mrf.mxu0
        %v2306 = vadd.f32 0.0, %v2305
        %v2307 = vpop.f32.mrf.mxu0
        %v2308 = vadd.f32 0.0, %v2307
        %2309 = vmatprep.mubr.bf16.mxu0 0
        %2310 = vmatmul.mubr.bf16.gmra.mxu0 %v2113
        %v2311 = vpop.f32.mrf.mxu0
        %v2312 = vadd.f32 0.0, %v2311
        %v2313 = vpop.f32.mrf.mxu0
        %v2314 = vadd.f32 0.0, %v2313
        %v2315 = vpop.f32.mrf.mxu0
        %v2316 = vadd.f32 0.0, %v2315
        %v2317 = vpop.f32.mrf.mxu0
        %v2318 = vadd.f32 0.0, %v2317
        %2319 = vmatprep.mubr.bf16.mxu0 0
        %2320 = vmatmul.mubr.bf16.gmra.mxu0 %v2116
        %v2321 = vpop.f32.mrf.mxu0
        %v2322 = vadd.f32 0.0, %v2321
        %v2323 = vpop.f32.mrf.mxu0
        %v2324 = vadd.f32 0.0, %v2323
        %v2325 = vpop.f32.mrf.mxu0
        %v2326 = vadd.f32 0.0, %v2325
        %v2327 = vpop.f32.mrf.mxu0
        %v2328 = vadd.f32 0.0, %v2327
        %2329 = vmatprep.mubr.bf16.mxu0 0
        %2330 = vmatmul.mubr.bf16.gmra.mxu0 %v2119
        %v2331 = vpop.f32.mrf.mxu0
        %v2332 = vadd.f32 0.0, %v2331
        %v2333 = vpop.f32.mrf.mxu0
        %v2334 = vadd.f32 0.0, %v2333
        %v2335 = vpop.f32.mrf.mxu0
        %v2336 = vadd.f32 0.0, %v2335
        %v2337 = vpop.f32.mrf.mxu0
        %v2338 = vadd.f32 0.0, %v2337
        %2339 = vmatprep.mubr.bf16.mxu0 0
        %2340 = vmatmul.mubr.bf16.gmra.mxu0 %v2122
        %v2341 = vpop.f32.mrf.mxu0
        %v2342 = vadd.f32 0.0, %v2341
        %v2343 = vpop.f32.mrf.mxu0
        %v2344 = vadd.f32 0.0, %v2343
        %v2345 = vpop.f32.mrf.mxu0
        %v2346 = vadd.f32 0.0, %v2345
        %v2347 = vpop.f32.mrf.mxu0
        %v2348 = vadd.f32 0.0, %v2347
        %2349 = vmatprep.mubr.bf16.mxu0 0
        %2350 = vmatmul.mubr.bf16.gmra.mxu0 %v2125
        %v2351 = vpop.f32.mrf.mxu0
        %v2352 = vadd.f32 0.0, %v2351
        %v2353 = vpop.f32.mrf.mxu0
        %v2354 = vadd.f32 0.0, %v2353
        %v2355 = vpop.f32.mrf.mxu0
        %v2356 = vadd.f32 0.0, %v2355
        %v2357 = vpop.f32.mrf.mxu0
        %v2358 = vadd.f32 0.0, %v2357
        %2359 = vmatprep.mubr.bf16.mxu0 0
        %2360 = vmatmul.mubr.bf16.gmra.mxu0 %v2128
        %v2361 = vpop.f32.mrf.mxu0
        %v2362 = vadd.f32 0.0, %v2361
        %v2363 = vpop.f32.mrf.mxu0
        %v2364 = vadd.f32 0.0, %v2363
        %v2365 = vpop.f32.mrf.mxu0
        %v2366 = vadd.f32 0.0, %v2365
        %v2367 = vpop.f32.mrf.mxu0
        %v2368 = vadd.f32 0.0, %v2367
        %2369 = vmatprep.mubr.bf16.mxu0 0
        %2370 = vmatmul.mubr.bf16.gmra.mxu0 %v2131
        %v2371 = vpop.f32.mrf.mxu0
        %v2372 = vadd.f32 0.0, %v2371
        %v2373 = vpop.f32.mrf.mxu0
        %v2374 = vadd.f32 0.0, %v2373
        %v2375 = vpop.f32.mrf.mxu0
        %v2376 = vadd.f32 0.0, %v2375
        %v2377 = vpop.f32.mrf.mxu0
        %v2378 = vadd.f32 0.0, %v2377
        %2379 = vmatprep.mubr.bf16.mxu0 0
        %2380 = vmatmul.mubr.bf16.gmra.mxu0 %v2134
        %v2381 = vpop.f32.mrf.mxu0
        %v2382 = vadd.f32 0.0, %v2381
        %v2383 = vpop.f32.mrf.mxu0
        %v2384 = vadd.f32 0.0, %v2383
        %v2385 = vpop.f32.mrf.mxu0
        %v2386 = vadd.f32 0.0, %v2385
        %v2387 = vpop.f32.mrf.mxu0
        %v2388 = vadd.f32 0.0, %v2387
        %2389 = vmatprep.mubr.bf16.mxu0 0
        %2390 = vmatmul.mubr.bf16.gmra.mxu0 %v2137
        %v2391 = vpop.f32.mrf.mxu0
        %v2392 = vadd.f32 0.0, %v2391
        %v2393 = vpop.f32.mrf.mxu0
        %v2394 = vadd.f32 0.0, %v2393
        %v2395 = vpop.f32.mrf.mxu0
        %v2396 = vadd.f32 0.0, %v2395
        %v2397 = vpop.f32.mrf.mxu0
        %v2398 = vadd.f32 0.0, %v2397
        %2399 = vmatprep.mubr.bf16.mxu0 0
        %2400 = vmatmul.mubr.bf16.gmra.mxu0 %v2140
        %v2401 = vpop.f32.mrf.mxu0
        %v2402 = vadd.f32 0.0, %v2401
        %v2403 = vpop.f32.mrf.mxu0
        %v2404 = vadd.f32 0.0, %v2403
        %v2405 = vpop.f32.mrf.mxu0
        %v2406 = vadd.f32 0.0, %v2405
        %v2407 = vpop.f32.mrf.mxu0
        %v2408 = vadd.f32 0.0, %v2407
        %2409 = vmatprep.mubr.bf16.mxu0 0
        %2410 = vmatmul.mubr.bf16.gmra.mxu0 %v2143
        %v2411 = vpop.f32.mrf.mxu0
        %v2412 = vadd.f32 0.0, %v2411
        %v2413 = vpop.f32.mrf.mxu0
        %v2414 = vadd.f32 0.0, %v2413
        %v2415 = vpop.f32.mrf.mxu0
        %v2416 = vadd.f32 0.0, %v2415
        %v2417 = vpop.f32.mrf.mxu0
        %v2418 = vadd.f32 0.0, %v2417
        %2419 = vmatprep.mubr.bf16.mxu0 0
        %2420 = vmatmul.mubr.bf16.gmra.mxu0 %v2146
        %v2421 = vpop.f32.mrf.mxu0
        %v2422 = vadd.f32 0.0, %v2421
        %v2423 = vpop.f32.mrf.mxu0
        %v2424 = vadd.f32 0.0, %v2423
        %v2425 = vpop.f32.mrf.mxu0
        %v2426 = vadd.f32 0.0, %v2425
        %v2427 = vpop.f32.mrf.mxu0
        %v2428 = vadd.f32 0.0, %v2427
        %2429 = vmatprep.mubr.bf16.mxu0 0
        %2430 = vmatmul.mubr.bf16.gmra.mxu0 %v2149
        %v2431 = vpop.f32.mrf.mxu0
        %v2432 = vadd.f32 0.0, %v2431
        %v2433 = vpop.f32.mrf.mxu0
        %v2434 = vadd.f32 0.0, %v2433
        %v2435 = vpop.f32.mrf.mxu0
        %v2436 = vadd.f32 0.0, %v2435
        %v2437 = vpop.f32.mrf.mxu0
        %v2438 = vadd.f32 0.0, %v2437
        %2439 = vmatprep.mubr.bf16.mxu0 0
        %2440 = vmatmul.mubr.bf16.gmra.mxu0 %v2152
        %v2441 = vpop.f32.mrf.mxu0
        %v2442 = vpop.f32.mrf.mxu0
        %v2443 = vpop.f32.mrf.mxu0
        %v2444 = vpop.f32.mrf.mxu0
        %2445 = vmatprep.mubr.bf16.mxu0 0
        %2446 = vmatmul.mubr.bf16.gmra.mxu0 %v2155
        %v2447 = vpop.f32.mrf.mxu0
        %v2448 = vpop.f32.mrf.mxu0
        %v2449 = vpop.f32.mrf.mxu0
        %v2450 = vpop.f32.mrf.mxu0
        %2451 = vmatprep.mubr.bf16.mxu0 0
        %2452 = vmatmul.mubr.bf16.gmra.mxu0 %v2158
        %v2453 = vpop.f32.mrf.mxu0
        %v2454 = vpop.f32.mrf.mxu0
        %v2455 = vpop.f32.mrf.mxu0
        %v2456 = vpop.f32.mrf.mxu0
        %2457 = vmatprep.mubr.bf16.mxu0 0
        %2458 = vmatmul.mubr.bf16.gmra.mxu0 %v2161
        %v2459 = vpop.f32.mrf.mxu0
        %v2460 = vpop.f32.mrf.mxu0
        %v2461 = vpop.f32.mrf.mxu0
        %v2462 = vpop.f32.mrf.mxu0
        %2463 = vmatprep.mubr.bf16.mxu0 0
        %2464 = vmatmul.mubr.bf16.gmra.mxu0 %v2164
        %v2465 = vpop.f32.mrf.mxu0
        %v2466 = vpop.f32.mrf.mxu0
        %v2467 = vpop.f32.mrf.mxu0
        %v2468 = vpop.f32.mrf.mxu0
        %2469 = vmatprep.mubr.bf16.mxu0 0
        %2470 = vmatmul.mubr.bf16.gmra.mxu0 %v2167
        %v2471 = vpop.f32.mrf.mxu0
        %v2472 = vpop.f32.mrf.mxu0
        %v2473 = vpop.f32.mrf.mxu0
        %v2474 = vpop.f32.mrf.mxu0
        %2475 = vmatprep.mubr.bf16.mxu0 0
        %2476 = vmatmul.mubr.bf16.gmra.mxu0 %v2170
        %v2477 = vpop.f32.mrf.mxu0
        %v2478 = vpop.f32.mrf.mxu0
        %v2479 = vpop.f32.mrf.mxu0
        %v2480 = vpop.f32.mrf.mxu0
        %2481 = vmatprep.mubr.bf16.mxu0 0
        %2482 = vmatmul.mubr.bf16.gmra.mxu0 %v2173
        %v2483 = vpop.f32.mrf.mxu0
        %v2484 = vpop.f32.mrf.mxu0
        %v2485 = vpop.f32.mrf.mxu0
        %v2486 = vpop.f32.mrf.mxu0
        %2487 = vmatprep.mubr.bf16.mxu0 0
        %2488 = vmatmul.mubr.bf16.gmra.mxu0 %v2176
        %v2489 = vpop.f32.mrf.mxu0
        %v2490 = vpop.f32.mrf.mxu0
        %v2491 = vpop.f32.mrf.mxu0
        %v2492 = vpop.f32.mrf.mxu0
        %2493 = vmatprep.mubr.bf16.mxu0 0
        %2494 = vmatmul.mubr.bf16.gmra.mxu0 %v2179
        %v2495 = vpop.f32.mrf.mxu0
        %v2496 = vpop.f32.mrf.mxu0
        %v2497 = vpop.f32.mrf.mxu0
        %v2498 = vpop.f32.mrf.mxu0
        %2499 = vmatprep.mubr.bf16.mxu0 0
        %2500 = vmatmul.mubr.bf16.gmra.mxu0 %v2182
        %v2501 = vpop.f32.mrf.mxu0
        %v2502 = vpop.f32.mrf.mxu0
        %v2503 = vpop.f32.mrf.mxu0
        %v2504 = vpop.f32.mrf.mxu0
        %2505 = vmatprep.mubr.bf16.mxu0 0
        %2506 = vmatmul.mubr.bf16.gmra.mxu0 %v2185
        %v2507 = vpop.f32.mrf.mxu0
        %v2508 = vpop.f32.mrf.mxu0
        %v2509 = vpop.f32.mrf.mxu0
        %v2510 = vpop.f32.mrf.mxu0
        %2511 = vmatprep.mubr.bf16.mxu0 0
        %2512 = vmatmul.mubr.bf16.gmra.mxu0 %v2188
        %v2513 = vpop.f32.mrf.mxu0
        %v2514 = vpop.f32.mrf.mxu0
        %v2515 = vpop.f32.mrf.mxu0
        %v2516 = vpop.f32.mrf.mxu0
        %2517 = vmatprep.mubr.bf16.mxu0 0
        %2518 = vmatmul.mubr.bf16.gmra.mxu0 %v2191
        %v2519 = vpop.f32.mrf.mxu0
        %v2520 = vpop.f32.mrf.mxu0
        %v2521 = vpop.f32.mrf.mxu0
        %v2522 = vpop.f32.mrf.mxu0
        %2523 = vmatprep.mubr.bf16.mxu0 0
        %2524 = vmatmul.mubr.bf16.gmra.mxu0 %v2194
        %v2525 = vpop.f32.mrf.mxu0
        %v2526 = vpop.f32.mrf.mxu0
        %v2527 = vpop.f32.mrf.mxu0
        %v2528 = vpop.f32.mrf.mxu0
        %2529 = vmatprep.mubr.bf16.mxu0 0
        %2530 = vmatmul.mubr.bf16.gmra.mxu0 %v2197
        %v2531 = vpop.f32.mrf.mxu0
        %v2532 = vpop.f32.mrf.mxu0
        %v2533 = vpop.f32.mrf.mxu0
        %v2534 = vpop.f32.mrf.mxu0
        %2535 = vmatprep.mubr.bf16.mxu0 0
        %2536 = vmatmul.mubr.bf16.gmra.mxu0 %v2200
        %v2537 = vpop.f32.mrf.mxu0
        %v2538 = vadd.f32 0.0, %v2537
        %v2539 = vpop.f32.mrf.mxu0
        %v2540 = vadd.f32 0.0, %v2539
        %v2541 = vpop.f32.mrf.mxu0
        %v2542 = vadd.f32 0.0, %v2541
        %v2543 = vpop.f32.mrf.mxu0
        %v2544 = vadd.f32 0.0, %v2543
        %2545 = vmatprep.mubr.bf16.mxu0 0
        %2546 = vmatmul.mubr.bf16.gmra.mxu0 %v2203
        %v2547 = vpop.f32.mrf.mxu0
        %v2548 = vadd.f32 0.0, %v2547
        %v2549 = vpop.f32.mrf.mxu0
        %v2550 = vadd.f32 0.0, %v2549
        %v2551 = vpop.f32.mrf.mxu0
        %v2552 = vadd.f32 0.0, %v2551
        %v2553 = vpop.f32.mrf.mxu0
        %v2554 = vadd.f32 0.0, %v2553
        %2555 = vmatprep.mubr.bf16.mxu0 0
        %2556 = vmatmul.mubr.bf16.gmra.mxu0 %v2206
        %v2557 = vpop.f32.mrf.mxu0
        %v2558 = vadd.f32 0.0, %v2557
        %v2559 = vpop.f32.mrf.mxu0
        %v2560 = vadd.f32 0.0, %v2559
        %v2561 = vpop.f32.mrf.mxu0
        %v2562 = vadd.f32 0.0, %v2561
        %v2563 = vpop.f32.mrf.mxu0
        %v2564 = vadd.f32 0.0, %v2563
        %2565 = vmatprep.mubr.bf16.mxu0 0
        %2566 = vmatmul.mubr.bf16.gmra.mxu0 %v2209
        %v2567 = vpop.f32.mrf.mxu0
        %v2568 = vadd.f32 0.0, %v2567
        %v2569 = vpop.f32.mrf.mxu0
        %v2570 = vadd.f32 0.0, %v2569
        %v2571 = vpop.f32.mrf.mxu0
        %v2572 = vadd.f32 0.0, %v2571
        %v2573 = vpop.f32.mrf.mxu0
        %v2574 = vadd.f32 0.0, %v2573
        %2575 = vmatprep.mubr.bf16.mxu0 0
        %2576 = vmatmul.mubr.bf16.gmra.mxu0 %v2212
        %v2577 = vpop.f32.mrf.mxu0
        %v2578 = vadd.f32 0.0, %v2577
        %v2579 = vpop.f32.mrf.mxu0
        %v2580 = vadd.f32 0.0, %v2579
        %v2581 = vpop.f32.mrf.mxu0
        %v2582 = vadd.f32 0.0, %v2581
        %v2583 = vpop.f32.mrf.mxu0
        %v2584 = vadd.f32 0.0, %v2583
        %2585 = vmatprep.mubr.bf16.mxu0 0
        %2586 = vmatmul.mubr.bf16.gmra.mxu0 %v2215
        %v2587 = vpop.f32.mrf.mxu0
        %v2588 = vadd.f32 0.0, %v2587
        %v2589 = vpop.f32.mrf.mxu0
        %v2590 = vadd.f32 0.0, %v2589
        %v2591 = vpop.f32.mrf.mxu0
        %v2592 = vadd.f32 0.0, %v2591
        %v2593 = vpop.f32.mrf.mxu0
        %v2594 = vadd.f32 0.0, %v2593
        %2595 = vmatprep.mubr.bf16.mxu0 0
        %2596 = vmatmul.mubr.bf16.gmra.mxu0 %v2218
        %v2597 = vpop.f32.mrf.mxu0
        %v2598 = vadd.f32 0.0, %v2597
        %v2599 = vpop.f32.mrf.mxu0
        %v2600 = vadd.f32 0.0, %v2599
        %v2601 = vpop.f32.mrf.mxu0
        %v2602 = vadd.f32 0.0, %v2601
        %v2603 = vpop.f32.mrf.mxu0
        %v2604 = vadd.f32 0.0, %v2603
        %2605 = vmatprep.mubr.bf16.mxu0 0
        %2606 = vmatmul.mubr.bf16.gmra.mxu0 %v2221
        %v2607 = vpop.f32.mrf.mxu0
        %v2608 = vadd.f32 0.0, %v2607
        %v2609 = vpop.f32.mrf.mxu0
        %v2610 = vadd.f32 0.0, %v2609
        %v2611 = vpop.f32.mrf.mxu0
        %v2612 = vadd.f32 0.0, %v2611
        %v2613 = vpop.f32.mrf.mxu0
        %v2614 = vadd.f32 0.0, %v2613
        %2615 = vmatprep.mubr.bf16.mxu0 0
        %2616 = vmatmul.mubr.bf16.gmra.mxu0 %v2224
        %v2617 = vpop.f32.mrf.mxu0
        %v2618 = vadd.f32 0.0, %v2617
        %v2619 = vpop.f32.mrf.mxu0
        %v2620 = vadd.f32 0.0, %v2619
        %v2621 = vpop.f32.mrf.mxu0
        %v2622 = vadd.f32 0.0, %v2621
        %v2623 = vpop.f32.mrf.mxu0
        %v2624 = vadd.f32 0.0, %v2623
        %2625 = vmatprep.mubr.bf16.mxu0 0
        %2626 = vmatmul.mubr.bf16.gmra.mxu0 %v2227
        %v2627 = vpop.f32.mrf.mxu0
        %v2628 = vadd.f32 0.0, %v2627
        %v2629 = vpop.f32.mrf.mxu0
        %v2630 = vadd.f32 0.0, %v2629
        %v2631 = vpop.f32.mrf.mxu0
        %v2632 = vadd.f32 0.0, %v2631
        %v2633 = vpop.f32.mrf.mxu0
        %v2634 = vadd.f32 0.0, %v2633
        %2635 = vmatprep.mubr.bf16.mxu0 0
        %2636 = vmatmul.mubr.bf16.gmra.mxu0 %v2230
        %v2637 = vpop.f32.mrf.mxu0
        %v2638 = vadd.f32 0.0, %v2637
        %v2639 = vpop.f32.mrf.mxu0
        %v2640 = vadd.f32 0.0, %v2639
        %v2641 = vpop.f32.mrf.mxu0
        %v2642 = vadd.f32 0.0, %v2641
        %v2643 = vpop.f32.mrf.mxu0
        %v2644 = vadd.f32 0.0, %v2643
        %2645 = vmatprep.mubr.bf16.mxu0 0
        %2646 = vmatmul.mubr.bf16.gmra.mxu0 %v2233
        %v2647 = vpop.f32.mrf.mxu0
        %v2648 = vadd.f32 0.0, %v2647
        %v2649 = vpop.f32.mrf.mxu0
        %v2650 = vadd.f32 0.0, %v2649
        %v2651 = vpop.f32.mrf.mxu0
        %v2652 = vadd.f32 0.0, %v2651
        %v2653 = vpop.f32.mrf.mxu0
        %v2654 = vadd.f32 0.0, %v2653
        %2655 = vmatprep.mubr.bf16.mxu0 0
        %2656 = vmatmul.mubr.bf16.gmra.mxu0 %v2236
        %v2657 = vpop.f32.mrf.mxu0
        %v2658 = vadd.f32 0.0, %v2657
        %v2659 = vpop.f32.mrf.mxu0
        %v2660 = vadd.f32 0.0, %v2659
        %v2661 = vpop.f32.mrf.mxu0
        %v2662 = vadd.f32 0.0, %v2661
        %v2663 = vpop.f32.mrf.mxu0
        %v2664 = vadd.f32 0.0, %v2663
        %2665 = vmatprep.mubr.bf16.mxu0 0
        %2666 = vmatmul.mubr.bf16.gmra.mxu0 %v2239
        %v2667 = vpop.f32.mrf.mxu0
        %v2668 = vadd.f32 0.0, %v2667
        %v2669 = vpop.f32.mrf.mxu0
        %v2670 = vadd.f32 0.0, %v2669
        %v2671 = vpop.f32.mrf.mxu0
        %v2672 = vadd.f32 0.0, %v2671
        %v2673 = vpop.f32.mrf.mxu0
        %v2674 = vadd.f32 0.0, %v2673
        %2675 = vmatprep.mubr.bf16.mxu0 0
        %2676 = vmatmul.mubr.bf16.gmra.mxu0 %v2242
        %v2677 = vpop.f32.mrf.mxu0
        %v2678 = vadd.f32 0.0, %v2677
        %v2679 = vpop.f32.mrf.mxu0
        %v2680 = vadd.f32 0.0, %v2679
        %v2681 = vpop.f32.mrf.mxu0
        %v2682 = vadd.f32 0.0, %v2681
        %v2683 = vpop.f32.mrf.mxu0
        %v2684 = vadd.f32 0.0, %v2683
        %2685 = vmatprep.mubr.bf16.mxu0 0
        %2686 = vmatmul.mubr.bf16.gmra.mxu0 %v2245
        %v2687 = vpop.f32.mrf.mxu0
        %v2688 = vadd.f32 0.0, %v2687
        %v2689 = vpop.f32.mrf.mxu0
        %v2690 = vadd.f32 0.0, %v2689
        %v2691 = vpop.f32.mrf.mxu0
        %v2692 = vadd.f32 0.0, %v2691
        %v2693 = vpop.f32.mrf.mxu0
        %v2694 = vadd.f32 0.0, %v2693
        %2695 = vdwg.mxu0
        %2696 = vmatprep.subr.bf16.mxu0 0
        %2697 = vmatpush1.bf16.msra.mxu0 0
        %2698 = vmatprep.subr.bf16.mxu0 0
        %2699 = vmatpush1.bf16.msra.mxu0 0
        %2700 = vmatprep.subr.bf16.mxu0 0
        %2701 = vmatpush1.bf16.msra.mxu0 0
        %2702 = vmatprep.subr.bf16.mxu0 0
        %2703 = vmatpush1.bf16.msra.mxu0 0
        %2704 = vmatprep.subr.bf16.mxu0 0
        %2705 = vmatpush1.bf16.msra.mxu0 0
        %2706 = vmatprep.subr.bf16.mxu0 0
        %2707 = vmatpush1.bf16.msra.mxu0 0
        %2708 = vmatprep.subr.bf16.mxu0 %v2094
        %2709 = vmatpush1.bf16.msra.mxu0 %v2093
        %2710 = vmatprep.subr.bf16.mxu0 %v2090
        %2711 = vmatpush1.bf16.msra.mxu0 %v2089
        %2712 = vmatprep.subr.bf16.mxu0 0
        %2713 = vmatpush2.bf16.msra.mxu0 0
        %2714 = vmatprep.subr.bf16.mxu0 0
        %2715 = vmatpush2.bf16.msra.mxu0 0
        %2716 = vmatprep.subr.bf16.mxu0 0
        %2717 = vmatpush2.bf16.msra.mxu0 0
        %2718 = vmatprep.subr.bf16.mxu0 0
        %2719 = vmatpush2.bf16.msra.mxu0 0
        %2720 = vmatprep.subr.bf16.mxu0 0
        %2721 = vmatpush2.bf16.msra.mxu0 0
        %2722 = vmatprep.subr.bf16.mxu0 0
        %2723 = vmatpush2.bf16.msra.mxu0 0
        %2724 = vmatprep.subr.bf16.mxu0 0
        %2725 = vmatpush2.bf16.msra.mxu0 0
        %2726 = vmatprep.subr.bf16.mxu0 0
        %2727 = vmatpush2.bf16.msra.mxu0 0
        %2728 = vmatprep.mubr.bf16.mxu0 0
        %2729 = vmatmul.mubr.bf16.gmra.mxu0 %v2104
        %v2730 = vpop.f32.mrf.mxu0
        %v2731 = vpop.f32.mrf.mxu0
        %v2732 = vpop.f32.mrf.mxu0
        %v2733 = vpop.f32.mrf.mxu0
        %2734 = vmatprep.mubr.bf16.mxu0 0
        %2735 = vmatmul.mubr.bf16.gmra.mxu0 %v2107
        %v2736 = vpop.f32.mrf.mxu0
        %v2737 = vpop.f32.mrf.mxu0
        %v2738 = vpop.f32.mrf.mxu0
        %v2739 = vpop.f32.mrf.mxu0
        %2740 = vmatprep.mubr.bf16.mxu0 0
        %2741 = vmatmul.mubr.bf16.gmra.mxu0 %v2110
        %v2742 = vpop.f32.mrf.mxu0
        %v2743 = vpop.f32.mrf.mxu0
        %v2744 = vpop.f32.mrf.mxu0
        %v2745 = vpop.f32.mrf.mxu0
        %2746 = vmatprep.mubr.bf16.mxu0 0
        %2747 = vmatmul.mubr.bf16.gmra.mxu0 %v2113
        %v2748 = vpop.f32.mrf.mxu0
        %v2749 = vpop.f32.mrf.mxu0
        %v2750 = vpop.f32.mrf.mxu0
        %v2751 = vpop.f32.mrf.mxu0
        %2752 = vmatprep.mubr.bf16.mxu0 0
        %2753 = vmatmul.mubr.bf16.gmra.mxu0 %v2116
        %v2754 = vpop.f32.mrf.mxu0
        %v2755 = vpop.f32.mrf.mxu0
        %v2756 = vpop.f32.mrf.mxu0
        %v2757 = vpop.f32.mrf.mxu0
        %2758 = vmatprep.mubr.bf16.mxu0 0
        %2759 = vmatmul.mubr.bf16.gmra.mxu0 %v2119
        %v2760 = vpop.f32.mrf.mxu0
        %v2761 = vpop.f32.mrf.mxu0
        %v2762 = vpop.f32.mrf.mxu0
        %v2763 = vpop.f32.mrf.mxu0
        %2764 = vmatprep.mubr.bf16.mxu0 0
        %2765 = vmatmul.mubr.bf16.gmra.mxu0 %v2122
        %v2766 = vpop.f32.mrf.mxu0
        %v2767 = vpop.f32.mrf.mxu0
        %v2768 = vpop.f32.mrf.mxu0
        %v2769 = vpop.f32.mrf.mxu0
        %2770 = vmatprep.mubr.bf16.mxu0 0
        %2771 = vmatmul.mubr.bf16.gmra.mxu0 %v2125
        %v2772 = vpop.f32.mrf.mxu0
        %v2773 = vpop.f32.mrf.mxu0
        %v2774 = vpop.f32.mrf.mxu0
        %v2775 = vpop.f32.mrf.mxu0
        %2776 = vmatprep.mubr.bf16.mxu0 0
        %2777 = vmatmul.mubr.bf16.gmra.mxu0 %v2128
        %v2778 = vpop.f32.mrf.mxu0
        %v2779 = vpop.f32.mrf.mxu0
        %v2780 = vpop.f32.mrf.mxu0
        %v2781 = vpop.f32.mrf.mxu0
        %2782 = vmatprep.mubr.bf16.mxu0 0
        %2783 = vmatmul.mubr.bf16.gmra.mxu0 %v2131
        %v2784 = vpop.f32.mrf.mxu0
        %v2785 = vpop.f32.mrf.mxu0
        %v2786 = vpop.f32.mrf.mxu0
        %v2787 = vpop.f32.mrf.mxu0
        %2788 = vmatprep.mubr.bf16.mxu0 0
        %2789 = vmatmul.mubr.bf16.gmra.mxu0 %v2134
        %v2790 = vpop.f32.mrf.mxu0
        %v2791 = vpop.f32.mrf.mxu0
        %v2792 = vpop.f32.mrf.mxu0
        %v2793 = vpop.f32.mrf.mxu0
        %2794 = vmatprep.mubr.bf16.mxu0 0
        %2795 = vmatmul.mubr.bf16.gmra.mxu0 %v2137
        %v2796 = vpop.f32.mrf.mxu0
        %v2797 = vpop.f32.mrf.mxu0
        %v2798 = vpop.f32.mrf.mxu0
        %v2799 = vpop.f32.mrf.mxu0
        %2800 = vmatprep.mubr.bf16.mxu0 0
        %2801 = vmatmul.mubr.bf16.gmra.mxu0 %v2140
        %v2802 = vpop.f32.mrf.mxu0
        %v2803 = vpop.f32.mrf.mxu0
        %v2804 = vpop.f32.mrf.mxu0
        %v2805 = vpop.f32.mrf.mxu0
        %2806 = vmatprep.mubr.bf16.mxu0 0
        %2807 = vmatmul.mubr.bf16.gmra.mxu0 %v2143
        %v2808 = vpop.f32.mrf.mxu0
        %v2809 = vpop.f32.mrf.mxu0
        %v2810 = vpop.f32.mrf.mxu0
        %v2811 = vpop.f32.mrf.mxu0
        %2812 = vmatprep.mubr.bf16.mxu0 0
        %2813 = vmatmul.mubr.bf16.gmra.mxu0 %v2146
        %v2814 = vpop.f32.mrf.mxu0
        %v2815 = vpop.f32.mrf.mxu0
        %v2816 = vpop.f32.mrf.mxu0
        %v2817 = vpop.f32.mrf.mxu0
        %2818 = vmatprep.mubr.bf16.mxu0 0
        %2819 = vmatmul.mubr.bf16.gmra.mxu0 %v2149
        %v2820 = vpop.f32.mrf.mxu0
        %v2821 = vpop.f32.mrf.mxu0
        %v2822 = vpop.f32.mrf.mxu0
        %v2823 = vpop.f32.mrf.mxu0
        %2824 = vmatprep.mubr.bf16.mxu0 0
        %2825 = vmatmul.mubr.bf16.gmra.mxu0 %v2152
        %v2826 = vpop.f32.mrf.mxu0
        %v2827 = vadd.f32 0.0, %v2826
        %v2828 = vpop.f32.mrf.mxu0
        %v2829 = vadd.f32 0.0, %v2828
        %v2830 = vpop.f32.mrf.mxu0
        %v2831 = vadd.f32 0.0, %v2830
        %v2832 = vpop.f32.mrf.mxu0
        %v2833 = vadd.f32 0.0, %v2832
        %2834 = vmatprep.mubr.bf16.mxu0 0
        %2835 = vmatmul.mubr.bf16.gmra.mxu0 %v2155
        %v2836 = vpop.f32.mrf.mxu0
        %v2837 = vadd.f32 0.0, %v2836
        %v2838 = vpop.f32.mrf.mxu0
        %v2839 = vadd.f32 0.0, %v2838
        %v2840 = vpop.f32.mrf.mxu0
        %v2841 = vadd.f32 0.0, %v2840
        %v2842 = vpop.f32.mrf.mxu0
        %v2843 = vadd.f32 0.0, %v2842
        %2844 = vmatprep.mubr.bf16.mxu0 0
        %2845 = vmatmul.mubr.bf16.gmra.mxu0 %v2158
        %v2846 = vpop.f32.mrf.mxu0
        %v2847 = vadd.f32 0.0, %v2846
        %v2848 = vpop.f32.mrf.mxu0
        %v2849 = vadd.f32 0.0, %v2848
        %v2850 = vpop.f32.mrf.mxu0
        %v2851 = vadd.f32 0.0, %v2850
        %v2852 = vpop.f32.mrf.mxu0
        %v2853 = vadd.f32 0.0, %v2852
        %2854 = vmatprep.mubr.bf16.mxu0 0
        %2855 = vmatmul.mubr.bf16.gmra.mxu0 %v2161
        %v2856 = vpop.f32.mrf.mxu0
        %v2857 = vadd.f32 0.0, %v2856
        %v2858 = vpop.f32.mrf.mxu0
        %v2859 = vadd.f32 0.0, %v2858
        %v2860 = vpop.f32.mrf.mxu0
        %v2861 = vadd.f32 0.0, %v2860
        %v2862 = vpop.f32.mrf.mxu0
        %v2863 = vadd.f32 0.0, %v2862
        %2864 = vmatprep.mubr.bf16.mxu0 0
        %2865 = vmatmul.mubr.bf16.gmra.mxu0 %v2164
        %v2866 = vpop.f32.mrf.mxu0
        %v2867 = vadd.f32 0.0, %v2866
        %v2868 = vpop.f32.mrf.mxu0
        %v2869 = vadd.f32 0.0, %v2868
        %v2870 = vpop.f32.mrf.mxu0
        %v2871 = vadd.f32 0.0, %v2870
        %v2872 = vpop.f32.mrf.mxu0
        %v2873 = vadd.f32 0.0, %v2872
        %2874 = vmatprep.mubr.bf16.mxu0 0
        %2875 = vmatmul.mubr.bf16.gmra.mxu0 %v2167
        %v2876 = vpop.f32.mrf.mxu0
        %v2877 = vadd.f32 0.0, %v2876
        %v2878 = vpop.f32.mrf.mxu0
        %v2879 = vadd.f32 0.0, %v2878
        %v2880 = vpop.f32.mrf.mxu0
        %v2881 = vadd.f32 0.0, %v2880
        %v2882 = vpop.f32.mrf.mxu0
        %v2883 = vadd.f32 0.0, %v2882
        %2884 = vmatprep.mubr.bf16.mxu0 0
        %2885 = vmatmul.mubr.bf16.gmra.mxu0 %v2170
        %v2886 = vpop.f32.mrf.mxu0
        %v2887 = vadd.f32 0.0, %v2886
        %v2888 = vpop.f32.mrf.mxu0
        %v2889 = vadd.f32 0.0, %v2888
        %v2890 = vpop.f32.mrf.mxu0
        %v2891 = vadd.f32 0.0, %v2890
        %v2892 = vpop.f32.mrf.mxu0
        %v2893 = vadd.f32 0.0, %v2892
        %2894 = vmatprep.mubr.bf16.mxu0 0
        %2895 = vmatmul.mubr.bf16.gmra.mxu0 %v2173
        %v2896 = vpop.f32.mrf.mxu0
        %v2897 = vadd.f32 0.0, %v2896
        %v2898 = vpop.f32.mrf.mxu0
        %v2899 = vadd.f32 0.0, %v2898
        %v2900 = vpop.f32.mrf.mxu0
        %v2901 = vadd.f32 0.0, %v2900
        %v2902 = vpop.f32.mrf.mxu0
        %v2903 = vadd.f32 0.0, %v2902
        %2904 = vmatprep.mubr.bf16.mxu0 0
        %2905 = vmatmul.mubr.bf16.gmra.mxu0 %v2176
        %v2906 = vpop.f32.mrf.mxu0
        %v2907 = vadd.f32 0.0, %v2906
        %v2908 = vpop.f32.mrf.mxu0
        %v2909 = vadd.f32 0.0, %v2908
        %v2910 = vpop.f32.mrf.mxu0
        %v2911 = vadd.f32 0.0, %v2910
        %v2912 = vpop.f32.mrf.mxu0
        %v2913 = vadd.f32 0.0, %v2912
        %2914 = vmatprep.mubr.bf16.mxu0 0
        %2915 = vmatmul.mubr.bf16.gmra.mxu0 %v2179
        %v2916 = vpop.f32.mrf.mxu0
        %v2917 = vadd.f32 0.0, %v2916
        %v2918 = vpop.f32.mrf.mxu0
        %v2919 = vadd.f32 0.0, %v2918
        %v2920 = vpop.f32.mrf.mxu0
        %v2921 = vadd.f32 0.0, %v2920
        %v2922 = vpop.f32.mrf.mxu0
        %v2923 = vadd.f32 0.0, %v2922
        %2924 = vmatprep.mubr.bf16.mxu0 0
        %2925 = vmatmul.mubr.bf16.gmra.mxu0 %v2182
        %v2926 = vpop.f32.mrf.mxu0
        %v2927 = vadd.f32 0.0, %v2926
        %v2928 = vpop.f32.mrf.mxu0
        %v2929 = vadd.f32 0.0, %v2928
        %v2930 = vpop.f32.mrf.mxu0
        %v2931 = vadd.f32 0.0, %v2930
        %v2932 = vpop.f32.mrf.mxu0
        %v2933 = vadd.f32 0.0, %v2932
        %2934 = vmatprep.mubr.bf16.mxu0 0
        %2935 = vmatmul.mubr.bf16.gmra.mxu0 %v2185
        %v2936 = vpop.f32.mrf.mxu0
        %v2937 = vadd.f32 0.0, %v2936
        %v2938 = vpop.f32.mrf.mxu0
        %v2939 = vadd.f32 0.0, %v2938
        %v2940 = vpop.f32.mrf.mxu0
        %v2941 = vadd.f32 0.0, %v2940
        %v2942 = vpop.f32.mrf.mxu0
        %v2943 = vadd.f32 0.0, %v2942
        %2944 = vmatprep.mubr.bf16.mxu0 0
        %2945 = vmatmul.mubr.bf16.gmra.mxu0 %v2188
        %v2946 = vpop.f32.mrf.mxu0
        %v2947 = vadd.f32 0.0, %v2946
        %v2948 = vpop.f32.mrf.mxu0
        %v2949 = vadd.f32 0.0, %v2948
        %v2950 = vpop.f32.mrf.mxu0
        %v2951 = vadd.f32 0.0, %v2950
        %v2952 = vpop.f32.mrf.mxu0
        %v2953 = vadd.f32 0.0, %v2952
        %2954 = vmatprep.mubr.bf16.mxu0 0
        %2955 = vmatmul.mubr.bf16.gmra.mxu0 %v2191
        %v2956 = vpop.f32.mrf.mxu0
        %v2957 = vadd.f32 0.0, %v2956
        %v2958 = vpop.f32.mrf.mxu0
        %v2959 = vadd.f32 0.0, %v2958
        %v2960 = vpop.f32.mrf.mxu0
        %v2961 = vadd.f32 0.0, %v2960
        %v2962 = vpop.f32.mrf.mxu0
        %v2963 = vadd.f32 0.0, %v2962
        %2964 = vmatprep.mubr.bf16.mxu0 0
        %2965 = vmatmul.mubr.bf16.gmra.mxu0 %v2194
        %v2966 = vpop.f32.mrf.mxu0
        %v2967 = vadd.f32 0.0, %v2966
        %v2968 = vpop.f32.mrf.mxu0
        %v2969 = vadd.f32 0.0, %v2968
        %v2970 = vpop.f32.mrf.mxu0
        %v2971 = vadd.f32 0.0, %v2970
        %v2972 = vpop.f32.mrf.mxu0
        %v2973 = vadd.f32 0.0, %v2972
        %2974 = vmatprep.mubr.bf16.mxu0 0
        %2975 = vmatmul.mubr.bf16.gmra.mxu0 %v2197
        %v2976 = vpop.f32.mrf.mxu0
        %v2977 = vadd.f32 0.0, %v2976
        %v2978 = vpop.f32.mrf.mxu0
        %v2979 = vadd.f32 0.0, %v2978
        %v2980 = vpop.f32.mrf.mxu0
        %v2981 = vadd.f32 0.0, %v2980
        %v2982 = vpop.f32.mrf.mxu0
        %v2983 = vadd.f32 0.0, %v2982
        %2984 = vmatprep.mubr.bf16.mxu0 0
        %2985 = vmatmul.mubr.bf16.gmra.mxu0 %v2200
        %v2986 = vpop.f32.mrf.mxu0
        %v2987 = vadd.f32 0.0, %v2986
        %v2988 = vpop.f32.mrf.mxu0
        %v2989 = vadd.f32 0.0, %v2988
        %v2990 = vpop.f32.mrf.mxu0
        %v2991 = vadd.f32 0.0, %v2990
        %v2992 = vpop.f32.mrf.mxu0
        %v2993 = vadd.f32 0.0, %v2992
        %2994 = vmatprep.mubr.bf16.mxu0 0
        %2995 = vmatmul.mubr.bf16.gmra.mxu0 %v2203
        %v2996 = vpop.f32.mrf.mxu0
        %v2997 = vadd.f32 0.0, %v2996
        %v2998 = vpop.f32.mrf.mxu0
        %v2999 = vadd.f32 0.0, %v2998
        %v3000 = vpop.f32.mrf.mxu0
        %v3001 = vadd.f32 0.0, %v3000
        %v3002 = vpop.f32.mrf.mxu0
        %v3003 = vadd.f32 0.0, %v3002
        %3004 = vmatprep.mubr.bf16.mxu0 0
        %3005 = vmatmul.mubr.bf16.gmra.mxu0 %v2206
        %v3006 = vpop.f32.mrf.mxu0
        %v3007 = vadd.f32 0.0, %v3006
        %v3008 = vpop.f32.mrf.mxu0
        %v3009 = vadd.f32 0.0, %v3008
        %v3010 = vpop.f32.mrf.mxu0
        %v3011 = vadd.f32 0.0, %v3010
        %v3012 = vpop.f32.mrf.mxu0
        %v3013 = vadd.f32 0.0, %v3012
        %3014 = vmatprep.mubr.bf16.mxu0 0
        %3015 = vmatmul.mubr.bf16.gmra.mxu0 %v2209
        %v3016 = vpop.f32.mrf.mxu0
        %v3017 = vadd.f32 0.0, %v3016
        %v3018 = vpop.f32.mrf.mxu0
        %v3019 = vadd.f32 0.0, %v3018
        %v3020 = vpop.f32.mrf.mxu0
        %v3021 = vadd.f32 0.0, %v3020
        %v3022 = vpop.f32.mrf.mxu0
        %v3023 = vadd.f32 0.0, %v3022
        %3024 = vmatprep.mubr.bf16.mxu0 0
        %3025 = vmatmul.mubr.bf16.gmra.mxu0 %v2212
        %v3026 = vpop.f32.mrf.mxu0
        %v3027 = vadd.f32 0.0, %v3026
        %v3028 = vpop.f32.mrf.mxu0
        %v3029 = vadd.f32 0.0, %v3028
        %v3030 = vpop.f32.mrf.mxu0
        %v3031 = vadd.f32 0.0, %v3030
        %v3032 = vpop.f32.mrf.mxu0
        %v3033 = vadd.f32 0.0, %v3032
        %3034 = vmatprep.mubr.bf16.mxu0 0
        %3035 = vmatmul.mubr.bf16.gmra.mxu0 %v2215
        %v3036 = vpop.f32.mrf.mxu0
        %v3037 = vadd.f32 0.0, %v3036
        %v3038 = vpop.f32.mrf.mxu0
        %v3039 = vadd.f32 0.0, %v3038
        %v3040 = vpop.f32.mrf.mxu0
        %v3041 = vadd.f32 0.0, %v3040
        %v3042 = vpop.f32.mrf.mxu0
        %v3043 = vadd.f32 0.0, %v3042
        %3044 = vmatprep.mubr.bf16.mxu0 0
        %3045 = vmatmul.mubr.bf16.gmra.mxu0 %v2218
        %v3046 = vpop.f32.mrf.mxu0
        %v3047 = vadd.f32 0.0, %v3046
        %v3048 = vpop.f32.mrf.mxu0
        %v3049 = vadd.f32 0.0, %v3048
        %v3050 = vpop.f32.mrf.mxu0
        %v3051 = vadd.f32 0.0, %v3050
        %v3052 = vpop.f32.mrf.mxu0
        %v3053 = vadd.f32 0.0, %v3052
        %3054 = vmatprep.mubr.bf16.mxu0 0
        %3055 = vmatmul.mubr.bf16.gmra.mxu0 %v2221
        %v3056 = vpop.f32.mrf.mxu0
        %v3057 = vadd.f32 0.0, %v3056
        %v3058 = vpop.f32.mrf.mxu0
        %v3059 = vadd.f32 0.0, %v3058
        %v3060 = vpop.f32.mrf.mxu0
        %v3061 = vadd.f32 0.0, %v3060
        %v3062 = vpop.f32.mrf.mxu0
        %v3063 = vadd.f32 0.0, %v3062
        %3064 = vmatprep.mubr.bf16.mxu0 0
        %3065 = vmatmul.mubr.bf16.gmra.mxu0 %v2224
        %v3066 = vpop.f32.mrf.mxu0
        %v3067 = vadd.f32 0.0, %v3066
        %v3068 = vpop.f32.mrf.mxu0
        %v3069 = vadd.f32 0.0, %v3068
        %v3070 = vpop.f32.mrf.mxu0
        %v3071 = vadd.f32 0.0, %v3070
        %v3072 = vpop.f32.mrf.mxu0
        %v3073 = vadd.f32 0.0, %v3072
        %3074 = vmatprep.mubr.bf16.mxu0 0
        %3075 = vmatmul.mubr.bf16.gmra.mxu0 %v2227
        %v3076 = vpop.f32.mrf.mxu0
        %v3077 = vadd.f32 0.0, %v3076
        %v3078 = vpop.f32.mrf.mxu0
        %v3079 = vadd.f32 0.0, %v3078
        %v3080 = vpop.f32.mrf.mxu0
        %v3081 = vadd.f32 0.0, %v3080
        %v3082 = vpop.f32.mrf.mxu0
        %v3083 = vadd.f32 0.0, %v3082
        %3084 = vmatprep.mubr.bf16.mxu0 0
        %3085 = vmatmul.mubr.bf16.gmra.mxu0 %v2230
        %v3086 = vpop.f32.mrf.mxu0
        %v3087 = vadd.f32 0.0, %v3086
        %v3088 = vpop.f32.mrf.mxu0
        %v3089 = vadd.f32 0.0, %v3088
        %v3090 = vpop.f32.mrf.mxu0
        %v3091 = vadd.f32 0.0, %v3090
        %v3092 = vpop.f32.mrf.mxu0
        %v3093 = vadd.f32 0.0, %v3092
        %3094 = vmatprep.mubr.bf16.mxu0 0
        %3095 = vmatmul.mubr.bf16.gmra.mxu0 %v2233
        %v3096 = vpop.f32.mrf.mxu0
        %v3097 = vadd.f32 0.0, %v3096
        %v3098 = vpop.f32.mrf.mxu0
        %v3099 = vadd.f32 0.0, %v3098
        %v3100 = vpop.f32.mrf.mxu0
        %v3101 = vadd.f32 0.0, %v3100
        %v3102 = vpop.f32.mrf.mxu0
        %v3103 = vadd.f32 0.0, %v3102
        %3104 = vmatprep.mubr.bf16.mxu0 0
        %3105 = vmatmul.mubr.bf16.gmra.mxu0 %v2236
        %v3106 = vpop.f32.mrf.mxu0
        %v3107 = vadd.f32 0.0, %v3106
        %v3108 = vpop.f32.mrf.mxu0
        %v3109 = vadd.f32 0.0, %v3108
        %v3110 = vpop.f32.mrf.mxu0
        %v3111 = vadd.f32 0.0, %v3110
        %v3112 = vpop.f32.mrf.mxu0
        %v3113 = vadd.f32 0.0, %v3112
        %3114 = vmatprep.mubr.bf16.mxu0 0
        %3115 = vmatmul.mubr.bf16.gmra.mxu0 %v2239
        %v3116 = vpop.f32.mrf.mxu0
        %v3117 = vadd.f32 0.0, %v3116
        %v3118 = vpop.f32.mrf.mxu0
        %v3119 = vadd.f32 0.0, %v3118
        %v3120 = vpop.f32.mrf.mxu0
        %v3121 = vadd.f32 0.0, %v3120
        %v3122 = vpop.f32.mrf.mxu0
        %v3123 = vadd.f32 0.0, %v3122
        %3124 = vmatprep.mubr.bf16.mxu0 0
        %3125 = vmatmul.mubr.bf16.gmra.mxu0 %v2242
        %v3126 = vpop.f32.mrf.mxu0
        %v3127 = vadd.f32 0.0, %v3126
        %v3128 = vpop.f32.mrf.mxu0
        %v3129 = vadd.f32 0.0, %v3128
        %v3130 = vpop.f32.mrf.mxu0
        %v3131 = vadd.f32 0.0, %v3130
        %v3132 = vpop.f32.mrf.mxu0
        %v3133 = vadd.f32 0.0, %v3132
        %3134 = vmatprep.mubr.bf16.mxu0 0
        %3135 = vmatmul.mubr.bf16.gmra.mxu0 %v2245
        %v3136 = vpop.f32.mrf.mxu0
        %v3137 = vadd.f32 0.0, %v3136
        %v3138 = vpop.f32.mrf.mxu0
        %v3139 = vadd.f32 0.0, %v3138
        %v3140 = vpop.f32.mrf.mxu0
        %v3141 = vadd.f32 0.0, %v3140
        %v3142 = vpop.f32.mrf.mxu0
        %v3143 = vadd.f32 0.0, %v3142
        %3144 = vdwg.mxu0
        %v3145 = vmul.f32 %v2282, %v2827
        %v3146 = vmul.f32 %v2284, %v2829
        %v3147 = vmul.f32 %v2286, %v2831
        %v3148 = vmul.f32 %v2288, %v2833
        %v3149 = vmul.f32 %v2292, %v2837
        %v3150 = vmul.f32 %v2294, %v2839
        %v3151 = vmul.f32 %v2296, %v2841
        %v3152 = vmul.f32 %v2298, %v2843
        %v3153 = vmul.f32 %v2302, %v2847
        %v3154 = vmul.f32 %v2304, %v2849
        %v3155 = vmul.f32 %v2306, %v2851
        %v3156 = vmul.f32 %v2308, %v2853
        %v3157 = vmul.f32 %v2312, %v2857
        %v3158 = vmul.f32 %v2314, %v2859
        %v3159 = vmul.f32 %v2316, %v2861
        %v3160 = vmul.f32 %v2318, %v2863
        %v3161 = vmul.f32 %v2322, %v2867
        %v3162 = vmul.f32 %v2324, %v2869
        %v3163 = vmul.f32 %v2326, %v2871
        %v3164 = vmul.f32 %v2328, %v2873
        %v3165 = vmul.f32 %v2332, %v2877
        %v3166 = vmul.f32 %v2334, %v2879
        %v3167 = vmul.f32 %v2336, %v2881
        %v3168 = vmul.f32 %v2338, %v2883
        %v3169 = vmul.f32 %v2342, %v2887
        %v3170 = vmul.f32 %v2344, %v2889
        %v3171 = vmul.f32 %v2346, %v2891
        %v3172 = vmul.f32 %v2348, %v2893
        %v3173 = vmul.f32 %v2352, %v2897
        %v3174 = vmul.f32 %v2354, %v2899
        %v3175 = vmul.f32 %v2356, %v2901
        %v3176 = vmul.f32 %v2358, %v2903
        %v3177 = vmul.f32 %v2362, %v2907
        %v3178 = vmul.f32 %v2364, %v2909
        %v3179 = vmul.f32 %v2366, %v2911
        %v3180 = vmul.f32 %v2368, %v2913
        %v3181 = vmul.f32 %v2372, %v2917
        %v3182 = vmul.f32 %v2374, %v2919
        %v3183 = vmul.f32 %v2376, %v2921
        %v3184 = vmul.f32 %v2378, %v2923
        %v3185 = vmul.f32 %v2382, %v2927
        %v3186 = vmul.f32 %v2384, %v2929
        %v3187 = vmul.f32 %v2386, %v2931
        %v3188 = vmul.f32 %v2388, %v2933
        %v3189 = vmul.f32 %v2392, %v2937
        %v3190 = vmul.f32 %v2394, %v2939
        %v3191 = vmul.f32 %v2396, %v2941
        %v3192 = vmul.f32 %v2398, %v2943
        %v3193 = vmul.f32 %v2402, %v2947
        %v3194 = vmul.f32 %v2404, %v2949
        %v3195 = vmul.f32 %v2406, %v2951
        %v3196 = vmul.f32 %v2408, %v2953
        %v3197 = vmul.f32 %v2412, %v2957
        %v3198 = vmul.f32 %v2414, %v2959
        %v3199 = vmul.f32 %v2416, %v2961
        %v3200 = vmul.f32 %v2418, %v2963
        %v3201 = vmul.f32 %v2422, %v2967
        %v3202 = vmul.f32 %v2424, %v2969
        %v3203 = vmul.f32 %v2426, %v2971
        %v3204 = vmul.f32 %v2428, %v2973
        %v3205 = vmul.f32 %v2432, %v2977
        %v3206 = vmul.f32 %v2434, %v2979
        %v3207 = vmul.f32 %v2436, %v2981
        %v3208 = vmul.f32 %v2438, %v2983
        %v3209 = vmul.f32 %v2538, %v2987
        %v3210 = vmul.f32 %v2540, %v2989
        %v3211 = vmul.f32 %v2542, %v2991
        %v3212 = vmul.f32 %v2544, %v2993
        %v3213 = vmul.f32 %v2548, %v2997
        %v3214 = vmul.f32 %v2550, %v2999
        %v3215 = vmul.f32 %v2552, %v3001
        %v3216 = vmul.f32 %v2554, %v3003
        %v3217 = vmul.f32 %v2558, %v3007
        %v3218 = vmul.f32 %v2560, %v3009
        %v3219 = vmul.f32 %v2562, %v3011
        %v3220 = vmul.f32 %v2564, %v3013
        %v3221 = vmul.f32 %v2568, %v3017
        %v3222 = vmul.f32 %v2570, %v3019
        %v3223 = vmul.f32 %v2572, %v3021
        %v3224 = vmul.f32 %v2574, %v3023
        %v3225 = vmul.f32 %v2578, %v3027
        %v3226 = vmul.f32 %v2580, %v3029
        %v3227 = vmul.f32 %v2582, %v3031
        %v3228 = vmul.f32 %v2584, %v3033
        %v3229 = vmul.f32 %v2588, %v3037
        %v3230 = vmul.f32 %v2590, %v3039
        %v3231 = vmul.f32 %v2592, %v3041
        %v3232 = vmul.f32 %v2594, %v3043
        %v3233 = vmul.f32 %v2598, %v3047
        %v3234 = vmul.f32 %v2600, %v3049
        %v3235 = vmul.f32 %v2602, %v3051
        %v3236 = vmul.f32 %v2604, %v3053
        %v3237 = vmul.f32 %v2608, %v3057
        %v3238 = vmul.f32 %v2610, %v3059
        %v3239 = vmul.f32 %v2612, %v3061
        %v3240 = vmul.f32 %v2614, %v3063
        %v3241 = vmul.f32 %v2618, %v3067
        %v3242 = vmul.f32 %v2620, %v3069
        %v3243 = vmul.f32 %v2622, %v3071
        %v3244 = vmul.f32 %v2624, %v3073
        %v3245 = vmul.f32 %v2628, %v3077
        %v3246 = vmul.f32 %v2630, %v3079
        %v3247 = vmul.f32 %v2632, %v3081
        %v3248 = vmul.f32 %v2634, %v3083
        %v3249 = vmul.f32 %v2638, %v3087
        %v3250 = vmul.f32 %v2640, %v3089
        %v3251 = vmul.f32 %v2642, %v3091
        %v3252 = vmul.f32 %v2644, %v3093
        %v3253 = vmul.f32 %v2648, %v3097
        %v3254 = vmul.f32 %v2650, %v3099
        %v3255 = vmul.f32 %v2652, %v3101
        %v3256 = vmul.f32 %v2654, %v3103
        %v3257 = vmul.f32 %v2658, %v3107
        %v3258 = vmul.f32 %v2660, %v3109
        %v3259 = vmul.f32 %v2662, %v3111
        %v3260 = vmul.f32 %v2664, %v3113
        %v3261 = vmul.f32 %v2668, %v3117
        %v3262 = vmul.f32 %v2670, %v3119
        %v3263 = vmul.f32 %v2672, %v3121
        %v3264 = vmul.f32 %v2674, %v3123
        %v3265 = vmul.f32 %v2678, %v3127
        %v3266 = vmul.f32 %v2680, %v3129
        %v3267 = vmul.f32 %v2682, %v3131
        %v3268 = vmul.f32 %v2684, %v3133
        %v3269 = vmul.f32 %v2688, %v3137
        %v3270 = vmul.f32 %v2690, %v3139
        %v3271 = vmul.f32 %v2692, %v3141
        %v3272 = vmul.f32 %v2694, %v3143
        %v3273 = vpack.c.bf16 %v3147, %v3145
        %v3274 = vpack.c.bf16 %v3148, %v3146
        %v3275 = vpack.c.bf16 %v3211, %v3209
        %v3276 = vpack.c.bf16 %v3212, %v3210
        %v3277 = vpack.c.bf16 %v3151, %v3149
        %v3278 = vpack.c.bf16 %v3152, %v3150
        %v3279 = vpack.c.bf16 %v3215, %v3213
        %v3280 = vpack.c.bf16 %v3216, %v3214
        %v3281 = vpack.c.bf16 %v3155, %v3153
        %v3282 = vpack.c.bf16 %v3156, %v3154
        %v3283 = vpack.c.bf16 %v3219, %v3217
        %v3284 = vpack.c.bf16 %v3220, %v3218
        %v3285 = vpack.c.bf16 %v3159, %v3157
        %v3286 = vpack.c.bf16 %v3160, %v3158
        %v3287 = vpack.c.bf16 %v3223, %v3221
        %v3288 = vpack.c.bf16 %v3224, %v3222
        %v3289 = vpack.c.bf16 %v3163, %v3161
        %v3290 = vpack.c.bf16 %v3164, %v3162
        %v3291 = vpack.c.bf16 %v3227, %v3225
        %v3292 = vpack.c.bf16 %v3228, %v3226
        %v3293 = vpack.c.bf16 %v3167, %v3165
        %v3294 = vpack.c.bf16 %v3168, %v3166
        %v3295 = vpack.c.bf16 %v3231, %v3229
        %v3296 = vpack.c.bf16 %v3232, %v3230
        %v3297 = vpack.c.bf16 %v3171, %v3169
        %v3298 = vpack.c.bf16 %v3172, %v3170
        %v3299 = vpack.c.bf16 %v3235, %v3233
        %v3300 = vpack.c.bf16 %v3236, %v3234
        %v3301 = vpack.c.bf16 %v3175, %v3173
        %v3302 = vpack.c.bf16 %v3176, %v3174
        %v3303 = vpack.c.bf16 %v3239, %v3237
        %v3304 = vpack.c.bf16 %v3240, %v3238
        %v3305 = vpack.c.bf16 %v3179, %v3177
        %v3306 = vpack.c.bf16 %v3180, %v3178
        %v3307 = vpack.c.bf16 %v3243, %v3241
        %v3308 = vpack.c.bf16 %v3244, %v3242
        %v3309 = vpack.c.bf16 %v3183, %v3181
        %v3310 = vpack.c.bf16 %v3184, %v3182
        %v3311 = vpack.c.bf16 %v3247, %v3245
        %v3312 = vpack.c.bf16 %v3248, %v3246
        %v3313 = vpack.c.bf16 %v3187, %v3185
        %v3314 = vpack.c.bf16 %v3188, %v3186
        %v3315 = vpack.c.bf16 %v3251, %v3249
        %v3316 = vpack.c.bf16 %v3252, %v3250
        %v3317 = vpack.c.bf16 %v3191, %v3189
        %v3318 = vpack.c.bf16 %v3192, %v3190
        %v3319 = vpack.c.bf16 %v3255, %v3253
        %v3320 = vpack.c.bf16 %v3256, %v3254
        %v3321 = vpack.c.bf16 %v3195, %v3193
        %v3322 = vpack.c.bf16 %v3196, %v3194
        %v3323 = vpack.c.bf16 %v3259, %v3257
        %v3324 = vpack.c.bf16 %v3260, %v3258
        %v3325 = vpack.c.bf16 %v3199, %v3197
        %v3326 = vpack.c.bf16 %v3200, %v3198
        %v3327 = vpack.c.bf16 %v3263, %v3261
        %v3328 = vpack.c.bf16 %v3264, %v3262
        %v3329 = vpack.c.bf16 %v3203, %v3201
        %v3330 = vpack.c.bf16 %v3204, %v3202
        %v3331 = vpack.c.bf16 %v3267, %v3265
        %v3332 = vpack.c.bf16 %v3268, %v3266
        %v3333 = vpack.c.bf16 %v3207, %v3205
        %v3334 = vpack.c.bf16 %v3208, %v3206
        %v3335 = vpack.c.bf16 %v3271, %v3269
        %v3336 = vpack.c.bf16 %v3272, %v3270
        %v3337 = vld [vmem:[%s8] sm:$0xf]
        %v3338 = vld [vmem:[%s8 + $0x4] sm:$0xf]
        %v3339 = vld [vmem:[%s8 + $0x8] sm:$0xf]
        %v3340 = vld [vmem:[%s8 + $0xc] sm:$0xf]
        %v3341 = vld [vmem:[%s8 + $0x10] sm:$0xf]
        %v3342 = vld [vmem:[%s8 + $0x14] sm:$0xf]
        %v3343 = vld [vmem:[%s8 + $0x18] sm:$0xf]
        %v3344 = vld [vmem:[%s8 + $0x1c] sm:$0xf]
        %v3345 = vld [vmem:[%s8 + $0x20] sm:$0xf]
        %v3346 = vld [vmem:[%s8 + $0x24] sm:$0xf]
        %v3347 = vld [vmem:[%s8 + $0x28] sm:$0xf]
        %v3348 = vld [vmem:[%s8 + $0x2c] sm:$0xf]
        %v3349 = vld [vmem:[%s8 + $0x30] sm:$0xf]
        %v3350 = vld [vmem:[%s8 + $0x34] sm:$0xf]
        %v3351 = vld [vmem:[%s8 + $0x38] sm:$0xf]
        %v3352 = vld [vmem:[%s8 + $0x3c] sm:$0xf]
        %v3353 = vld [vmem:[%s8 + $0x40] sm:$0xf]
        %v3354 = vld [vmem:[%s8 + $0x44] sm:$0xf]
        %v3355 = vld [vmem:[%s8 + $0x48] sm:$0xf]
        %v3356 = vld [vmem:[%s8 + $0x4c] sm:$0xf]
        %v3357 = vld [vmem:[%s8 + $0x50] sm:$0xf]
        %v3358 = vld [vmem:[%s8 + $0x54] sm:$0xf]
        %v3359 = vld [vmem:[%s8 + $0x58] sm:$0xf]
        %v3360 = vld [vmem:[%s8 + $0x5c] sm:$0xf]
        %v3361 = vld [vmem:[%s8 + $0x60] sm:$0xf]
        %v3362 = vld [vmem:[%s8 + $0x64] sm:$0xf]
        %v3363 = vld [vmem:[%s8 + $0x68] sm:$0xf]
        %v3364 = vld [vmem:[%s8 + $0x6c] sm:$0xf]
        %v3365 = vld [vmem:[%s8 + $0x70] sm:$0xf]
        %v3366 = vld [vmem:[%s8 + $0x74] sm:$0xf]
        %v3367 = vld [vmem:[%s8 + $0x78] sm:$0xf]
        %v3368 = vld [vmem:[%s8 + $0x7c] sm:$0xf]
        %v3369 = vld [vmem:[%s8 + $0x80] sm:$0xf]
        %v3370 = vld [vmem:[%s8 + $0x84] sm:$0xf]
        %v3371 = vld [vmem:[%s8 + $0x88] sm:$0xf]
        %v3372 = vld [vmem:[%s8 + $0x8c] sm:$0xf]
        %v3373 = vld [vmem:[%s8 + $0x90] sm:$0xf]
        %v3374 = vld [vmem:[%s8 + $0x94] sm:$0xf]
        %v3375 = vld [vmem:[%s8 + $0x98] sm:$0xf]
        %v3376 = vld [vmem:[%s8 + $0x9c] sm:$0xf]
        %v3377 = vld [vmem:[%s8 + $0xa0] sm:$0xf]
        %v3378 = vld [vmem:[%s8 + $0xa4] sm:$0xf]
        %v3379 = vld [vmem:[%s8 + $0xa8] sm:$0xf]
        %v3380 = vld [vmem:[%s8 + $0xac] sm:$0xf]
        %v3381 = vld [vmem:[%s8 + $0xb0] sm:$0xf]
        %v3382 = vld [vmem:[%s8 + $0xb4] sm:$0xf]
        %v3383 = vld [vmem:[%s8 + $0xb8] sm:$0xf]
        %v3384 = vld [vmem:[%s8 + $0xbc] sm:$0xf]
        %v3385 = vld [vmem:[%s8 + $0xc0] sm:$0xf]
        %v3386 = vld [vmem:[%s8 + $0xc4] sm:$0xf]
        %v3387 = vld [vmem:[%s8 + $0xc8] sm:$0xf]
        %v3388 = vld [vmem:[%s8 + $0xcc] sm:$0xf]
        %v3389 = vld [vmem:[%s8 + $0xd0] sm:$0xf]
        %v3390 = vld [vmem:[%s8 + $0xd4] sm:$0xf]
        %v3391 = vld [vmem:[%s8 + $0xd8] sm:$0xf]
        %v3392 = vld [vmem:[%s8 + $0xdc] sm:$0xf]
        %v3393 = vld [vmem:[%s8 + $0xe0] sm:$0xf]
        %v3394 = vld [vmem:[%s8 + $0xe4] sm:$0xf]
        %v3395 = vld [vmem:[%s8 + $0xe8] sm:$0xf]
        %v3396 = vld [vmem:[%s8 + $0xec] sm:$0xf]
        %v3397 = vld [vmem:[%s8 + $0xf0] sm:$0xf]
        %v3398 = vld [vmem:[%s8 + $0xf4] sm:$0xf]
        %v3399 = vld [vmem:[%s8 + $0xf8] sm:$0xf]
        %v3400 = vld [vmem:[%s8 + $0xfc] sm:$0xf]
        %v3401 = vld [vmem:[%s9] sm:$0x1]
        %v3403 = vlaneseq
        %v3404 = vshrl.u32 %v3403, 7
        %v3405 = vsub.s32 0, %v3404
        %v3406 = vrot.slane %v3401, %v3405
        %v3472 = vunpack.c.l.b16 %v3337
        %v3473 = vunpack.c.l.b16 %v3338
        %v3474 = vunpack.c.l.b16 %v3339
        %v3475 = vunpack.c.l.b16 %v3340
        %v3476 = vunpack.c.l.b16 %v3341
        %v3477 = vunpack.c.l.b16 %v3342
        %v3478 = vunpack.c.l.b16 %v3343
        %v3479 = vunpack.c.l.b16 %v3344
        %v3480 = vunpack.c.l.b16 %v3345
        %v3481 = vunpack.c.l.b16 %v3346
        %v3482 = vunpack.c.l.b16 %v3347
        %v3483 = vunpack.c.l.b16 %v3348
        %v3484 = vunpack.c.l.b16 %v3349
        %v3485 = vunpack.c.l.b16 %v3350
        %v3486 = vunpack.c.l.b16 %v3351
        %v3487 = vunpack.c.l.b16 %v3352
        %v3488 = vunpack.c.l.b16 %v3353
        %v3489 = vunpack.c.l.b16 %v3354
        %v3490 = vunpack.c.l.b16 %v3355
        %v3491 = vunpack.c.l.b16 %v3356
        %v3492 = vunpack.c.l.b16 %v3357
        %v3493 = vunpack.c.l.b16 %v3358
        %v3494 = vunpack.c.l.b16 %v3359
        %v3495 = vunpack.c.l.b16 %v3360
        %v3496 = vunpack.c.l.b16 %v3361
        %v3497 = vunpack.c.l.b16 %v3362
        %v3498 = vunpack.c.l.b16 %v3363
        %v3499 = vunpack.c.l.b16 %v3364
        %v3500 = vunpack.c.l.b16 %v3365
        %v3501 = vunpack.c.l.b16 %v3366
        %v3502 = vunpack.c.l.b16 %v3367
        %v3503 = vunpack.c.l.b16 %v3368
        %v3504 = vunpack.c.l.b16 %v3369
        %v3505 = vunpack.c.l.b16 %v3370
        %v3506 = vunpack.c.l.b16 %v3371
        %v3507 = vunpack.c.l.b16 %v3372
        %v3508 = vunpack.c.l.b16 %v3373
        %v3509 = vunpack.c.l.b16 %v3374
        %v3510 = vunpack.c.l.b16 %v3375
        %v3511 = vunpack.c.l.b16 %v3376
        %v3512 = vunpack.c.l.b16 %v3377
        %v3513 = vunpack.c.l.b16 %v3378
        %v3514 = vunpack.c.l.b16 %v3379
        %v3515 = vunpack.c.l.b16 %v3380
        %v3516 = vunpack.c.l.b16 %v3381
        %v3517 = vunpack.c.l.b16 %v3382
        %v3518 = vunpack.c.l.b16 %v3383
        %v3519 = vunpack.c.l.b16 %v3384
        %v3520 = vunpack.c.l.b16 %v3385
        %v3521 = vunpack.c.l.b16 %v3386
        %v3522 = vunpack.c.l.b16 %v3387
        %v3523 = vunpack.c.l.b16 %v3388
        %v3524 = vunpack.c.l.b16 %v3389
        %v3525 = vunpack.c.l.b16 %v3390
        %v3526 = vunpack.c.l.b16 %v3391
        %v3527 = vunpack.c.l.b16 %v3392
        %v3528 = vunpack.c.l.b16 %v3393
        %v3529 = vunpack.c.l.b16 %v3394
        %v3530 = vunpack.c.l.b16 %v3395
        %v3531 = vunpack.c.l.b16 %v3396
        %v3532 = vunpack.c.l.b16 %v3397
        %v3533 = vunpack.c.l.b16 %v3398
        %v3534 = vunpack.c.l.b16 %v3399
        %v3535 = vunpack.c.l.b16 %v3400
        %v3536 = vpack.c.b16 %v3473, %v3472
        %v3537 = vpack.c.b16 %v3475, %v3474
        %v3538 = vpack.c.b16 %v3477, %v3476
        %v3539 = vpack.c.b16 %v3479, %v3478
        %v3540 = vpack.c.b16 %v3481, %v3480
        %v3541 = vpack.c.b16 %v3483, %v3482
        %v3542 = vpack.c.b16 %v3485, %v3484
        %v3543 = vpack.c.b16 %v3487, %v3486
        %v3544 = vpack.c.b16 %v3489, %v3488
        %v3545 = vpack.c.b16 %v3491, %v3490
        %v3546 = vpack.c.b16 %v3493, %v3492
        %v3547 = vpack.c.b16 %v3495, %v3494
        %v3548 = vpack.c.b16 %v3497, %v3496
        %v3549 = vpack.c.b16 %v3499, %v3498
        %v3550 = vpack.c.b16 %v3501, %v3500
        %v3551 = vpack.c.b16 %v3503, %v3502
        %v3552 = vpack.c.b16 %v3505, %v3504
        %v3553 = vpack.c.b16 %v3507, %v3506
        %v3554 = vpack.c.b16 %v3509, %v3508
        %v3555 = vpack.c.b16 %v3511, %v3510
        %v3556 = vpack.c.b16 %v3513, %v3512
        %v3557 = vpack.c.b16 %v3515, %v3514
        %v3558 = vpack.c.b16 %v3517, %v3516
        %v3559 = vpack.c.b16 %v3519, %v3518
        %v3560 = vpack.c.b16 %v3521, %v3520
        %v3561 = vpack.c.b16 %v3523, %v3522
        %v3562 = vpack.c.b16 %v3525, %v3524
        %v3563 = vpack.c.b16 %v3527, %v3526
        %v3564 = vpack.c.b16 %v3529, %v3528
        %v3565 = vpack.c.b16 %v3531, %v3530
        %v3566 = vpack.c.b16 %v3533, %v3532
        %v3567 = vpack.c.b16 %v3535, %v3534
        %3600 = vmatprep.subr.bf16.mxu0 0
        %3601 = vmatpush1.bf16.msra.mxu0 %v3543
        %3602 = vmatprep.subr.bf16.mxu0 0
        %3603 = vmatpush1.bf16.msra.mxu0 %v3542
        %3604 = vmatprep.subr.bf16.mxu0 0
        %3605 = vmatpush1.bf16.msra.mxu0 %v3541
        %3606 = vmatprep.subr.bf16.mxu0 0
        %3607 = vmatpush1.bf16.msra.mxu0 %v3540
        %3608 = vmatprep.subr.bf16.mxu0 0
        %3609 = vmatpush1.bf16.msra.mxu0 %v3539
        %3610 = vmatprep.subr.bf16.mxu0 0
        %3611 = vmatpush1.bf16.msra.mxu0 %v3538
        %3612 = vmatprep.subr.bf16.mxu0 0
        %3613 = vmatpush1.bf16.msra.mxu0 %v3537
        %3614 = vmatprep.subr.bf16.mxu0 0
        %3615 = vmatpush1.bf16.msra.mxu0 %v3536
        %3616 = vmatprep.subr.bf16.mxu0 0
        %3617 = vmatpush2.bf16.msra.mxu0 %v3551
        %3618 = vmatprep.subr.bf16.mxu0 0
        %3619 = vmatpush2.bf16.msra.mxu0 %v3550
        %3620 = vmatprep.subr.bf16.mxu0 0
        %3621 = vmatpush2.bf16.msra.mxu0 %v3549
        %3622 = vmatprep.subr.bf16.mxu0 0
        %3623 = vmatpush2.bf16.msra.mxu0 %v3548
        %3624 = vmatprep.subr.bf16.mxu0 0
        %3625 = vmatpush2.bf16.msra.mxu0 %v3547
        %3626 = vmatprep.subr.bf16.mxu0 0
        %3627 = vmatpush2.bf16.msra.mxu0 %v3546
        %3628 = vmatprep.subr.bf16.mxu0 0
        %3629 = vmatpush2.bf16.msra.mxu0 %v3545
        %3630 = vmatprep.subr.bf16.mxu0 0
        %3631 = vmatpush2.bf16.msra.mxu0 %v3544
        %3632 = vmatprep.mubr.bf16.mxu0 %v3274
        %3633 = vmatmul.mubr.bf16.gmra.mxu0 %v3273
        %v3634 = vpop.f32.mrf.mxu0
        %v3635 = vadd.f32 %v3406, %v3634
        %v3636 = vpop.f32.mrf.mxu0
        %v3637 = vpop.f32.mrf.mxu0
        %v3638 = vadd.f32 %v3406, %v3637
        %v3639 = vpop.f32.mrf.mxu0
        %3640 = vmatprep.mubr.bf16.mxu0 %v3278
        %3641 = vmatmul.mubr.bf16.gmra.mxu0 %v3277
        %v3642 = vpop.f32.mrf.mxu0
        %v3643 = vadd.f32 %v3406, %v3642
        %v3644 = vpop.f32.mrf.mxu0
        %v3645 = vpop.f32.mrf.mxu0
        %v3646 = vadd.f32 %v3406, %v3645
        %v3647 = vpop.f32.mrf.mxu0
        %3648 = vmatprep.mubr.bf16.mxu0 %v3282
        %3649 = vmatmul.mubr.bf16.gmra.mxu0 %v3281
        %v3650 = vpop.f32.mrf.mxu0
        %v3651 = vadd.f32 %v3406, %v3650
        %v3652 = vpop.f32.mrf.mxu0
        %v3653 = vpop.f32.mrf.mxu0
        %v3654 = vadd.f32 %v3406, %v3653
        %v3655 = vpop.f32.mrf.mxu0
        %3656 = vmatprep.mubr.bf16.mxu0 %v3286
        %3657 = vmatmul.mubr.bf16.gmra.mxu0 %v3285
        %v3658 = vpop.f32.mrf.mxu0
        %v3659 = vadd.f32 %v3406, %v3658
        %v3660 = vpop.f32.mrf.mxu0
        %v3661 = vpop.f32.mrf.mxu0
        %v3662 = vadd.f32 %v3406, %v3661
        %v3663 = vpop.f32.mrf.mxu0
        %3664 = vmatprep.mubr.bf16.mxu0 %v3290
        %3665 = vmatmul.mubr.bf16.gmra.mxu0 %v3289
        %v3666 = vpop.f32.mrf.mxu0
        %v3667 = vadd.f32 %v3406, %v3666
        %v3668 = vpop.f32.mrf.mxu0
        %v3669 = vpop.f32.mrf.mxu0
        %v3670 = vadd.f32 %v3406, %v3669
        %v3671 = vpop.f32.mrf.mxu0
        %3672 = vmatprep.mubr.bf16.mxu0 %v3294
        %3673 = vmatmul.mubr.bf16.gmra.mxu0 %v3293
        %v3674 = vpop.f32.mrf.mxu0
        %v3675 = vadd.f32 %v3406, %v3674
        %v3676 = vpop.f32.mrf.mxu0
        %v3677 = vpop.f32.mrf.mxu0
        %v3678 = vadd.f32 %v3406, %v3677
        %v3679 = vpop.f32.mrf.mxu0
        %3680 = vmatprep.mubr.bf16.mxu0 %v3298
        %3681 = vmatmul.mubr.bf16.gmra.mxu0 %v3297
        %v3682 = vpop.f32.mrf.mxu0
        %v3683 = vadd.f32 %v3406, %v3682
        %v3684 = vpop.f32.mrf.mxu0
        %v3685 = vpop.f32.mrf.mxu0
        %v3686 = vadd.f32 %v3406, %v3685
        %v3687 = vpop.f32.mrf.mxu0
        %3688 = vmatprep.mubr.bf16.mxu0 %v3302
        %3689 = vmatmul.mubr.bf16.gmra.mxu0 %v3301
        %v3690 = vpop.f32.mrf.mxu0
        %v3691 = vadd.f32 %v3406, %v3690
        %v3692 = vpop.f32.mrf.mxu0
        %v3693 = vpop.f32.mrf.mxu0
        %v3694 = vadd.f32 %v3406, %v3693
        %v3695 = vpop.f32.mrf.mxu0
        %3696 = vmatprep.mubr.bf16.mxu0 %v3306
        %3697 = vmatmul.mubr.bf16.gmra.mxu0 %v3305
        %v3698 = vpop.f32.mrf.mxu0
        %v3699 = vadd.f32 %v3406, %v3698
        %v3700 = vpop.f32.mrf.mxu0
        %v3701 = vpop.f32.mrf.mxu0
        %v3702 = vadd.f32 %v3406, %v3701
        %v3703 = vpop.f32.mrf.mxu0
        %3704 = vmatprep.mubr.bf16.mxu0 %v3310
        %3705 = vmatmul.mubr.bf16.gmra.mxu0 %v3309
        %v3706 = vpop.f32.mrf.mxu0
        %v3707 = vadd.f32 %v3406, %v3706
        %v3708 = vpop.f32.mrf.mxu0
        %v3709 = vpop.f32.mrf.mxu0
        %v3710 = vadd.f32 %v3406, %v3709
        %v3711 = vpop.f32.mrf.mxu0
        %3712 = vmatprep.mubr.bf16.mxu0 %v3314
        %3713 = vmatmul.mubr.bf16.gmra.mxu0 %v3313
        %v3714 = vpop.f32.mrf.mxu0
        %v3715 = vadd.f32 %v3406, %v3714
        %v3716 = vpop.f32.mrf.mxu0
        %v3717 = vpop.f32.mrf.mxu0
        %v3718 = vadd.f32 %v3406, %v3717
        %v3719 = vpop.f32.mrf.mxu0
        %3720 = vmatprep.mubr.bf16.mxu0 %v3318
        %3721 = vmatmul.mubr.bf16.gmra.mxu0 %v3317
        %v3722 = vpop.f32.mrf.mxu0
        %v3723 = vadd.f32 %v3406, %v3722
        %v3724 = vpop.f32.mrf.mxu0
        %v3725 = vpop.f32.mrf.mxu0
        %v3726 = vadd.f32 %v3406, %v3725
        %v3727 = vpop.f32.mrf.mxu0
        %3728 = vmatprep.mubr.bf16.mxu0 %v3322
        %3729 = vmatmul.mubr.bf16.gmra.mxu0 %v3321
        %v3730 = vpop.f32.mrf.mxu0
        %v3731 = vadd.f32 %v3406, %v3730
        %v3732 = vpop.f32.mrf.mxu0
        %v3733 = vpop.f32.mrf.mxu0
        %v3734 = vadd.f32 %v3406, %v3733
        %v3735 = vpop.f32.mrf.mxu0
        %3736 = vmatprep.mubr.bf16.mxu0 %v3326
        %3737 = vmatmul.mubr.bf16.gmra.mxu0 %v3325
        %v3738 = vpop.f32.mrf.mxu0
        %v3739 = vadd.f32 %v3406, %v3738
        %v3740 = vpop.f32.mrf.mxu0
        %v3741 = vpop.f32.mrf.mxu0
        %v3742 = vadd.f32 %v3406, %v3741
        %v3743 = vpop.f32.mrf.mxu0
        %3744 = vmatprep.mubr.bf16.mxu0 %v3330
        %3745 = vmatmul.mubr.bf16.gmra.mxu0 %v3329
        %v3746 = vpop.f32.mrf.mxu0
        %v3747 = vadd.f32 %v3406, %v3746
        %v3748 = vpop.f32.mrf.mxu0
        %v3749 = vpop.f32.mrf.mxu0
        %v3750 = vadd.f32 %v3406, %v3749
        %v3751 = vpop.f32.mrf.mxu0
        %3752 = vmatprep.mubr.bf16.mxu0 %v3334
        %3753 = vmatmul.mubr.bf16.gmra.mxu0 %v3333
        %v3754 = vpop.f32.mrf.mxu0
        %v3755 = vadd.f32 %v3406, %v3754
        %v3756 = vpop.f32.mrf.mxu0
        %v3757 = vpop.f32.mrf.mxu0
        %v3758 = vadd.f32 %v3406, %v3757
        %v3759 = vpop.f32.mrf.mxu0
        %3760 = vdwg.mxu0
        %3761 = vmatprep.subr.bf16.mxu0 0
        %3762 = vmatpush1.bf16.msra.mxu0 %v3559
        %3763 = vmatprep.subr.bf16.mxu0 0
        %3764 = vmatpush1.bf16.msra.mxu0 %v3558
        %3765 = vmatprep.subr.bf16.mxu0 0
        %3766 = vmatpush1.bf16.msra.mxu0 %v3557
        %3767 = vmatprep.subr.bf16.mxu0 0
        %3768 = vmatpush1.bf16.msra.mxu0 %v3556
        %3769 = vmatprep.subr.bf16.mxu0 0
        %3770 = vmatpush1.bf16.msra.mxu0 %v3555
        %3771 = vmatprep.subr.bf16.mxu0 0
        %3772 = vmatpush1.bf16.msra.mxu0 %v3554
        %3773 = vmatprep.subr.bf16.mxu0 0
        %3774 = vmatpush1.bf16.msra.mxu0 %v3553
        %3775 = vmatprep.subr.bf16.mxu0 0
        %3776 = vmatpush1.bf16.msra.mxu0 %v3552
        %3777 = vmatprep.subr.bf16.mxu0 0
        %3778 = vmatpush2.bf16.msra.mxu0 %v3567
        %3779 = vmatprep.subr.bf16.mxu0 0
        %3780 = vmatpush2.bf16.msra.mxu0 %v3566
        %3781 = vmatprep.subr.bf16.mxu0 0
        %3782 = vmatpush2.bf16.msra.mxu0 %v3565
        %3783 = vmatprep.subr.bf16.mxu0 0
        %3784 = vmatpush2.bf16.msra.mxu0 %v3564
        %3785 = vmatprep.subr.bf16.mxu0 0
        %3786 = vmatpush2.bf16.msra.mxu0 %v3563
        %3787 = vmatprep.subr.bf16.mxu0 0
        %3788 = vmatpush2.bf16.msra.mxu0 %v3562
        %3789 = vmatprep.subr.bf16.mxu0 0
        %3790 = vmatpush2.bf16.msra.mxu0 %v3561
        %3791 = vmatprep.subr.bf16.mxu0 0
        %3792 = vmatpush2.bf16.msra.mxu0 %v3560
        %3793 = vmatprep.mubr.bf16.mxu0 %v3276
        %3794 = vmatmul.mubr.bf16.gmra.mxu0 %v3275
        %v3795 = vpop.f32.mrf.mxu0
        %v3796 = vadd.f32 %v3635, %v3795
        %v3797 = vpop.f32.mrf.mxu0
        %v3798 = vpop.f32.mrf.mxu0
        %v3799 = vadd.f32 %v3638, %v3798
        %v3800 = vpop.f32.mrf.mxu0
        %3801 = vmatprep.mubr.bf16.mxu0 %v3280
        %3802 = vmatmul.mubr.bf16.gmra.mxu0 %v3279
        %v3803 = vpop.f32.mrf.mxu0
        %v3804 = vadd.f32 %v3643, %v3803
        %v3805 = vpop.f32.mrf.mxu0
        %v3806 = vpop.f32.mrf.mxu0
        %v3807 = vadd.f32 %v3646, %v3806
        %v3808 = vpop.f32.mrf.mxu0
        %3809 = vmatprep.mubr.bf16.mxu0 %v3284
        %3810 = vmatmul.mubr.bf16.gmra.mxu0 %v3283
        %v3811 = vpop.f32.mrf.mxu0
        %v3812 = vadd.f32 %v3651, %v3811
        %v3813 = vpop.f32.mrf.mxu0
        %v3814 = vpop.f32.mrf.mxu0
        %v3815 = vadd.f32 %v3654, %v3814
        %v3816 = vpop.f32.mrf.mxu0
        %3817 = vmatprep.mubr.bf16.mxu0 %v3288
        %3818 = vmatmul.mubr.bf16.gmra.mxu0 %v3287
        %v3819 = vpop.f32.mrf.mxu0
        %v3820 = vadd.f32 %v3659, %v3819
        %v3821 = vpop.f32.mrf.mxu0
        %v3822 = vpop.f32.mrf.mxu0
        %v3823 = vadd.f32 %v3662, %v3822
        %v3824 = vpop.f32.mrf.mxu0
        %3825 = vmatprep.mubr.bf16.mxu0 %v3292
        %3826 = vmatmul.mubr.bf16.gmra.mxu0 %v3291
        %v3827 = vpop.f32.mrf.mxu0
        %v3828 = vadd.f32 %v3667, %v3827
        %v3829 = vpop.f32.mrf.mxu0
        %v3830 = vpop.f32.mrf.mxu0
        %v3831 = vadd.f32 %v3670, %v3830
        %v3832 = vpop.f32.mrf.mxu0
        %3833 = vmatprep.mubr.bf16.mxu0 %v3296
        %3834 = vmatmul.mubr.bf16.gmra.mxu0 %v3295
        %v3835 = vpop.f32.mrf.mxu0
        %v3836 = vadd.f32 %v3675, %v3835
        %v3837 = vpop.f32.mrf.mxu0
        %v3838 = vpop.f32.mrf.mxu0
        %v3839 = vadd.f32 %v3678, %v3838
        %v3840 = vpop.f32.mrf.mxu0
        %3841 = vmatprep.mubr.bf16.mxu0 %v3300
        %3842 = vmatmul.mubr.bf16.gmra.mxu0 %v3299
        %v3843 = vpop.f32.mrf.mxu0
        %v3844 = vadd.f32 %v3683, %v3843
        %v3845 = vpop.f32.mrf.mxu0
        %v3846 = vpop.f32.mrf.mxu0
        %v3847 = vadd.f32 %v3686, %v3846
        %v3848 = vpop.f32.mrf.mxu0
        %3849 = vmatprep.mubr.bf16.mxu0 %v3304
        %3850 = vmatmul.mubr.bf16.gmra.mxu0 %v3303
        %v3851 = vpop.f32.mrf.mxu0
        %v3852 = vadd.f32 %v3691, %v3851
        %v3853 = vpop.f32.mrf.mxu0
        %v3854 = vpop.f32.mrf.mxu0
        %v3855 = vadd.f32 %v3694, %v3854
        %v3856 = vpop.f32.mrf.mxu0
        %3857 = vmatprep.mubr.bf16.mxu0 %v3308
        %3858 = vmatmul.mubr.bf16.gmra.mxu0 %v3307
        %v3859 = vpop.f32.mrf.mxu0
        %v3860 = vadd.f32 %v3699, %v3859
        %v3861 = vpop.f32.mrf.mxu0
        %v3862 = vpop.f32.mrf.mxu0
        %v3863 = vadd.f32 %v3702, %v3862
        %v3864 = vpop.f32.mrf.mxu0
        %3865 = vmatprep.mubr.bf16.mxu0 %v3312
        %3866 = vmatmul.mubr.bf16.gmra.mxu0 %v3311
        %v3867 = vpop.f32.mrf.mxu0
        %v3868 = vadd.f32 %v3707, %v3867
        %v3869 = vpop.f32.mrf.mxu0
        %v3870 = vpop.f32.mrf.mxu0
        %v3871 = vadd.f32 %v3710, %v3870
        %v3872 = vpop.f32.mrf.mxu0
        %3873 = vmatprep.mubr.bf16.mxu0 %v3316
        %3874 = vmatmul.mubr.bf16.gmra.mxu0 %v3315
        %v3875 = vpop.f32.mrf.mxu0
        %v3876 = vadd.f32 %v3715, %v3875
        %v3877 = vpop.f32.mrf.mxu0
        %v3878 = vpop.f32.mrf.mxu0
        %v3879 = vadd.f32 %v3718, %v3878
        %v3880 = vpop.f32.mrf.mxu0
        %3881 = vmatprep.mubr.bf16.mxu0 %v3320
        %3882 = vmatmul.mubr.bf16.gmra.mxu0 %v3319
        %v3883 = vpop.f32.mrf.mxu0
        %v3884 = vadd.f32 %v3723, %v3883
        %v3885 = vpop.f32.mrf.mxu0
        %v3886 = vpop.f32.mrf.mxu0
        %v3887 = vadd.f32 %v3726, %v3886
        %v3888 = vpop.f32.mrf.mxu0
        %3889 = vmatprep.mubr.bf16.mxu0 %v3324
        %3890 = vmatmul.mubr.bf16.gmra.mxu0 %v3323
        %v3891 = vpop.f32.mrf.mxu0
        %v3892 = vadd.f32 %v3731, %v3891
        %v3893 = vpop.f32.mrf.mxu0
        %v3894 = vpop.f32.mrf.mxu0
        %v3895 = vadd.f32 %v3734, %v3894
        %v3896 = vpop.f32.mrf.mxu0
        %3897 = vmatprep.mubr.bf16.mxu0 %v3328
        %3898 = vmatmul.mubr.bf16.gmra.mxu0 %v3327
        %v3899 = vpop.f32.mrf.mxu0
        %v3900 = vadd.f32 %v3739, %v3899
        %v3901 = vpop.f32.mrf.mxu0
        %v3902 = vpop.f32.mrf.mxu0
        %v3903 = vadd.f32 %v3742, %v3902
        %v3904 = vpop.f32.mrf.mxu0
        %3905 = vmatprep.mubr.bf16.mxu0 %v3332
        %3906 = vmatmul.mubr.bf16.gmra.mxu0 %v3331
        %v3907 = vpop.f32.mrf.mxu0
        %v3908 = vadd.f32 %v3747, %v3907
        %v3909 = vpop.f32.mrf.mxu0
        %v3910 = vpop.f32.mrf.mxu0
        %v3911 = vadd.f32 %v3750, %v3910
        %v3912 = vpop.f32.mrf.mxu0
        %3913 = vmatprep.mubr.bf16.mxu0 %v3336
        %3914 = vmatmul.mubr.bf16.gmra.mxu0 %v3335
        %v3915 = vpop.f32.mrf.mxu0
        %v3916 = vadd.f32 %v3755, %v3915
        %v3917 = vpop.f32.mrf.mxu0
        %v3918 = vpop.f32.mrf.mxu0
        %v3919 = vadd.f32 %v3758, %v3918
        %v3920 = vpop.f32.mrf.mxu0
        %3921 = vdwg.mxu0
        %3922 = vst [vmem:[%s432] sm:$0xff] %v3796
        %3923 = vst [vmem:[%s432 + $0x8] sm:$0xff] %v3799
        %3924 = vst [vmem:[%s432 + $0x10] sm:$0xff] %v3804
        %3925 = vst [vmem:[%s432 + $0x18] sm:$0xff] %v3807
        %3926 = vst [vmem:[%s432 + $0x20] sm:$0xff] %v3812
        %3927 = vst [vmem:[%s432 + $0x28] sm:$0xff] %v3815
        %3928 = vst [vmem:[%s432 + $0x30] sm:$0xff] %v3820
        %3929 = vst [vmem:[%s432 + $0x38] sm:$0xff] %v3823
        %3930 = vst [vmem:[%s432 + $0x40] sm:$0xff] %v3828
        %3931 = vst [vmem:[%s432 + $0x48] sm:$0xff] %v3831
        %3932 = vst [vmem:[%s432 + $0x50] sm:$0xff] %v3836
        %3933 = vst [vmem:[%s432 + $0x58] sm:$0xff] %v3839
        %3934 = vst [vmem:[%s432 + $0x60] sm:$0xff] %v3844
        %3935 = vst [vmem:[%s432 + $0x68] sm:$0xff] %v3847
        %3936 = vst [vmem:[%s432 + $0x70] sm:$0xff] %v3852
        %3937 = vst [vmem:[%s432 + $0x78] sm:$0xff] %v3855
        %3938 = vst [vmem:[%s432 + $0x80] sm:$0xff] %v3860
        %3939 = vst [vmem:[%s432 + $0x88] sm:$0xff] %v3863
        %3940 = vst [vmem:[%s432 + $0x90] sm:$0xff] %v3868
        %3941 = vst [vmem:[%s432 + $0x98] sm:$0xff] %v3871
        %3942 = vst [vmem:[%s432 + $0xa0] sm:$0xff] %v3876
        %3943 = vst [vmem:[%s432 + $0xa8] sm:$0xff] %v3879
        %3944 = vst [vmem:[%s432 + $0xb0] sm:$0xff] %v3884
        %3945 = vst [vmem:[%s432 + $0xb8] sm:$0xff] %v3887
        %3946 = vst [vmem:[%s432 + $0xc0] sm:$0xff] %v3892
        %3947 = vst [vmem:[%s432 + $0xc8] sm:$0xff] %v3895
        %3948 = vst [vmem:[%s432 + $0xd0] sm:$0xff] %v3900
        %3949 = vst [vmem:[%s432 + $0xd8] sm:$0xff] %v3903
        %3950 = vst [vmem:[%s432 + $0xe0] sm:$0xff] %v3908
        %3951 = vst [vmem:[%s432 + $0xe8] sm:$0xff] %v3911
        %3952 = vst [vmem:[%s432 + $0xf0] sm:$0xff] %v3916
        %3953 = vst [vmem:[%s432 + $0xf8] sm:$0xff] %v3919
        %3955 = vset.pattern.permute.xlu0 0
        %3956 = vperm.xlu0 %3955, %v3796
        %v3957 = vpop.permute.xlu0 %3956
        %3960 = vset.pattern.permute.xlu0 0
        %3961 = vperm.xlu0 %3960, %v3799
        %v3962 = vpop.permute.xlu0 %3961
        %3965 = vset.pattern.permute.xlu0 0
        %3966 = vperm.xlu0 %3965, %v3804
        %v3967 = vpop.permute.xlu0 %3966
        %3970 = vset.pattern.permute.xlu0 0
        %3971 = vperm.xlu0 %3970, %v3807
        %v3972 = vpop.permute.xlu0 %3971
        %3975 = vset.pattern.permute.xlu0 0
        %3976 = vperm.xlu0 %3975, %v3812
        %v3977 = vpop.permute.xlu0 %3976
        %3980 = vset.pattern.permute.xlu0 0
        %3981 = vperm.xlu0 %3980, %v3815
        %v3982 = vpop.permute.xlu0 %3981
        %3985 = vset.pattern.permute.xlu0 0
        %3986 = vperm.xlu0 %3985, %v3820
        %v3987 = vpop.permute.xlu0 %3986
        %3990 = vset.pattern.permute.xlu0 0
        %3991 = vperm.xlu0 %3990, %v3823
        %v3992 = vpop.permute.xlu0 %3991
        %3995 = vset.pattern.permute.xlu0 0
        %3996 = vperm.xlu0 %3995, %v3828
        %v3997 = vpop.permute.xlu0 %3996
        %4000 = vset.pattern.permute.xlu0 0
        %4001 = vperm.xlu0 %4000, %v3831
        %v4002 = vpop.permute.xlu0 %4001
        %4005 = vset.pattern.permute.xlu0 0
        %4006 = vperm.xlu0 %4005, %v3836
        %v4007 = vpop.permute.xlu0 %4006
        %4010 = vset.pattern.permute.xlu0 0
        %4011 = vperm.xlu0 %4010, %v3839
        %v4012 = vpop.permute.xlu0 %4011
        %4015 = vset.pattern.permute.xlu0 0
        %4016 = vperm.xlu0 %4015, %v3844
        %v4017 = vpop.permute.xlu0 %4016
        %4020 = vset.pattern.permute.xlu0 0
        %4021 = vperm.xlu0 %4020, %v3847
        %v4022 = vpop.permute.xlu0 %4021
        %4025 = vset.pattern.permute.xlu0 0
        %4026 = vperm.xlu0 %4025, %v3852
        %v4027 = vpop.permute.xlu0 %4026
        %4030 = vset.pattern.permute.xlu0 0
        %4031 = vperm.xlu0 %4030, %v3855
        %v4032 = vpop.permute.xlu0 %4031
        %4035 = vset.pattern.permute.xlu0 0
        %4036 = vperm.xlu0 %4035, %v3860
        %v4037 = vpop.permute.xlu0 %4036
        %4040 = vset.pattern.permute.xlu0 0
        %4041 = vperm.xlu0 %4040, %v3863
        %v4042 = vpop.permute.xlu0 %4041
        %4045 = vset.pattern.permute.xlu0 0
        %4046 = vperm.xlu0 %4045, %v3868
        %v4047 = vpop.permute.xlu0 %4046
        %4050 = vset.pattern.permute.xlu0 0
        %4051 = vperm.xlu0 %4050, %v3871
        %v4052 = vpop.permute.xlu0 %4051
        %4055 = vset.pattern.permute.xlu0 0
        %4056 = vperm.xlu0 %4055, %v3876
        %v4057 = vpop.permute.xlu0 %4056
        %4060 = vset.pattern.permute.xlu0 0
        %4061 = vperm.xlu0 %4060, %v3879
        %v4062 = vpop.permute.xlu0 %4061
        %4065 = vset.pattern.permute.xlu0 0
        %4066 = vperm.xlu0 %4065, %v3884
        %v4067 = vpop.permute.xlu0 %4066
        %4070 = vset.pattern.permute.xlu0 0
        %4071 = vperm.xlu0 %4070, %v3887
        %v4072 = vpop.permute.xlu0 %4071
        %4075 = vset.pattern.permute.xlu0 0
        %4076 = vperm.xlu0 %4075, %v3892
        %v4077 = vpop.permute.xlu0 %4076
        %4080 = vset.pattern.permute.xlu0 0
        %4081 = vperm.xlu0 %4080, %v3895
        %v4082 = vpop.permute.xlu0 %4081
        %4085 = vset.pattern.permute.xlu0 0
        %4086 = vperm.xlu0 %4085, %v3900
        %v4087 = vpop.permute.xlu0 %4086
        %4090 = vset.pattern.permute.xlu0 0
        %4091 = vperm.xlu0 %4090, %v3903
        %v4092 = vpop.permute.xlu0 %4091
        %4095 = vset.pattern.permute.xlu0 0
        %4096 = vperm.xlu0 %4095, %v3908
        %v4097 = vpop.permute.xlu0 %4096
        %4100 = vset.pattern.permute.xlu0 0
        %4101 = vperm.xlu0 %4100, %v3911
        %v4102 = vpop.permute.xlu0 %4101
        %4105 = vset.pattern.permute.xlu0 0
        %4106 = vperm.xlu0 %4105, %v3916
        %v4107 = vpop.permute.xlu0 %4106
        %4110 = vset.pattern.permute.xlu0 0
        %4111 = vperm.xlu0 %4110, %v3919
        %v4112 = vpop.permute.xlu0 %4111
        %vm4114 = vcmp.gt.f32.partialorder %v3796, %v3957
        %vm4115 = vcmp.gt.f32.partialorder %v3799, %v3962
        %vm4116 = vcmp.gt.f32.partialorder %v3804, %v3967
        %vm4117 = vcmp.gt.f32.partialorder %v3807, %v3972
        %vm4118 = vcmp.gt.f32.partialorder %v3812, %v3977
        %vm4119 = vcmp.gt.f32.partialorder %v3815, %v3982
        %vm4120 = vcmp.gt.f32.partialorder %v3820, %v3987
        %vm4121 = vcmp.gt.f32.partialorder %v3823, %v3992
        %vm4122 = vcmp.gt.f32.partialorder %v3828, %v3997
        %vm4123 = vcmp.gt.f32.partialorder %v3831, %v4002
        %vm4124 = vcmp.gt.f32.partialorder %v3836, %v4007
        %vm4125 = vcmp.gt.f32.partialorder %v3839, %v4012
        %vm4126 = vcmp.gt.f32.partialorder %v3844, %v4017
        %vm4127 = vcmp.gt.f32.partialorder %v3847, %v4022
        %vm4128 = vcmp.gt.f32.partialorder %v3852, %v4027
        %vm4129 = vcmp.gt.f32.partialorder %v3855, %v4032
        %vm4130 = vcmp.gt.f32.partialorder %v3860, %v4037
        %vm4131 = vcmp.gt.f32.partialorder %v3863, %v4042
        %vm4132 = vcmp.gt.f32.partialorder %v3868, %v4047
        %vm4133 = vcmp.gt.f32.partialorder %v3871, %v4052
        %vm4134 = vcmp.gt.f32.partialorder %v3876, %v4057
        %vm4135 = vcmp.gt.f32.partialorder %v3879, %v4062
        %vm4136 = vcmp.gt.f32.partialorder %v3884, %v4067
        %vm4137 = vcmp.gt.f32.partialorder %v3887, %v4072
        %vm4138 = vcmp.gt.f32.partialorder %v3892, %v4077
        %vm4139 = vcmp.gt.f32.partialorder %v3895, %v4082
        %vm4140 = vcmp.gt.f32.partialorder %v3900, %v4087
        %vm4141 = vcmp.gt.f32.partialorder %v3903, %v4092
        %vm4142 = vcmp.gt.f32.partialorder %v3908, %v4097
        %vm4143 = vcmp.gt.f32.partialorder %v3911, %v4102
        %vm4144 = vcmp.gt.f32.partialorder %v3916, %v4107
        %vm4145 = vcmp.gt.f32.partialorder %v3919, %v4112
        %v4146 = vsel %vm4114, 1.0, 0.0
        %v4147 = vsel %vm4115, 1.0, 0.0
        %v4148 = vsel %vm4116, 1.0, 0.0
        %v4149 = vsel %vm4117, 1.0, 0.0
        %v4150 = vsel %vm4118, 1.0, 0.0
        %v4151 = vsel %vm4119, 1.0, 0.0
        %v4152 = vsel %vm4120, 1.0, 0.0
        %v4153 = vsel %vm4121, 1.0, 0.0
        %v4154 = vsel %vm4122, 1.0, 0.0
        %v4155 = vsel %vm4123, 1.0, 0.0
        %v4156 = vsel %vm4124, 1.0, 0.0
        %v4157 = vsel %vm4125, 1.0, 0.0
        %v4158 = vsel %vm4126, 1.0, 0.0
        %v4159 = vsel %vm4127, 1.0, 0.0
        %v4160 = vsel %vm4128, 1.0, 0.0
        %v4161 = vsel %vm4129, 1.0, 0.0
        %v4162 = vsel %vm4130, 1.0, 0.0
        %v4163 = vsel %vm4131, 1.0, 0.0
        %v4164 = vsel %vm4132, 1.0, 0.0
        %v4165 = vsel %vm4133, 1.0, 0.0
        %v4166 = vsel %vm4134, 1.0, 0.0
        %v4167 = vsel %vm4135, 1.0, 0.0
        %v4168 = vsel %vm4136, 1.0, 0.0
        %v4169 = vsel %vm4137, 1.0, 0.0
        %v4170 = vsel %vm4138, 1.0, 0.0
        %v4171 = vsel %vm4139, 1.0, 0.0
        %v4172 = vsel %vm4140, 1.0, 0.0
        %v4173 = vsel %vm4141, 1.0, 0.0
        %v4174 = vsel %vm4142, 1.0, 0.0
        %v4175 = vsel %vm4143, 1.0, 0.0
        %v4176 = vsel %vm4144, 1.0, 0.0
        %v4177 = vsel %vm4145, 1.0, 0.0
        %4178 = vadd.xlane.f32.xlu0 %v4146
        %v4179 = vpop.xlane.xlu0 %4178
        %4180 = vadd.xlane.f32.xlu0 %v4147
        %v4181 = vpop.xlane.xlu0 %4180
        %4182 = vadd.xlane.f32.xlu0 %v4148
        %v4183 = vpop.xlane.xlu0 %4182
        %4184 = vadd.xlane.f32.xlu0 %v4149
        %v4185 = vpop.xlane.xlu0 %4184
        %4186 = vadd.xlane.f32.xlu0 %v4150
        %v4187 = vpop.xlane.xlu0 %4186
        %4188 = vadd.xlane.f32.xlu0 %v4151
        %v4189 = vpop.xlane.xlu0 %4188
        %4190 = vadd.xlane.f32.xlu0 %v4152
        %v4191 = vpop.xlane.xlu0 %4190
        %4192 = vadd.xlane.f32.xlu0 %v4153
        %v4193 = vpop.xlane.xlu0 %4192
        %4194 = vadd.xlane.f32.xlu0 %v4154
        %v4195 = vpop.xlane.xlu0 %4194
        %4196 = vadd.xlane.f32.xlu0 %v4155
        %v4197 = vpop.xlane.xlu0 %4196
        %4198 = vadd.xlane.f32.xlu0 %v4156
        %v4199 = vpop.xlane.xlu0 %4198
        %4200 = vadd.xlane.f32.xlu0 %v4157
        %v4201 = vpop.xlane.xlu0 %4200
        %4202 = vadd.xlane.f32.xlu0 %v4158
        %v4203 = vpop.xlane.xlu0 %4202
        %4204 = vadd.xlane.f32.xlu0 %v4159
        %v4205 = vpop.xlane.xlu0 %4204
        %4206 = vadd.xlane.f32.xlu0 %v4160
        %v4207 = vpop.xlane.xlu0 %4206
        %4208 = vadd.xlane.f32.xlu0 %v4161
        %v4209 = vpop.xlane.xlu0 %4208
        %4210 = vadd.xlane.f32.xlu0 %v4162
        %v4211 = vpop.xlane.xlu0 %4210
        %4212 = vadd.xlane.f32.xlu0 %v4163
        %v4213 = vpop.xlane.xlu0 %4212
        %4214 = vadd.xlane.f32.xlu0 %v4164
        %v4215 = vpop.xlane.xlu0 %4214
        %4216 = vadd.xlane.f32.xlu0 %v4165
        %v4217 = vpop.xlane.xlu0 %4216
        %4218 = vadd.xlane.f32.xlu0 %v4166
        %v4219 = vpop.xlane.xlu0 %4218
        %4220 = vadd.xlane.f32.xlu0 %v4167
        %v4221 = vpop.xlane.xlu0 %4220
        %4222 = vadd.xlane.f32.xlu0 %v4168
        %v4223 = vpop.xlane.xlu0 %4222
        %4224 = vadd.xlane.f32.xlu0 %v4169
        %v4225 = vpop.xlane.xlu0 %4224
        %4226 = vadd.xlane.f32.xlu0 %v4170
        %v4227 = vpop.xlane.xlu0 %4226
        %4228 = vadd.xlane.f32.xlu0 %v4171
        %v4229 = vpop.xlane.xlu0 %4228
        %4230 = vadd.xlane.f32.xlu0 %v4172
        %v4231 = vpop.xlane.xlu0 %4230
        %4232 = vadd.xlane.f32.xlu0 %v4173
        %v4233 = vpop.xlane.xlu0 %4232
        %4234 = vadd.xlane.f32.xlu0 %v4174
        %v4235 = vpop.xlane.xlu0 %4234
        %4236 = vadd.xlane.f32.xlu0 %v4175
        %v4237 = vpop.xlane.xlu0 %4236
        %4238 = vadd.xlane.f32.xlu0 %v4176
        %v4239 = vpop.xlane.xlu0 %4238
        %4240 = vadd.xlane.f32.xlu0 %v4177
        %v4241 = vpop.xlane.xlu0 %4240
        %vm4242 = vcmp.eq.f32.partialorder %v4179, 0.0
        %vm4243 = vcmp.eq.f32.partialorder %v4181, 0.0
        %vm4244 = vcmp.eq.f32.partialorder %v4183, 0.0
        %vm4245 = vcmp.eq.f32.partialorder %v4185, 0.0
        %vm4246 = vcmp.eq.f32.partialorder %v4187, 0.0
        %vm4247 = vcmp.eq.f32.partialorder %v4189, 0.0
        %vm4248 = vcmp.eq.f32.partialorder %v4191, 0.0
        %vm4249 = vcmp.eq.f32.partialorder %v4193, 0.0
        %vm4250 = vcmp.eq.f32.partialorder %v4195, 0.0
        %vm4251 = vcmp.eq.f32.partialorder %v4197, 0.0
        %vm4252 = vcmp.eq.f32.partialorder %v4199, 0.0
        %vm4253 = vcmp.eq.f32.partialorder %v4201, 0.0
        %vm4254 = vcmp.eq.f32.partialorder %v4203, 0.0
        %vm4255 = vcmp.eq.f32.partialorder %v4205, 0.0
        %vm4256 = vcmp.eq.f32.partialorder %v4207, 0.0
        %vm4257 = vcmp.eq.f32.partialorder %v4209, 0.0
        %vm4258 = vcmp.eq.f32.partialorder %v4211, 0.0
        %vm4259 = vcmp.eq.f32.partialorder %v4213, 0.0
        %vm4260 = vcmp.eq.f32.partialorder %v4215, 0.0
        %vm4261 = vcmp.eq.f32.partialorder %v4217, 0.0
        %vm4262 = vcmp.eq.f32.partialorder %v4219, 0.0
        %vm4263 = vcmp.eq.f32.partialorder %v4221, 0.0
        %vm4264 = vcmp.eq.f32.partialorder %v4223, 0.0
        %vm4265 = vcmp.eq.f32.partialorder %v4225, 0.0
        %vm4266 = vcmp.eq.f32.partialorder %v4227, 0.0
        %vm4267 = vcmp.eq.f32.partialorder %v4229, 0.0
        %vm4268 = vcmp.eq.f32.partialorder %v4231, 0.0
        %vm4269 = vcmp.eq.f32.partialorder %v4233, 0.0
        %vm4270 = vcmp.eq.f32.partialorder %v4235, 0.0
        %vm4271 = vcmp.eq.f32.partialorder %v4237, 0.0
        %vm4272 = vcmp.eq.f32.partialorder %v4239, 0.0
        %vm4273 = vcmp.eq.f32.partialorder %v4241, 0.0
        %v4274 = vsel %vm4242, 1, 0
        %v4275 = vsel %vm4243, 1, 0
        %v4276 = vsel %vm4244, 1, 0
        %v4277 = vsel %vm4245, 1, 0
        %v4278 = vsel %vm4246, 1, 0
        %v4279 = vsel %vm4247, 1, 0
        %v4280 = vsel %vm4248, 1, 0
        %v4281 = vsel %vm4249, 1, 0
        %v4282 = vsel %vm4250, 1, 0
        %v4283 = vsel %vm4251, 1, 0
        %v4284 = vsel %vm4252, 1, 0
        %v4285 = vsel %vm4253, 1, 0
        %v4286 = vsel %vm4254, 1, 0
        %v4287 = vsel %vm4255, 1, 0
        %v4288 = vsel %vm4256, 1, 0
        %v4289 = vsel %vm4257, 1, 0
        %v4290 = vsel %vm4258, 1, 0
        %v4291 = vsel %vm4259, 1, 0
        %v4292 = vsel %vm4260, 1, 0
        %v4293 = vsel %vm4261, 1, 0
        %v4294 = vsel %vm4262, 1, 0
        %v4295 = vsel %vm4263, 1, 0
        %v4296 = vsel %vm4264, 1, 0
        %v4297 = vsel %vm4265, 1, 0
        %v4298 = vsel %vm4266, 1, 0
        %v4299 = vsel %vm4267, 1, 0
        %v4300 = vsel %vm4268, 1, 0
        %v4301 = vsel %vm4269, 1, 0
        %v4302 = vsel %vm4270, 1, 0
        %v4303 = vsel %vm4271, 1, 0
        %v4304 = vsel %vm4272, 1, 0
        %v4305 = vsel %vm4273, 1, 0
        %v4306 = vcvt.s32.f32 %v4274
        %v4307 = vcvt.s32.f32 %v4275
        %v4308 = vcvt.s32.f32 %v4276
        %v4309 = vcvt.s32.f32 %v4277
        %v4310 = vcvt.s32.f32 %v4278
        %v4311 = vcvt.s32.f32 %v4279
        %v4312 = vcvt.s32.f32 %v4280
        %v4313 = vcvt.s32.f32 %v4281
        %v4314 = vcvt.s32.f32 %v4282
        %v4315 = vcvt.s32.f32 %v4283
        %v4316 = vcvt.s32.f32 %v4284
        %v4317 = vcvt.s32.f32 %v4285
        %v4318 = vcvt.s32.f32 %v4286
        %v4319 = vcvt.s32.f32 %v4287
        %v4320 = vcvt.s32.f32 %v4288
        %v4321 = vcvt.s32.f32 %v4289
        %v4322 = vcvt.s32.f32 %v4290
        %v4323 = vcvt.s32.f32 %v4291
        %v4324 = vcvt.s32.f32 %v4292
        %v4325 = vcvt.s32.f32 %v4293
        %v4326 = vcvt.s32.f32 %v4294
        %v4327 = vcvt.s32.f32 %v4295
        %v4328 = vcvt.s32.f32 %v4296
        %v4329 = vcvt.s32.f32 %v4297
        %v4330 = vcvt.s32.f32 %v4298
        %v4331 = vcvt.s32.f32 %v4299
        %v4332 = vcvt.s32.f32 %v4300
        %v4333 = vcvt.s32.f32 %v4301
        %v4334 = vcvt.s32.f32 %v4302
        %v4335 = vcvt.s32.f32 %v4303
        %v4336 = vcvt.s32.f32 %v4304
        %v4337 = vcvt.s32.f32 %v4305
        %v4338 = vlaneseq
        %v4339 = vand.u32 %v4338, 127
        %vm4340 = vcmp.eq.s32.totalorder %v4339, 0
        %v4341 = vsel %vm4340, %v4306, %v4146
        %v4342 = vsel %vm4340, %v4307, %v4147
        %v4343 = vsel %vm4340, %v4308, %v4148
        %v4344 = vsel %vm4340, %v4309, %v4149
        %v4345 = vsel %vm4340, %v4310, %v4150
        %v4346 = vsel %vm4340, %v4311, %v4151
        %v4347 = vsel %vm4340, %v4312, %v4152
        %v4348 = vsel %vm4340, %v4313, %v4153
        %v4349 = vsel %vm4340, %v4314, %v4154
        %v4350 = vsel %vm4340, %v4315, %v4155
        %v4351 = vsel %vm4340, %v4316, %v4156
        %v4352 = vsel %vm4340, %v4317, %v4157
        %v4353 = vsel %vm4340, %v4318, %v4158
        %v4354 = vsel %vm4340, %v4319, %v4159
        %v4355 = vsel %vm4340, %v4320, %v4160
        %v4356 = vsel %vm4340, %v4321, %v4161
        %v4357 = vsel %vm4340, %v4322, %v4162
        %v4358 = vsel %vm4340, %v4323, %v4163
        %v4359 = vsel %vm4340, %v4324, %v4164
        %v4360 = vsel %vm4340, %v4325, %v4165
        %v4361 = vsel %vm4340, %v4326, %v4166
        %v4362 = vsel %vm4340, %v4327, %v4167
        %v4363 = vsel %vm4340, %v4328, %v4168
        %v4364 = vsel %vm4340, %v4329, %v4169
        %v4365 = vsel %vm4340, %v4330, %v4170
        %v4366 = vsel %vm4340, %v4331, %v4171
        %v4367 = vsel %vm4340, %v4332, %v4172
        %v4368 = vsel %vm4340, %v4333, %v4173
        %v4369 = vsel %vm4340, %v4334, %v4174
        %v4370 = vsel %vm4340, %v4335, %v4175
        %v4371 = vsel %vm4340, %v4336, %v4176
        %v4372 = vsel %vm4340, %v4337, %v4177
        %v4373 = vpack.c.bf16 %v4342, %v4341
        %v4374 = vpack.c.bf16 %v4344, %v4343
        %v4375 = vpack.c.bf16 %v4346, %v4345
        %v4376 = vpack.c.bf16 %v4348, %v4347
        %v4377 = vpack.c.bf16 %v4350, %v4349
        %v4378 = vpack.c.bf16 %v4352, %v4351
        %v4379 = vpack.c.bf16 %v4354, %v4353
        %v4380 = vpack.c.bf16 %v4356, %v4355
        %v4381 = vpack.c.bf16 %v4358, %v4357
        %v4382 = vpack.c.bf16 %v4360, %v4359
        %v4383 = vpack.c.bf16 %v4362, %v4361
        %v4384 = vpack.c.bf16 %v4364, %v4363
        %v4385 = vpack.c.bf16 %v4366, %v4365
        %v4386 = vpack.c.bf16 %v4368, %v4367
        %v4387 = vpack.c.bf16 %v4370, %v4369
        %v4388 = vpack.c.bf16 %v4372, %v4371
        %v4405 = vunpack.c.l.b16 %v4373
        %v4406 = vunpack.c.h.b16 %v4373
        %v4407 = vunpack.c.l.b16 %v4374
        %v4408 = vunpack.c.h.b16 %v4374
        %v4409 = vunpack.c.l.b16 %v4375
        %v4410 = vunpack.c.h.b16 %v4375
        %v4411 = vunpack.c.l.b16 %v4376
        %v4412 = vunpack.c.h.b16 %v4376
        %v4413 = vunpack.c.l.b16 %v4377
        %v4414 = vunpack.c.h.b16 %v4377
        %v4415 = vunpack.c.l.b16 %v4378
        %v4416 = vunpack.c.h.b16 %v4378
        %v4417 = vunpack.c.l.b16 %v4379
        %v4418 = vunpack.c.h.b16 %v4379
        %v4419 = vunpack.c.l.b16 %v4380
        %v4420 = vunpack.c.h.b16 %v4380
        %v4421 = vunpack.c.l.b16 %v4381
        %v4422 = vunpack.c.h.b16 %v4381
        %v4423 = vunpack.c.l.b16 %v4382
        %v4424 = vunpack.c.h.b16 %v4382
        %v4425 = vunpack.c.l.b16 %v4383
        %v4426 = vunpack.c.h.b16 %v4383
        %v4427 = vunpack.c.l.b16 %v4384
        %v4428 = vunpack.c.h.b16 %v4384
        %v4429 = vunpack.c.l.b16 %v4385
        %v4430 = vunpack.c.h.b16 %v4385
        %v4431 = vunpack.c.l.b16 %v4386
        %v4432 = vunpack.c.h.b16 %v4386
        %v4433 = vunpack.c.l.b16 %v4387
        %v4434 = vunpack.c.h.b16 %v4387
        %v4435 = vunpack.c.l.b16 %v4388
        %v4436 = vunpack.c.h.b16 %v4388
        %v4437 = vpack.c.b16 %v4405, %v4405
        %v4438 = vpack.c.b16 %v4406, %v4406
        %v4439 = vpack.c.b16 %v4407, %v4407
        %v4440 = vpack.c.b16 %v4408, %v4408
        %v4441 = vpack.c.b16 %v4409, %v4409
        %v4442 = vpack.c.b16 %v4410, %v4410
        %v4443 = vpack.c.b16 %v4411, %v4411
        %v4444 = vpack.c.b16 %v4412, %v4412
        %v4445 = vpack.c.b16 %v4413, %v4413
        %v4446 = vpack.c.b16 %v4414, %v4414
        %v4447 = vpack.c.b16 %v4415, %v4415
        %v4448 = vpack.c.b16 %v4416, %v4416
        %v4449 = vpack.c.b16 %v4417, %v4417
        %v4450 = vpack.c.b16 %v4418, %v4418
        %v4451 = vpack.c.b16 %v4419, %v4419
        %v4452 = vpack.c.b16 %v4420, %v4420
        %v4453 = vpack.c.b16 %v4421, %v4421
        %v4454 = vpack.c.b16 %v4422, %v4422
        %v4455 = vpack.c.b16 %v4423, %v4423
        %v4456 = vpack.c.b16 %v4424, %v4424
        %v4457 = vpack.c.b16 %v4425, %v4425
        %v4458 = vpack.c.b16 %v4426, %v4426
        %v4459 = vpack.c.b16 %v4427, %v4427
        %v4460 = vpack.c.b16 %v4428, %v4428
        %v4461 = vpack.c.b16 %v4429, %v4429
        %v4462 = vpack.c.b16 %v4430, %v4430
        %v4463 = vpack.c.b16 %v4431, %v4431
        %v4464 = vpack.c.b16 %v4432, %v4432
        %v4465 = vpack.c.b16 %v4433, %v4433
        %v4466 = vpack.c.b16 %v4434, %v4434
        %v4467 = vpack.c.b16 %v4435, %v4435
        %v4468 = vpack.c.b16 %v4436, %v4436
        %4501 = vst [vmem:[%s439] sm:$0xf] %v4437
        %4502 = vst [vmem:[%s439 + $0x4] sm:$0xf] %v4438
        %4503 = vst [vmem:[%s439 + $0x8] sm:$0xf] %v4439
        %4504 = vst [vmem:[%s439 + $0xc] sm:$0xf] %v4440
        %4505 = vst [vmem:[%s439 + $0x10] sm:$0xf] %v4441
        %4506 = vst [vmem:[%s439 + $0x14] sm:$0xf] %v4442
        %4507 = vst [vmem:[%s439 + $0x18] sm:$0xf] %v4443
        %4508 = vst [vmem:[%s439 + $0x1c] sm:$0xf] %v4444
        %4509 = vst [vmem:[%s439 + $0x20] sm:$0xf] %v4445
        %4510 = vst [vmem:[%s439 + $0x24] sm:$0xf] %v4446
        %4511 = vst [vmem:[%s439 + $0x28] sm:$0xf] %v4447
        %4512 = vst [vmem:[%s439 + $0x2c] sm:$0xf] %v4448
        %4513 = vst [vmem:[%s439 + $0x30] sm:$0xf] %v4449
        %4514 = vst [vmem:[%s439 + $0x34] sm:$0xf] %v4450
        %4515 = vst [vmem:[%s439 + $0x38] sm:$0xf] %v4451
        %4516 = vst [vmem:[%s439 + $0x3c] sm:$0xf] %v4452
        %4517 = vst [vmem:[%s439 + $0x40] sm:$0xf] %v4453
        %4518 = vst [vmem:[%s439 + $0x44] sm:$0xf] %v4454
        %4519 = vst [vmem:[%s439 + $0x48] sm:$0xf] %v4455
        %4520 = vst [vmem:[%s439 + $0x4c] sm:$0xf] %v4456
        %4521 = vst [vmem:[%s439 + $0x50] sm:$0xf] %v4457
        %4522 = vst [vmem:[%s439 + $0x54] sm:$0xf] %v4458
        %4523 = vst [vmem:[%s439 + $0x58] sm:$0xf] %v4459
        %4524 = vst [vmem:[%s439 + $0x5c] sm:$0xf] %v4460
        %4525 = vst [vmem:[%s439 + $0x60] sm:$0xf] %v4461
        %4526 = vst [vmem:[%s439 + $0x64] sm:$0xf] %v4462
        %4527 = vst [vmem:[%s439 + $0x68] sm:$0xf] %v4463
        %4528 = vst [vmem:[%s439 + $0x6c] sm:$0xf] %v4464
        %4529 = vst [vmem:[%s439 + $0x70] sm:$0xf] %v4465
        %4530 = vst [vmem:[%s439 + $0x74] sm:$0xf] %v4466
        %4531 = vst [vmem:[%s439 + $0x78] sm:$0xf] %v4467
        %4532 = vst [vmem:[%s439 + $0x7c] sm:$0xf] %v4468
        %s4533 = sand.u32 %s267, 1
        %s4534 = scalar_lea.sflag [#allocation3], %s4533
        %s4535 = sand.u32 %s267, 1
        %s4536 = smul.addr %s4535, 256
        %s4537 = scalar_lea.vmem [#allocation2], %s4536
        %s4538 = sand.u32 %s293, 1
        %s4539 = scalar_lea.sflag [#allocation5], %s4538
        %s4540 = sand.u32 %s293, 1
        %s4541 = smul.addr %s4540, 128
        %s4542 = scalar_lea.vmem [#allocation4], %s4541
        // Predicated region
        $region61: #{tpu_custom_call.1} parent=59 // pred_check
          %p4543 = pneg %p277
        $region62: #{tpu_custom_call.1} parent=59 // pred_check_branch
          %4545 = sbr.rel (%p4543) target = $region64
        $region63: #{tpu_custom_call.1} parent=59 // pred_region
          %s4546 = smul.u32 32, %s29
          %s4548 = ssub.s32 4096, 4096
          %4549 = vsyncadd %s4534, %s4548
          %s4550 = smul.addr %s4546, 128
          %s4551 = scalar_lea.hbm %s10, %s4550
          %s4552 = sshll.u32 %s4537, 4
          %s4553 = int_to_ptr.vmem [resolvable:$true] %s4552
          %4558 = dma.vmem_to_hbm [thread:$0]  %s4553, 4096, %s4551, %s4534, 128, 128, 8
        $region64: #{tpu_custom_call.1} parent=59 // pred_fallthru
          _
        // Predicated region
        $region65: #{tpu_custom_call.1} parent=59 // pred_check
          %p4559 = pneg %p303
        $region66: #{tpu_custom_call.1} parent=59 // pred_check_branch
          %4561 = sbr.rel (%p4559) target = $region68
        $region67: #{tpu_custom_call.1} parent=59 // pred_region
          %s4562 = smul.u32 32, %s29
          %s4564 = ssub.s32 2048, 2048
          %4565 = vsyncadd %s4539, %s4564
          %s4566 = smul.addr %s4562, 64
          %s4567 = scalar_lea.hbm %s11, %s4566
          %s4568 = sshll.u32 %s4542, 4
          %s4569 = int_to_ptr.vmem [resolvable:$true] %s4568
          %4574 = dma.vmem_to_hbm [thread:$0]  %s4569, 2048, %s4567, %s4539, 64, 64, 4
        $region68: #{tpu_custom_call.1} parent=59 // pred_fallthru
          _
      $region60: #{tpu_custom_call.1} parent=5 // pred_fallthru
        _
      %p4575 = scmp.le.s32.totalorder 2, %s24
      // Predicated region
      $region69: #{tpu_custom_call.1} parent=5 // pred_check
        %p4576 = pneg %p4575
      $region70: #{tpu_custom_call.1} parent=5 // pred_check_branch
        %4578 = sbr.rel (%p4576) target = $region72
      $region71: #{tpu_custom_call.1} parent=5 // pred_region
        %s4579 = ssub.s32 %s24, 2
        // Predicated region
        $region73: #{tpu_custom_call.1} parent=71 // pred_check
          %p4580 = pneg %p283
        $region74: #{tpu_custom_call.1} parent=71 // pred_check_branch
          %4582 = sbr.rel (%p4580) target = $region76
        $region75: #{tpu_custom_call.1} parent=71 // pred_region
          %s4583 = sand.u32 %s268, 1
          %s4584 = scalar_lea.sflag [#allocation3], %s4583
          %s4585 = sand.u32 %s268, 1
          %s4586 = smul.addr %s4585, 256
          %s4587 = scalar_lea.vmem [#allocation2], %s4586
          %4588 = dma.done %s4584, 4096
        $region76: #{tpu_custom_call.1} parent=71 // pred_fallthru
          _
        // Predicated region
        $region77: #{tpu_custom_call.1} parent=71 // pred_check
          %p4589 = pneg %p309
        $region78: #{tpu_custom_call.1} parent=71 // pred_check_branch
          %4591 = sbr.rel (%p4589) target = $region80
        $region79: #{tpu_custom_call.1} parent=71 // pred_region
          %s4592 = sand.u32 %s294, 1
          %s4593 = scalar_lea.sflag [#allocation5], %s4592
          %s4594 = sand.u32 %s294, 1
          %s4595 = smul.addr %s4594, 128
          %s4596 = scalar_lea.vmem [#allocation4], %s4595
          %4597 = dma.done %s4593, 2048
        $region80: #{tpu_custom_call.1} parent=71 // pred_fallthru
          _
      $region72: #{tpu_custom_call.1} parent=5 // pred_fallthru
        _
    $region6: #{tpu_custom_call.1} parent=1 // loop_footer
      %s28 = sadd.s32 1, %s24
    $region7: #{tpu_custom_call.1} parent=1 // loop_footer_branch
      %23 = sbr.rel target = $region3
    $region8: #{tpu_custom_call.1} parent=1 // loop_exit
      _
    %4598 = vsyncpa [#allocation3], 1
    %s4599 = scalar_lea.sflag [#allocation3], 1
    %4600 = vsyncpa %s4599, 1
    %4601 = vsyncpa [#allocation5], 1
    %s4602 = scalar_lea.sflag [#allocation5], 1
    %4603 = vsyncpa %s4602, 1

</llo_original>
